<compile_context>
chip_gen: v7x
topology: tpu7x:2x2x1
jax: 0.10.0
libtpu: 0.0.40
codegen_flags: <defaults>
</compile_context>

<pallas_src>
import math
from functools import partial

import jax
import jax.numpy as jnp
from jax.experimental import pallas as pl
from jax.experimental.pallas import tpu as pltpu


def _temporal_attention_kernel(x_ref, wq_ref, wk_ref, wv_ref,
                               bq_ref, bk_ref, bv_ref, wp_ref, bp_ref,
                               o_ref, *, num_heads, scale):
    # x_ref : (bb, N, C)        input block (bb batch rows)
    # wq/wk/wv_ref : (H, C, Dh) per-head projection weights
    # bq/bk/bv_ref : (H, 1, Dh) per-head projection biases (zeros if no bias)
    # wp_ref: (H, Dh, C)        per-head output-projection weights
    # bp_ref: (1, C)            output-projection bias
    # o_ref : (bb, N, C)
    bb, N, C = x_ref.shape

    if bb == 1:
        x = x_ref[0].astype(jnp.float32)                       # (N, C)
    else:
        x = x_ref[...].astype(jnp.float32).reshape(bb * N, C)  # (bb*N, C)

    acc = jnp.zeros((bb * N, C), jnp.float32)

    for h in range(num_heads):
        # Per-head projections: (bb*N, C) x (C, Dh) MXU dots, f32 accumulate.
        q = jnp.dot(x, wq_ref[h].astype(jnp.float32),
                    preferred_element_type=jnp.float32) + bq_ref[h].astype(jnp.float32)
        k = jnp.dot(x, wk_ref[h].astype(jnp.float32),
                    preferred_element_type=jnp.float32) + bk_ref[h].astype(jnp.float32)
        v = jnp.dot(x, wv_ref[h].astype(jnp.float32),
                    preferred_element_type=jnp.float32) + bv_ref[h].astype(jnp.float32)

        oh_parts = []
        for b in range(bb):
            qb = q[b * N:(b + 1) * N]
            kb = k[b * N:(b + 1) * N]
            vb = v[b * N:(b + 1) * N]

            s = jnp.dot(qb, kb.T, preferred_element_type=jnp.float32) * scale
            s = s - jnp.max(s, axis=-1, keepdims=True)          # stable softmax
            p = jnp.exp(s)
            p = p / jnp.sum(p, axis=-1, keepdims=True)

            oh_parts.append(jnp.dot(p, vb, preferred_element_type=jnp.float32))

        oh = oh_parts[0] if bb == 1 else jnp.concatenate(oh_parts, axis=0)

        # Fold the output projection into the head loop:
        # concat_h(oh) @ Wp^T  ==  sum_h oh @ Wp[h]
        acc = acc + jnp.dot(oh, wp_ref[h].astype(jnp.float32),
                            preferred_element_type=jnp.float32)

    out = (acc + bp_ref[...].astype(jnp.float32)).astype(o_ref.dtype)
    if bb == 1:
        o_ref[0] = out
    else:
        o_ref[...] = out.reshape(bb, N, C)


@partial(jax.jit, static_argnames=("num_heads", "qk_scale", "block_b"))
def temporal_attention(x, wqkv, bqkv, wproj, bproj, *, num_heads,
                       qk_scale=None, block_b=1):
    """TemporalAttention forward.

    x     : (B, N, C)
    wqkv  : (3C, C)  torch nn.Linear weight layout
    bqkv  : (3C,)    (zeros when qkv_bias=False)
    wproj : (C, C)   torch nn.Linear weight layout
    bproj : (C,)
    """
    B, N, C = x.shape
    H = num_heads
    assert C % H == 0, "dim must be divisible by num_heads"
    Dh = C // H
    scale = float(qk_scale) if qk_scale is not None else float(Dh) ** (-0.5)
    assert B % block_b == 0, "block_b must divide batch"

    # Torch layout -> per-head matmul operands (done once, outside the kernel).
    #   q_h = x @ Wq[h] + bq[h]  with  Wq[h][c, d] = wqkv[h*Dh + d, c]
    wq = jnp.transpose(wqkv[0 * C:1 * C].reshape(H, Dh, C), (0, 2, 1))  # (H, C, Dh)
    wk = jnp.transpose(wqkv[1 * C:2 * C].reshape(H, Dh, C), (0, 2, 1))
    wv = jnp.transpose(wqkv[2 * C:3 * C].reshape(H, Dh, C), (0, 2, 1))
    bq = bqkv[0 * C:1 * C].reshape(H, 1, Dh)
    bk = bqkv[1 * C:2 * C].reshape(H, 1, Dh)
    bv = bqkv[2 * C:3 * C].reshape(H, 1, Dh)
    #   out = sum_h o_h @ Wp[h]  with  Wp[h][d, j] = wproj[j, h*Dh + d]
    wp = wproj.T.reshape(H, Dh, C)                                      # (H, Dh, C)
    bp = bproj.reshape(1, C)

    kernel = partial(_temporal_attention_kernel, num_heads=H, scale=scale)
    const = lambda b: (0, 0, 0)

    out = pl.pallas_call(
        kernel,
        out_shape=jax.ShapeDtypeStruct((B, N, C), x.dtype),
        grid_spec=pltpu.PrefetchScalarGridSpec(
            num_scalar_prefetch=0,
            grid=(B // block_b,),
            in_specs=[
                pl.BlockSpec((block_b, N, C), lambda b: (b, 0, 0)),  # x band
                pl.BlockSpec((H, C, Dh), const),                     # wq
                pl.BlockSpec((H, C, Dh), const),                     # wk
                pl.BlockSpec((H, C, Dh), const),                     # wv
                pl.BlockSpec((H, 1, Dh), const),                     # bq
                pl.BlockSpec((H, 1, Dh), const),                     # bk
                pl.BlockSpec((H, 1, Dh), const),                     # bv
                pl.BlockSpec((H, Dh, C), const),                     # wp
                pl.BlockSpec((1, C), lambda b: (0, 0)),              # bp
            ],
            out_specs=pl.BlockSpec((block_b, N, C), lambda b: (b, 0, 0)),
        ),
        compiler_params=pltpu.CompilerParams(
            dimension_semantics=("parallel",)),
    )(x, wq, wk, wv, bq, bk, bv, wp, bp)
    return out


def _reference(x, wqkv, bqkv, wproj, bproj, num_heads, qk_scale=None):
    """Pure-JAX mirror of the PyTorch forward (with_qkv=True, eval mode)."""
    B, N, C = x.shape
    Dh = C // num_heads
    scale = qk_scale if qk_scale is not None else Dh ** (-0.5)
    qkv = x @ wqkv.T + bqkv                                   # (B, N, 3C)
    qkv = qkv.reshape(B, N, 3, num_heads, Dh).transpose(2, 0, 3, 1, 4)
    q, k, v = qkv[0], qkv[1], qkv[2]                          # (B, H, N, Dh)
    attn = jnp.einsum("bhnd,bhmd->bhnm", q, k) * scale
    attn = jax.nn.softmax(attn, axis=-1)
    out = jnp.einsum("bhnm,bhmd->bhnd", attn, v)              # (B, H, N, Dh)
    out = out.transpose(0, 2, 1, 3).reshape(B, N, C)
    return out @ wproj.T + bproj


if __name__ == "__main__":
    key = jax.random.PRNGKey(0)
    kx, kw_qkv, kw_proj, kb_proj = jax.random.split(key, 4)

    # Small shapes consistent with the module: dim=32, num_heads=8, seq N=8.
    B, N, C, H = 2, 8, 32, 8

    x = jax.random.normal(kx, (B, N, C), dtype=jnp.float32)
    wqkv = jax.random.normal(kw_qkv, (3 * C, C), dtype=jnp.float32) / math.sqrt(C)
    bqkv = jnp.zeros((3 * C,), dtype=jnp.float32)     # qkv_bias=False (default)
    wproj = jax.random.normal(kw_proj, (C, C), dtype=jnp.float32) / math.sqrt(C)
    bproj = 0.02 * jax.random.normal(kb_proj, (C,), dtype=jnp.float32)

    out = temporal_attention(x, wqkv, bqkv, wproj, bproj, num_heads=H)
    out = jax.block_until_ready(out)

    ref = jax.block_until_ready(_reference(x, wqkv, bqkv, wproj, bproj, H))
    assert out.shape == (B, N, C)
    assert jnp.allclose(out, ref, atol=1e-4, rtol=1e-4), (
        f"mismatch vs reference, max abs err={float(jnp.max(jnp.abs(out - ref)))}")

    print("KERNEL_OK")
</pallas_src>

<mosaic_0001>
module attributes {stable_mosaic.version = 11 : i64} {
  func.func @_temporal_attention_kernel(%arg0: i32, %arg1: memref<1x8x32xf32, #tpu.memory_space<vmem>>, %arg2: memref<8x32x4xf32, #tpu.memory_space<vmem>>, %arg3: memref<8x32x4xf32, #tpu.memory_space<vmem>>, %arg4: memref<8x32x4xf32, #tpu.memory_space<vmem>>, %arg5: memref<8x1x4xf32, #tpu.memory_space<vmem>>, %arg6: memref<8x1x4xf32, #tpu.memory_space<vmem>>, %arg7: memref<8x1x4xf32, #tpu.memory_space<vmem>>, %arg8: memref<8x4x32xf32, #tpu.memory_space<vmem>>, %arg9: memref<1x32xf32, #tpu.memory_space<vmem>>, %arg10: memref<1x8x32xf32, #tpu.memory_space<vmem>>) attributes {dimension_semantics = [#tpu.dimension_semantics<parallel>], iteration_bounds = array<i64: 2>, scalar_prefetch = 0 : i64, scratch_operands = 0 : i64, tpu.core_type = #tpu.core_type<tc>, window_params = [{transform_indices = @transform_0, window_bounds = array<i64: 1, 8, 32>}, {pipeline_mode = #tpu.pipeline_mode<synchronous>, transform_indices = @transform_1, window_bounds = array<i64: 8, 32, 4>}, {pipeline_mode = #tpu.pipeline_mode<synchronous>, transform_indices = @transform_2, window_bounds = array<i64: 8, 32, 4>}, {pipeline_mode = #tpu.pipeline_mode<synchronous>, transform_indices = @transform_3, window_bounds = array<i64: 8, 32, 4>}, {pipeline_mode = #tpu.pipeline_mode<synchronous>, transform_indices = @transform_4, window_bounds = array<i64: 8, 1, 4>}, {pipeline_mode = #tpu.pipeline_mode<synchronous>, transform_indices = @transform_5, window_bounds = array<i64: 8, 1, 4>}, {pipeline_mode = #tpu.pipeline_mode<synchronous>, transform_indices = @transform_6, window_bounds = array<i64: 8, 1, 4>}, {pipeline_mode = #tpu.pipeline_mode<synchronous>, transform_indices = @transform_7, window_bounds = array<i64: 8, 4, 32>}, {pipeline_mode = #tpu.pipeline_mode<synchronous>, transform_indices = @transform_8, window_bounds = array<i64: 1, 32>}, {transform_indices = @transform_9, window_bounds = array<i64: 1, 8, 32>}]} {
    %c0 = arith.constant 0 : index
    %c0_0 = arith.constant 0 : index
    %c0_1 = arith.constant 0 : index
    %0 = vector.load %arg1[%c0, %c0_0, %c0_1] : memref<1x8x32xf32, #tpu.memory_space<vmem>>, vector<1x8x32xf32>
    %1 = vector.shape_cast %0 : vector<1x8x32xf32> to vector<8x32xf32>
    %cst = arith.constant 0.000000e+00 : f32
    %2 = vector.broadcast %cst : f32 to vector<8x32xf32>
    %c0_2 = arith.constant 0 : index
    %c0_3 = arith.constant 0 : index
    %c0_4 = arith.constant 0 : index
    %3 = vector.load %arg2[%c0_2, %c0_3, %c0_4] : memref<8x32x4xf32, #tpu.memory_space<vmem>>, vector<1x32x4xf32>
    %4 = vector.shape_cast %3 : vector<1x32x4xf32> to vector<32x4xf32>
    %cst_5 = arith.constant dense<0.000000e+00> : vector<8x4xf32>
    %5 = tpu.matmul %1, %4, %cst_5 {dimension_numbers = #tpu.dot_dimension_numbers<[1], [0], [0], [1], [0, 0, 1, 1], [], []>} : vector<8x32xf32>, vector<32x4xf32>, vector<8x4xf32> -> vector<8x4xf32>
    %c0_6 = arith.constant 0 : index
    %c0_7 = arith.constant 0 : index
    %c0_8 = arith.constant 0 : index
    %6 = vector.load %arg5[%c0_6, %c0_7, %c0_8] : memref<8x1x4xf32, #tpu.memory_space<vmem>>, vector<1x1x4xf32>
    %7 = vector.shape_cast %6 : vector<1x1x4xf32> to vector<1x4xf32>
    %8 = vector.broadcast %7 : vector<1x4xf32> to vector<8x4xf32>
    %9 = arith.addf %5, %8 : vector<8x4xf32>
    %c0_9 = arith.constant 0 : index
    %c0_10 = arith.constant 0 : index
    %c0_11 = arith.constant 0 : index
    %10 = vector.load %arg3[%c0_9, %c0_10, %c0_11] : memref<8x32x4xf32, #tpu.memory_space<vmem>>, vector<1x32x4xf32>
    %11 = vector.shape_cast %10 : vector<1x32x4xf32> to vector<32x4xf32>
    %cst_12 = arith.constant dense<0.000000e+00> : vector<8x4xf32>
    %12 = tpu.matmul %1, %11, %cst_12 {dimension_numbers = #tpu.dot_dimension_numbers<[1], [0], [0], [1], [0, 0, 1, 1], [], []>} : vector<8x32xf32>, vector<32x4xf32>, vector<8x4xf32> -> vector<8x4xf32>
    %c0_13 = arith.constant 0 : index
    %c0_14 = arith.constant 0 : index
    %c0_15 = arith.constant 0 : index
    %13 = vector.load %arg6[%c0_13, %c0_14, %c0_15] : memref<8x1x4xf32, #tpu.memory_space<vmem>>, vector<1x1x4xf32>
    %14 = vector.shape_cast %13 : vector<1x1x4xf32> to vector<1x4xf32>
    %15 = vector.broadcast %14 : vector<1x4xf32> to vector<8x4xf32>
    %16 = arith.addf %12, %15 : vector<8x4xf32>
    %c0_16 = arith.constant 0 : index
    %c0_17 = arith.constant 0 : index
    %c0_18 = arith.constant 0 : index
    %17 = vector.load %arg4[%c0_16, %c0_17, %c0_18] : memref<8x32x4xf32, #tpu.memory_space<vmem>>, vector<1x32x4xf32>
    %18 = vector.shape_cast %17 : vector<1x32x4xf32> to vector<32x4xf32>
    %cst_19 = arith.constant dense<0.000000e+00> : vector<8x4xf32>
    %19 = tpu.matmul %1, %18, %cst_19 {dimension_numbers = #tpu.dot_dimension_numbers<[1], [0], [0], [1], [0, 0, 1, 1], [], []>} : vector<8x32xf32>, vector<32x4xf32>, vector<8x4xf32> -> vector<8x4xf32>
    %c0_20 = arith.constant 0 : index
    %c0_21 = arith.constant 0 : index
    %c0_22 = arith.constant 0 : index
    %20 = vector.load %arg7[%c0_20, %c0_21, %c0_22] : memref<8x1x4xf32, #tpu.memory_space<vmem>>, vector<1x1x4xf32>
    %21 = vector.shape_cast %20 : vector<1x1x4xf32> to vector<1x4xf32>
    %22 = vector.broadcast %21 : vector<1x4xf32> to vector<8x4xf32>
    %23 = arith.addf %19, %22 : vector<8x4xf32>
    %24 = tpu.transpose %16, [1, 0] : vector<8x4xf32> -> vector<4x8xf32>
    %cst_23 = arith.constant dense<0.000000e+00> : vector<8x8xf32>
    %25 = tpu.matmul %9, %24, %cst_23 {dimension_numbers = #tpu.dot_dimension_numbers<[1], [0], [0], [1], [0, 0, 1, 1], [], []>} : vector<8x4xf32>, vector<4x8xf32>, vector<8x8xf32> -> vector<8x8xf32>
    %cst_24 = arith.constant 5.000000e-01 : f32
    %26 = vector.broadcast %cst_24 : f32 to vector<8x8xf32>
    %27 = arith.mulf %25, %26 : vector<8x8xf32>
    %cst_25 = arith.constant dense<0xFF800000> : vector<8xf32>
    %28 = vector.multi_reduction <maximumf>, %27, %cst_25 [1] : vector<8x8xf32> to vector<8xf32>
    %29 = vector.shape_cast %28 : vector<8xf32> to vector<8x1xf32>
    %30 = vector.broadcast %29 : vector<8x1xf32> to vector<8x8xf32>
    %31 = arith.subf %27, %30 : vector<8x8xf32>
    %32 = math.exp %31 : vector<8x8xf32>
    %cst_26 = arith.constant dense<0.000000e+00> : vector<8xf32>
    %33 = vector.multi_reduction <add>, %32, %cst_26 [1] : vector<8x8xf32> to vector<8xf32>
    %34 = vector.shape_cast %33 : vector<8xf32> to vector<8x1xf32>
    %35 = vector.broadcast %34 : vector<8x1xf32> to vector<8x8xf32>
    %36 = arith.divf %32, %35 : vector<8x8xf32>
    %cst_27 = arith.constant dense<0.000000e+00> : vector<8x4xf32>
    %37 = tpu.matmul %36, %23, %cst_27 {dimension_numbers = #tpu.dot_dimension_numbers<[1], [0], [0], [1], [0, 0, 1, 1], [], []>} : vector<8x8xf32>, vector<8x4xf32>, vector<8x4xf32> -> vector<8x4xf32>
    %c0_28 = arith.constant 0 : index
    %c0_29 = arith.constant 0 : index
    %c0_30 = arith.constant 0 : index
    %38 = vector.load %arg8[%c0_28, %c0_29, %c0_30] : memref<8x4x32xf32, #tpu.memory_space<vmem>>, vector<1x4x32xf32>
    %39 = vector.shape_cast %38 : vector<1x4x32xf32> to vector<4x32xf32>
    %cst_31 = arith.constant dense<0.000000e+00> : vector<8x32xf32>
    %40 = tpu.matmul %37, %39, %cst_31 {dimension_numbers = #tpu.dot_dimension_numbers<[1], [0], [0], [1], [0, 0, 1, 1], [], []>} : vector<8x4xf32>, vector<4x32xf32>, vector<8x32xf32> -> vector<8x32xf32>
    %41 = arith.addf %2, %40 : vector<8x32xf32>
    %c1 = arith.constant 1 : index
    %c0_32 = arith.constant 0 : index
    %c0_33 = arith.constant 0 : index
    %42 = vector.load %arg2[%c1, %c0_32, %c0_33] : memref<8x32x4xf32, #tpu.memory_space<vmem>>, vector<1x32x4xf32>
    %43 = vector.shape_cast %42 : vector<1x32x4xf32> to vector<32x4xf32>
    %cst_34 = arith.constant dense<0.000000e+00> : vector<8x4xf32>
    %44 = tpu.matmul %1, %43, %cst_34 {dimension_numbers = #tpu.dot_dimension_numbers<[1], [0], [0], [1], [0, 0, 1, 1], [], []>} : vector<8x32xf32>, vector<32x4xf32>, vector<8x4xf32> -> vector<8x4xf32>
    %c1_35 = arith.constant 1 : index
    %c0_36 = arith.constant 0 : index
    %c0_37 = arith.constant 0 : index
    %45 = vector.load %arg5[%c1_35, %c0_36, %c0_37] : memref<8x1x4xf32, #tpu.memory_space<vmem>>, vector<1x1x4xf32>
    %46 = vector.shape_cast %45 : vector<1x1x4xf32> to vector<1x4xf32>
    %47 = vector.broadcast %46 : vector<1x4xf32> to vector<8x4xf32>
    %48 = arith.addf %44, %47 : vector<8x4xf32>
    %c1_38 = arith.constant 1 : index
    %c0_39 = arith.constant 0 : index
    %c0_40 = arith.constant 0 : index
    %49 = vector.load %arg3[%c1_38, %c0_39, %c0_40] : memref<8x32x4xf32, #tpu.memory_space<vmem>>, vector<1x32x4xf32>
    %50 = vector.shape_cast %49 : vector<1x32x4xf32> to vector<32x4xf32>
    %cst_41 = arith.constant dense<0.000000e+00> : vector<8x4xf32>
    %51 = tpu.matmul %1, %50, %cst_41 {dimension_numbers = #tpu.dot_dimension_numbers<[1], [0], [0], [1], [0, 0, 1, 1], [], []>} : vector<8x32xf32>, vector<32x4xf32>, vector<8x4xf32> -> vector<8x4xf32>
    %c1_42 = arith.constant 1 : index
    %c0_43 = arith.constant 0 : index
    %c0_44 = arith.constant 0 : index
    %52 = vector.load %arg6[%c1_42, %c0_43, %c0_44] : memref<8x1x4xf32, #tpu.memory_space<vmem>>, vector<1x1x4xf32>
    %53 = vector.shape_cast %52 : vector<1x1x4xf32> to vector<1x4xf32>
    %54 = vector.broadcast %53 : vector<1x4xf32> to vector<8x4xf32>
    %55 = arith.addf %51, %54 : vector<8x4xf32>
    %c1_45 = arith.constant 1 : index
    %c0_46 = arith.constant 0 : index
    %c0_47 = arith.constant 0 : index
    %56 = vector.load %arg4[%c1_45, %c0_46, %c0_47] : memref<8x32x4xf32, #tpu.memory_space<vmem>>, vector<1x32x4xf32>
    %57 = vector.shape_cast %56 : vector<1x32x4xf32> to vector<32x4xf32>
    %cst_48 = arith.constant dense<0.000000e+00> : vector<8x4xf32>
    %58 = tpu.matmul %1, %57, %cst_48 {dimension_numbers = #tpu.dot_dimension_numbers<[1], [0], [0], [1], [0, 0, 1, 1], [], []>} : vector<8x32xf32>, vector<32x4xf32>, vector<8x4xf32> -> vector<8x4xf32>
    %c1_49 = arith.constant 1 : index
    %c0_50 = arith.constant 0 : index
    %c0_51 = arith.constant 0 : index
    %59 = vector.load %arg7[%c1_49, %c0_50, %c0_51] : memref<8x1x4xf32, #tpu.memory_space<vmem>>, vector<1x1x4xf32>
    %60 = vector.shape_cast %59 : vector<1x1x4xf32> to vector<1x4xf32>
    %61 = vector.broadcast %60 : vector<1x4xf32> to vector<8x4xf32>
    %62 = arith.addf %58, %61 : vector<8x4xf32>
    %63 = tpu.transpose %55, [1, 0] : vector<8x4xf32> -> vector<4x8xf32>
    %cst_52 = arith.constant dense<0.000000e+00> : vector<8x8xf32>
    %64 = tpu.matmul %48, %63, %cst_52 {dimension_numbers = #tpu.dot_dimension_numbers<[1], [0], [0], [1], [0, 0, 1, 1], [], []>} : vector<8x4xf32>, vector<4x8xf32>, vector<8x8xf32> -> vector<8x8xf32>
    %cst_53 = arith.constant 5.000000e-01 : f32
    %65 = vector.broadcast %cst_53 : f32 to vector<8x8xf32>
    %66 = arith.mulf %64, %65 : vector<8x8xf32>
    %cst_54 = arith.constant dense<0xFF800000> : vector<8xf32>
    %67 = vector.multi_reduction <maximumf>, %66, %cst_54 [1] : vector<8x8xf32> to vector<8xf32>
    %68 = vector.shape_cast %67 : vector<8xf32> to vector<8x1xf32>
    %69 = vector.broadcast %68 : vector<8x1xf32> to vector<8x8xf32>
    %70 = arith.subf %66, %69 : vector<8x8xf32>
    %71 = math.exp %70 : vector<8x8xf32>
    %cst_55 = arith.constant dense<0.000000e+00> : vector<8xf32>
    %72 = vector.multi_reduction <add>, %71, %cst_55 [1] : vector<8x8xf32> to vector<8xf32>
    %73 = vector.shape_cast %72 : vector<8xf32> to vector<8x1xf32>
    %74 = vector.broadcast %73 : vector<8x1xf32> to vector<8x8xf32>
    %75 = arith.divf %71, %74 : vector<8x8xf32>
    %cst_56 = arith.constant dense<0.000000e+00> : vector<8x4xf32>
    %76 = tpu.matmul %75, %62, %cst_56 {dimension_numbers = #tpu.dot_dimension_numbers<[1], [0], [0], [1], [0, 0, 1, 1], [], []>} : vector<8x8xf32>, vector<8x4xf32>, vector<8x4xf32> -> vector<8x4xf32>
    %c1_57 = arith.constant 1 : index
    %c0_58 = arith.constant 0 : index
    %c0_59 = arith.constant 0 : index
    %77 = vector.load %arg8[%c1_57, %c0_58, %c0_59] : memref<8x4x32xf32, #tpu.memory_space<vmem>>, vector<1x4x32xf32>
    %78 = vector.shape_cast %77 : vector<1x4x32xf32> to vector<4x32xf32>
    %cst_60 = arith.constant dense<0.000000e+00> : vector<8x32xf32>
    %79 = tpu.matmul %76, %78, %cst_60 {dimension_numbers = #tpu.dot_dimension_numbers<[1], [0], [0], [1], [0, 0, 1, 1], [], []>} : vector<8x4xf32>, vector<4x32xf32>, vector<8x32xf32> -> vector<8x32xf32>
    %80 = arith.addf %41, %79 : vector<8x32xf32>
    %c2 = arith.constant 2 : index
    %c0_61 = arith.constant 0 : index
    %c0_62 = arith.constant 0 : index
    %81 = vector.load %arg2[%c2, %c0_61, %c0_62] : memref<8x32x4xf32, #tpu.memory_space<vmem>>, vector<1x32x4xf32>
    %82 = vector.shape_cast %81 : vector<1x32x4xf32> to vector<32x4xf32>
    %cst_63 = arith.constant dense<0.000000e+00> : vector<8x4xf32>
    %83 = tpu.matmul %1, %82, %cst_63 {dimension_numbers = #tpu.dot_dimension_numbers<[1], [0], [0], [1], [0, 0, 1, 1], [], []>} : vector<8x32xf32>, vector<32x4xf32>, vector<8x4xf32> -> vector<8x4xf32>
    %c2_64 = arith.constant 2 : index
    %c0_65 = arith.constant 0 : index
    %c0_66 = arith.constant 0 : index
    %84 = vector.load %arg5[%c2_64, %c0_65, %c0_66] : memref<8x1x4xf32, #tpu.memory_space<vmem>>, vector<1x1x4xf32>
    %85 = vector.shape_cast %84 : vector<1x1x4xf32> to vector<1x4xf32>
    %86 = vector.broadcast %85 : vector<1x4xf32> to vector<8x4xf32>
    %87 = arith.addf %83, %86 : vector<8x4xf32>
    %c2_67 = arith.constant 2 : index
    %c0_68 = arith.constant 0 : index
    %c0_69 = arith.constant 0 : index
    %88 = vector.load %arg3[%c2_67, %c0_68, %c0_69] : memref<8x32x4xf32, #tpu.memory_space<vmem>>, vector<1x32x4xf32>
    %89 = vector.shape_cast %88 : vector<1x32x4xf32> to vector<32x4xf32>
    %cst_70 = arith.constant dense<0.000000e+00> : vector<8x4xf32>
    %90 = tpu.matmul %1, %89, %cst_70 {dimension_numbers = #tpu.dot_dimension_numbers<[1], [0], [0], [1], [0, 0, 1, 1], [], []>} : vector<8x32xf32>, vector<32x4xf32>, vector<8x4xf32> -> vector<8x4xf32>
    %c2_71 = arith.constant 2 : index
    %c0_72 = arith.constant 0 : index
    %c0_73 = arith.constant 0 : index
    %91 = vector.load %arg6[%c2_71, %c0_72, %c0_73] : memref<8x1x4xf32, #tpu.memory_space<vmem>>, vector<1x1x4xf32>
    %92 = vector.shape_cast %91 : vector<1x1x4xf32> to vector<1x4xf32>
    %93 = vector.broadcast %92 : vector<1x4xf32> to vector<8x4xf32>
    %94 = arith.addf %90, %93 : vector<8x4xf32>
    %c2_74 = arith.constant 2 : index
    %c0_75 = arith.constant 0 : index
    %c0_76 = arith.constant 0 : index
    %95 = vector.load %arg4[%c2_74, %c0_75, %c0_76] : memref<8x32x4xf32, #tpu.memory_space<vmem>>, vector<1x32x4xf32>
    %96 = vector.shape_cast %95 : vector<1x32x4xf32> to vector<32x4xf32>
    %cst_77 = arith.constant dense<0.000000e+00> : vector<8x4xf32>
    %97 = tpu.matmul %1, %96, %cst_77 {dimension_numbers = #tpu.dot_dimension_numbers<[1], [0], [0], [1], [0, 0, 1, 1], [], []>} : vector<8x32xf32>, vector<32x4xf32>, vector<8x4xf32> -> vector<8x4xf32>
    %c2_78 = arith.constant 2 : index
    %c0_79 = arith.constant 0 : index
    %c0_80 = arith.constant 0 : index
    %98 = vector.load %arg7[%c2_78, %c0_79, %c0_80] : memref<8x1x4xf32, #tpu.memory_space<vmem>>, vector<1x1x4xf32>
    %99 = vector.shape_cast %98 : vector<1x1x4xf32> to vector<1x4xf32>
    %100 = vector.broadcast %99 : vector<1x4xf32> to vector<8x4xf32>
    %101 = arith.addf %97, %100 : vector<8x4xf32>
    %102 = tpu.transpose %94, [1, 0] : vector<8x4xf32> -> vector<4x8xf32>
    %cst_81 = arith.constant dense<0.000000e+00> : vector<8x8xf32>
    %103 = tpu.matmul %87, %102, %cst_81 {dimension_numbers = #tpu.dot_dimension_numbers<[1], [0], [0], [1], [0, 0, 1, 1], [], []>} : vector<8x4xf32>, vector<4x8xf32>, vector<8x8xf32> -> vector<8x8xf32>
    %cst_82 = arith.constant 5.000000e-01 : f32
    %104 = vector.broadcast %cst_82 : f32 to vector<8x8xf32>
    %105 = arith.mulf %103, %104 : vector<8x8xf32>
    %cst_83 = arith.constant dense<0xFF800000> : vector<8xf32>
    %106 = vector.multi_reduction <maximumf>, %105, %cst_83 [1] : vector<8x8xf32> to vector<8xf32>
    %107 = vector.shape_cast %106 : vector<8xf32> to vector<8x1xf32>
    %108 = vector.broadcast %107 : vector<8x1xf32> to vector<8x8xf32>
    %109 = arith.subf %105, %108 : vector<8x8xf32>
    %110 = math.exp %109 : vector<8x8xf32>
    %cst_84 = arith.constant dense<0.000000e+00> : vector<8xf32>
    %111 = vector.multi_reduction <add>, %110, %cst_84 [1] : vector<8x8xf32> to vector<8xf32>
    %112 = vector.shape_cast %111 : vector<8xf32> to vector<8x1xf32>
    %113 = vector.broadcast %112 : vector<8x1xf32> to vector<8x8xf32>
    %114 = arith.divf %110, %113 : vector<8x8xf32>
    %cst_85 = arith.constant dense<0.000000e+00> : vector<8x4xf32>
    %115 = tpu.matmul %114, %101, %cst_85 {dimension_numbers = #tpu.dot_dimension_numbers<[1], [0], [0], [1], [0, 0, 1, 1], [], []>} : vector<8x8xf32>, vector<8x4xf32>, vector<8x4xf32> -> vector<8x4xf32>
    %c2_86 = arith.constant 2 : index
    %c0_87 = arith.constant 0 : index
    %c0_88 = arith.constant 0 : index
    %116 = vector.load %arg8[%c2_86, %c0_87, %c0_88] : memref<8x4x32xf32, #tpu.memory_space<vmem>>, vector<1x4x32xf32>
    %117 = vector.shape_cast %116 : vector<1x4x32xf32> to vector<4x32xf32>
    %cst_89 = arith.constant dense<0.000000e+00> : vector<8x32xf32>
    %118 = tpu.matmul %115, %117, %cst_89 {dimension_numbers = #tpu.dot_dimension_numbers<[1], [0], [0], [1], [0, 0, 1, 1], [], []>} : vector<8x4xf32>, vector<4x32xf32>, vector<8x32xf32> -> vector<8x32xf32>
    %119 = arith.addf %80, %118 : vector<8x32xf32>
    %c3 = arith.constant 3 : index
    %c0_90 = arith.constant 0 : index
    %c0_91 = arith.constant 0 : index
    %120 = vector.load %arg2[%c3, %c0_90, %c0_91] : memref<8x32x4xf32, #tpu.memory_space<vmem>>, vector<1x32x4xf32>
    %121 = vector.shape_cast %120 : vector<1x32x4xf32> to vector<32x4xf32>
    %cst_92 = arith.constant dense<0.000000e+00> : vector<8x4xf32>
    %122 = tpu.matmul %1, %121, %cst_92 {dimension_numbers = #tpu.dot_dimension_numbers<[1], [0], [0], [1], [0, 0, 1, 1], [], []>} : vector<8x32xf32>, vector<32x4xf32>, vector<8x4xf32> -> vector<8x4xf32>
    %c3_93 = arith.constant 3 : index
    %c0_94 = arith.constant 0 : index
    %c0_95 = arith.constant 0 : index
    %123 = vector.load %arg5[%c3_93, %c0_94, %c0_95] : memref<8x1x4xf32, #tpu.memory_space<vmem>>, vector<1x1x4xf32>
    %124 = vector.shape_cast %123 : vector<1x1x4xf32> to vector<1x4xf32>
    %125 = vector.broadcast %124 : vector<1x4xf32> to vector<8x4xf32>
    %126 = arith.addf %122, %125 : vector<8x4xf32>
    %c3_96 = arith.constant 3 : index
    %c0_97 = arith.constant 0 : index
    %c0_98 = arith.constant 0 : index
    %127 = vector.load %arg3[%c3_96, %c0_97, %c0_98] : memref<8x32x4xf32, #tpu.memory_space<vmem>>, vector<1x32x4xf32>
    %128 = vector.shape_cast %127 : vector<1x32x4xf32> to vector<32x4xf32>
    %cst_99 = arith.constant dense<0.000000e+00> : vector<8x4xf32>
    %129 = tpu.matmul %1, %128, %cst_99 {dimension_numbers = #tpu.dot_dimension_numbers<[1], [0], [0], [1], [0, 0, 1, 1], [], []>} : vector<8x32xf32>, vector<32x4xf32>, vector<8x4xf32> -> vector<8x4xf32>
    %c3_100 = arith.constant 3 : index
    %c0_101 = arith.constant 0 : index
    %c0_102 = arith.constant 0 : index
    %130 = vector.load %arg6[%c3_100, %c0_101, %c0_102] : memref<8x1x4xf32, #tpu.memory_space<vmem>>, vector<1x1x4xf32>
    %131 = vector.shape_cast %130 : vector<1x1x4xf32> to vector<1x4xf32>
    %132 = vector.broadcast %131 : vector<1x4xf32> to vector<8x4xf32>
    %133 = arith.addf %129, %132 : vector<8x4xf32>
    %c3_103 = arith.constant 3 : index
    %c0_104 = arith.constant 0 : index
    %c0_105 = arith.constant 0 : index
    %134 = vector.load %arg4[%c3_103, %c0_104, %c0_105] : memref<8x32x4xf32, #tpu.memory_space<vmem>>, vector<1x32x4xf32>
    %135 = vector.shape_cast %134 : vector<1x32x4xf32> to vector<32x4xf32>
    %cst_106 = arith.constant dense<0.000000e+00> : vector<8x4xf32>
    %136 = tpu.matmul %1, %135, %cst_106 {dimension_numbers = #tpu.dot_dimension_numbers<[1], [0], [0], [1], [0, 0, 1, 1], [], []>} : vector<8x32xf32>, vector<32x4xf32>, vector<8x4xf32> -> vector<8x4xf32>
    %c3_107 = arith.constant 3 : index
    %c0_108 = arith.constant 0 : index
    %c0_109 = arith.constant 0 : index
    %137 = vector.load %arg7[%c3_107, %c0_108, %c0_109] : memref<8x1x4xf32, #tpu.memory_space<vmem>>, vector<1x1x4xf32>
    %138 = vector.shape_cast %137 : vector<1x1x4xf32> to vector<1x4xf32>
    %139 = vector.broadcast %138 : vector<1x4xf32> to vector<8x4xf32>
    %140 = arith.addf %136, %139 : vector<8x4xf32>
    %141 = tpu.transpose %133, [1, 0] : vector<8x4xf32> -> vector<4x8xf32>
    %cst_110 = arith.constant dense<0.000000e+00> : vector<8x8xf32>
    %142 = tpu.matmul %126, %141, %cst_110 {dimension_numbers = #tpu.dot_dimension_numbers<[1], [0], [0], [1], [0, 0, 1, 1], [], []>} : vector<8x4xf32>, vector<4x8xf32>, vector<8x8xf32> -> vector<8x8xf32>
    %cst_111 = arith.constant 5.000000e-01 : f32
    %143 = vector.broadcast %cst_111 : f32 to vector<8x8xf32>
    %144 = arith.mulf %142, %143 : vector<8x8xf32>
    %cst_112 = arith.constant dense<0xFF800000> : vector<8xf32>
    %145 = vector.multi_reduction <maximumf>, %144, %cst_112 [1] : vector<8x8xf32> to vector<8xf32>
    %146 = vector.shape_cast %145 : vector<8xf32> to vector<8x1xf32>
    %147 = vector.broadcast %146 : vector<8x1xf32> to vector<8x8xf32>
    %148 = arith.subf %144, %147 : vector<8x8xf32>
    %149 = math.exp %148 : vector<8x8xf32>
    %cst_113 = arith.constant dense<0.000000e+00> : vector<8xf32>
    %150 = vector.multi_reduction <add>, %149, %cst_113 [1] : vector<8x8xf32> to vector<8xf32>
    %151 = vector.shape_cast %150 : vector<8xf32> to vector<8x1xf32>
    %152 = vector.broadcast %151 : vector<8x1xf32> to vector<8x8xf32>
    %153 = arith.divf %149, %152 : vector<8x8xf32>
    %cst_114 = arith.constant dense<0.000000e+00> : vector<8x4xf32>
    %154 = tpu.matmul %153, %140, %cst_114 {dimension_numbers = #tpu.dot_dimension_numbers<[1], [0], [0], [1], [0, 0, 1, 1], [], []>} : vector<8x8xf32>, vector<8x4xf32>, vector<8x4xf32> -> vector<8x4xf32>
    %c3_115 = arith.constant 3 : index
    %c0_116 = arith.constant 0 : index
    %c0_117 = arith.constant 0 : index
    %155 = vector.load %arg8[%c3_115, %c0_116, %c0_117] : memref<8x4x32xf32, #tpu.memory_space<vmem>>, vector<1x4x32xf32>
    %156 = vector.shape_cast %155 : vector<1x4x32xf32> to vector<4x32xf32>
    %cst_118 = arith.constant dense<0.000000e+00> : vector<8x32xf32>
    %157 = tpu.matmul %154, %156, %cst_118 {dimension_numbers = #tpu.dot_dimension_numbers<[1], [0], [0], [1], [0, 0, 1, 1], [], []>} : vector<8x4xf32>, vector<4x32xf32>, vector<8x32xf32> -> vector<8x32xf32>
    %158 = arith.addf %119, %157 : vector<8x32xf32>
    %c4 = arith.constant 4 : index
    %c0_119 = arith.constant 0 : index
    %c0_120 = arith.constant 0 : index
    %159 = vector.load %arg2[%c4, %c0_119, %c0_120] : memref<8x32x4xf32, #tpu.memory_space<vmem>>, vector<1x32x4xf32>
    %160 = vector.shape_cast %159 : vector<1x32x4xf32> to vector<32x4xf32>
    %cst_121 = arith.constant dense<0.000000e+00> : vector<8x4xf32>
    %161 = tpu.matmul %1, %160, %cst_121 {dimension_numbers = #tpu.dot_dimension_numbers<[1], [0], [0], [1], [0, 0, 1, 1], [], []>} : vector<8x32xf32>, vector<32x4xf32>, vector<8x4xf32> -> vector<8x4xf32>
    %c4_122 = arith.constant 4 : index
    %c0_123 = arith.constant 0 : index
    %c0_124 = arith.constant 0 : index
    %162 = vector.load %arg5[%c4_122, %c0_123, %c0_124] : memref<8x1x4xf32, #tpu.memory_space<vmem>>, vector<1x1x4xf32>
    %163 = vector.shape_cast %162 : vector<1x1x4xf32> to vector<1x4xf32>
    %164 = vector.broadcast %163 : vector<1x4xf32> to vector<8x4xf32>
    %165 = arith.addf %161, %164 : vector<8x4xf32>
    %c4_125 = arith.constant 4 : index
    %c0_126 = arith.constant 0 : index
    %c0_127 = arith.constant 0 : index
    %166 = vector.load %arg3[%c4_125, %c0_126, %c0_127] : memref<8x32x4xf32, #tpu.memory_space<vmem>>, vector<1x32x4xf32>
    %167 = vector.shape_cast %166 : vector<1x32x4xf32> to vector<32x4xf32>
    %cst_128 = arith.constant dense<0.000000e+00> : vector<8x4xf32>
    %168 = tpu.matmul %1, %167, %cst_128 {dimension_numbers = #tpu.dot_dimension_numbers<[1], [0], [0], [1], [0, 0, 1, 1], [], []>} : vector<8x32xf32>, vector<32x4xf32>, vector<8x4xf32> -> vector<8x4xf32>
    %c4_129 = arith.constant 4 : index
    %c0_130 = arith.constant 0 : index
    %c0_131 = arith.constant 0 : index
    %169 = vector.load %arg6[%c4_129, %c0_130, %c0_131] : memref<8x1x4xf32, #tpu.memory_space<vmem>>, vector<1x1x4xf32>
    %170 = vector.shape_cast %169 : vector<1x1x4xf32> to vector<1x4xf32>
    %171 = vector.broadcast %170 : vector<1x4xf32> to vector<8x4xf32>
    %172 = arith.addf %168, %171 : vector<8x4xf32>
    %c4_132 = arith.constant 4 : index
    %c0_133 = arith.constant 0 : index
    %c0_134 = arith.constant 0 : index
    %173 = vector.load %arg4[%c4_132, %c0_133, %c0_134] : memref<8x32x4xf32, #tpu.memory_space<vmem>>, vector<1x32x4xf32>
    %174 = vector.shape_cast %173 : vector<1x32x4xf32> to vector<32x4xf32>
    %cst_135 = arith.constant dense<0.000000e+00> : vector<8x4xf32>
    %175 = tpu.matmul %1, %174, %cst_135 {dimension_numbers = #tpu.dot_dimension_numbers<[1], [0], [0], [1], [0, 0, 1, 1], [], []>} : vector<8x32xf32>, vector<32x4xf32>, vector<8x4xf32> -> vector<8x4xf32>
    %c4_136 = arith.constant 4 : index
    %c0_137 = arith.constant 0 : index
    %c0_138 = arith.constant 0 : index
    %176 = vector.load %arg7[%c4_136, %c0_137, %c0_138] : memref<8x1x4xf32, #tpu.memory_space<vmem>>, vector<1x1x4xf32>
    %177 = vector.shape_cast %176 : vector<1x1x4xf32> to vector<1x4xf32>
    %178 = vector.broadcast %177 : vector<1x4xf32> to vector<8x4xf32>
    %179 = arith.addf %175, %178 : vector<8x4xf32>
    %180 = tpu.transpose %172, [1, 0] : vector<8x4xf32> -> vector<4x8xf32>
    %cst_139 = arith.constant dense<0.000000e+00> : vector<8x8xf32>
    %181 = tpu.matmul %165, %180, %cst_139 {dimension_numbers = #tpu.dot_dimension_numbers<[1], [0], [0], [1], [0, 0, 1, 1], [], []>} : vector<8x4xf32>, vector<4x8xf32>, vector<8x8xf32> -> vector<8x8xf32>
    %cst_140 = arith.constant 5.000000e-01 : f32
    %182 = vector.broadcast %cst_140 : f32 to vector<8x8xf32>
    %183 = arith.mulf %181, %182 : vector<8x8xf32>
    %cst_141 = arith.constant dense<0xFF800000> : vector<8xf32>
    %184 = vector.multi_reduction <maximumf>, %183, %cst_141 [1] : vector<8x8xf32> to vector<8xf32>
    %185 = vector.shape_cast %184 : vector<8xf32> to vector<8x1xf32>
    %186 = vector.broadcast %185 : vector<8x1xf32> to vector<8x8xf32>
    %187 = arith.subf %183, %186 : vector<8x8xf32>
    %188 = math.exp %187 : vector<8x8xf32>
    %cst_142 = arith.constant dense<0.000000e+00> : vector<8xf32>
    %189 = vector.multi_reduction <add>, %188, %cst_142 [1] : vector<8x8xf32> to vector<8xf32>
    %190 = vector.shape_cast %189 : vector<8xf32> to vector<8x1xf32>
    %191 = vector.broadcast %190 : vector<8x1xf32> to vector<8x8xf32>
    %192 = arith.divf %188, %191 : vector<8x8xf32>
    %cst_143 = arith.constant dense<0.000000e+00> : vector<8x4xf32>
    %193 = tpu.matmul %192, %179, %cst_143 {dimension_numbers = #tpu.dot_dimension_numbers<[1], [0], [0], [1], [0, 0, 1, 1], [], []>} : vector<8x8xf32>, vector<8x4xf32>, vector<8x4xf32> -> vector<8x4xf32>
    %c4_144 = arith.constant 4 : index
    %c0_145 = arith.constant 0 : index
    %c0_146 = arith.constant 0 : index
    %194 = vector.load %arg8[%c4_144, %c0_145, %c0_146] : memref<8x4x32xf32, #tpu.memory_space<vmem>>, vector<1x4x32xf32>
    %195 = vector.shape_cast %194 : vector<1x4x32xf32> to vector<4x32xf32>
    %cst_147 = arith.constant dense<0.000000e+00> : vector<8x32xf32>
    %196 = tpu.matmul %193, %195, %cst_147 {dimension_numbers = #tpu.dot_dimension_numbers<[1], [0], [0], [1], [0, 0, 1, 1], [], []>} : vector<8x4xf32>, vector<4x32xf32>, vector<8x32xf32> -> vector<8x32xf32>
    %197 = arith.addf %158, %196 : vector<8x32xf32>
    %c5 = arith.constant 5 : index
    %c0_148 = arith.constant 0 : index
    %c0_149 = arith.constant 0 : index
    %198 = vector.load %arg2[%c5, %c0_148, %c0_149] : memref<8x32x4xf32, #tpu.memory_space<vmem>>, vector<1x32x4xf32>
    %199 = vector.shape_cast %198 : vector<1x32x4xf32> to vector<32x4xf32>
    %cst_150 = arith.constant dense<0.000000e+00> : vector<8x4xf32>
    %200 = tpu.matmul %1, %199, %cst_150 {dimension_numbers = #tpu.dot_dimension_numbers<[1], [0], [0], [1], [0, 0, 1, 1], [], []>} : vector<8x32xf32>, vector<32x4xf32>, vector<8x4xf32> -> vector<8x4xf32>
    %c5_151 = arith.constant 5 : index
    %c0_152 = arith.constant 0 : index
    %c0_153 = arith.constant 0 : index
    %201 = vector.load %arg5[%c5_151, %c0_152, %c0_153] : memref<8x1x4xf32, #tpu.memory_space<vmem>>, vector<1x1x4xf32>
    %202 = vector.shape_cast %201 : vector<1x1x4xf32> to vector<1x4xf32>
    %203 = vector.broadcast %202 : vector<1x4xf32> to vector<8x4xf32>
    %204 = arith.addf %200, %203 : vector<8x4xf32>
    %c5_154 = arith.constant 5 : index
    %c0_155 = arith.constant 0 : index
    %c0_156 = arith.constant 0 : index
    %205 = vector.load %arg3[%c5_154, %c0_155, %c0_156] : memref<8x32x4xf32, #tpu.memory_space<vmem>>, vector<1x32x4xf32>
    %206 = vector.shape_cast %205 : vector<1x32x4xf32> to vector<32x4xf32>
    %cst_157 = arith.constant dense<0.000000e+00> : vector<8x4xf32>
    %207 = tpu.matmul %1, %206, %cst_157 {dimension_numbers = #tpu.dot_dimension_numbers<[1], [0], [0], [1], [0, 0, 1, 1], [], []>} : vector<8x32xf32>, vector<32x4xf32>, vector<8x4xf32> -> vector<8x4xf32>
    %c5_158 = arith.constant 5 : index
    %c0_159 = arith.constant 0 : index
    %c0_160 = arith.constant 0 : index
    %208 = vector.load %arg6[%c5_158, %c0_159, %c0_160] : memref<8x1x4xf32, #tpu.memory_space<vmem>>, vector<1x1x4xf32>
    %209 = vector.shape_cast %208 : vector<1x1x4xf32> to vector<1x4xf32>
    %210 = vector.broadcast %209 : vector<1x4xf32> to vector<8x4xf32>
    %211 = arith.addf %207, %210 : vector<8x4xf32>
    %c5_161 = arith.constant 5 : index
    %c0_162 = arith.constant 0 : index
    %c0_163 = arith.constant 0 : index
    %212 = vector.load %arg4[%c5_161, %c0_162, %c0_163] : memref<8x32x4xf32, #tpu.memory_space<vmem>>, vector<1x32x4xf32>
    %213 = vector.shape_cast %212 : vector<1x32x4xf32> to vector<32x4xf32>
    %cst_164 = arith.constant dense<0.000000e+00> : vector<8x4xf32>
    %214 = tpu.matmul %1, %213, %cst_164 {dimension_numbers = #tpu.dot_dimension_numbers<[1], [0], [0], [1], [0, 0, 1, 1], [], []>} : vector<8x32xf32>, vector<32x4xf32>, vector<8x4xf32> -> vector<8x4xf32>
    %c5_165 = arith.constant 5 : index
    %c0_166 = arith.constant 0 : index
    %c0_167 = arith.constant 0 : index
    %215 = vector.load %arg7[%c5_165, %c0_166, %c0_167] : memref<8x1x4xf32, #tpu.memory_space<vmem>>, vector<1x1x4xf32>
    %216 = vector.shape_cast %215 : vector<1x1x4xf32> to vector<1x4xf32>
    %217 = vector.broadcast %216 : vector<1x4xf32> to vector<8x4xf32>
    %218 = arith.addf %214, %217 : vector<8x4xf32>
    %219 = tpu.transpose %211, [1, 0] : vector<8x4xf32> -> vector<4x8xf32>
    %cst_168 = arith.constant dense<0.000000e+00> : vector<8x8xf32>
    %220 = tpu.matmul %204, %219, %cst_168 {dimension_numbers = #tpu.dot_dimension_numbers<[1], [0], [0], [1], [0, 0, 1, 1], [], []>} : vector<8x4xf32>, vector<4x8xf32>, vector<8x8xf32> -> vector<8x8xf32>
    %cst_169 = arith.constant 5.000000e-01 : f32
    %221 = vector.broadcast %cst_169 : f32 to vector<8x8xf32>
    %222 = arith.mulf %220, %221 : vector<8x8xf32>
    %cst_170 = arith.constant dense<0xFF800000> : vector<8xf32>
    %223 = vector.multi_reduction <maximumf>, %222, %cst_170 [1] : vector<8x8xf32> to vector<8xf32>
    %224 = vector.shape_cast %223 : vector<8xf32> to vector<8x1xf32>
    %225 = vector.broadcast %224 : vector<8x1xf32> to vector<8x8xf32>
    %226 = arith.subf %222, %225 : vector<8x8xf32>
    %227 = math.exp %226 : vector<8x8xf32>
    %cst_171 = arith.constant dense<0.000000e+00> : vector<8xf32>
    %228 = vector.multi_reduction <add>, %227, %cst_171 [1] : vector<8x8xf32> to vector<8xf32>
    %229 = vector.shape_cast %228 : vector<8xf32> to vector<8x1xf32>
    %230 = vector.broadcast %229 : vector<8x1xf32> to vector<8x8xf32>
    %231 = arith.divf %227, %230 : vector<8x8xf32>
    %cst_172 = arith.constant dense<0.000000e+00> : vector<8x4xf32>
    %232 = tpu.matmul %231, %218, %cst_172 {dimension_numbers = #tpu.dot_dimension_numbers<[1], [0], [0], [1], [0, 0, 1, 1], [], []>} : vector<8x8xf32>, vector<8x4xf32>, vector<8x4xf32> -> vector<8x4xf32>
    %c5_173 = arith.constant 5 : index
    %c0_174 = arith.constant 0 : index
    %c0_175 = arith.constant 0 : index
    %233 = vector.load %arg8[%c5_173, %c0_174, %c0_175] : memref<8x4x32xf32, #tpu.memory_space<vmem>>, vector<1x4x32xf32>
    %234 = vector.shape_cast %233 : vector<1x4x32xf32> to vector<4x32xf32>
    %cst_176 = arith.constant dense<0.000000e+00> : vector<8x32xf32>
    %235 = tpu.matmul %232, %234, %cst_176 {dimension_numbers = #tpu.dot_dimension_numbers<[1], [0], [0], [1], [0, 0, 1, 1], [], []>} : vector<8x4xf32>, vector<4x32xf32>, vector<8x32xf32> -> vector<8x32xf32>
    %236 = arith.addf %197, %235 : vector<8x32xf32>
    %c6 = arith.constant 6 : index
    %c0_177 = arith.constant 0 : index
    %c0_178 = arith.constant 0 : index
    %237 = vector.load %arg2[%c6, %c0_177, %c0_178] : memref<8x32x4xf32, #tpu.memory_space<vmem>>, vector<1x32x4xf32>
    %238 = vector.shape_cast %237 : vector<1x32x4xf32> to vector<32x4xf32>
    %cst_179 = arith.constant dense<0.000000e+00> : vector<8x4xf32>
    %239 = tpu.matmul %1, %238, %cst_179 {dimension_numbers = #tpu.dot_dimension_numbers<[1], [0], [0], [1], [0, 0, 1, 1], [], []>} : vector<8x32xf32>, vector<32x4xf32>, vector<8x4xf32> -> vector<8x4xf32>
    %c6_180 = arith.constant 6 : index
    %c0_181 = arith.constant 0 : index
    %c0_182 = arith.constant 0 : index
    %240 = vector.load %arg5[%c6_180, %c0_181, %c0_182] : memref<8x1x4xf32, #tpu.memory_space<vmem>>, vector<1x1x4xf32>
    %241 = vector.shape_cast %240 : vector<1x1x4xf32> to vector<1x4xf32>
    %242 = vector.broadcast %241 : vector<1x4xf32> to vector<8x4xf32>
    %243 = arith.addf %239, %242 : vector<8x4xf32>
    %c6_183 = arith.constant 6 : index
    %c0_184 = arith.constant 0 : index
    %c0_185 = arith.constant 0 : index
    %244 = vector.load %arg3[%c6_183, %c0_184, %c0_185] : memref<8x32x4xf32, #tpu.memory_space<vmem>>, vector<1x32x4xf32>
    %245 = vector.shape_cast %244 : vector<1x32x4xf32> to vector<32x4xf32>
    %cst_186 = arith.constant dense<0.000000e+00> : vector<8x4xf32>
    %246 = tpu.matmul %1, %245, %cst_186 {dimension_numbers = #tpu.dot_dimension_numbers<[1], [0], [0], [1], [0, 0, 1, 1], [], []>} : vector<8x32xf32>, vector<32x4xf32>, vector<8x4xf32> -> vector<8x4xf32>
    %c6_187 = arith.constant 6 : index
    %c0_188 = arith.constant 0 : index
    %c0_189 = arith.constant 0 : index
    %247 = vector.load %arg6[%c6_187, %c0_188, %c0_189] : memref<8x1x4xf32, #tpu.memory_space<vmem>>, vector<1x1x4xf32>
    %248 = vector.shape_cast %247 : vector<1x1x4xf32> to vector<1x4xf32>
    %249 = vector.broadcast %248 : vector<1x4xf32> to vector<8x4xf32>
    %250 = arith.addf %246, %249 : vector<8x4xf32>
    %c6_190 = arith.constant 6 : index
    %c0_191 = arith.constant 0 : index
    %c0_192 = arith.constant 0 : index
    %251 = vector.load %arg4[%c6_190, %c0_191, %c0_192] : memref<8x32x4xf32, #tpu.memory_space<vmem>>, vector<1x32x4xf32>
    %252 = vector.shape_cast %251 : vector<1x32x4xf32> to vector<32x4xf32>
    %cst_193 = arith.constant dense<0.000000e+00> : vector<8x4xf32>
    %253 = tpu.matmul %1, %252, %cst_193 {dimension_numbers = #tpu.dot_dimension_numbers<[1], [0], [0], [1], [0, 0, 1, 1], [], []>} : vector<8x32xf32>, vector<32x4xf32>, vector<8x4xf32> -> vector<8x4xf32>
    %c6_194 = arith.constant 6 : index
    %c0_195 = arith.constant 0 : index
    %c0_196 = arith.constant 0 : index
    %254 = vector.load %arg7[%c6_194, %c0_195, %c0_196] : memref<8x1x4xf32, #tpu.memory_space<vmem>>, vector<1x1x4xf32>
    %255 = vector.shape_cast %254 : vector<1x1x4xf32> to vector<1x4xf32>
    %256 = vector.broadcast %255 : vector<1x4xf32> to vector<8x4xf32>
    %257 = arith.addf %253, %256 : vector<8x4xf32>
    %258 = tpu.transpose %250, [1, 0] : vector<8x4xf32> -> vector<4x8xf32>
    %cst_197 = arith.constant dense<0.000000e+00> : vector<8x8xf32>
    %259 = tpu.matmul %243, %258, %cst_197 {dimension_numbers = #tpu.dot_dimension_numbers<[1], [0], [0], [1], [0, 0, 1, 1], [], []>} : vector<8x4xf32>, vector<4x8xf32>, vector<8x8xf32> -> vector<8x8xf32>
    %cst_198 = arith.constant 5.000000e-01 : f32
    %260 = vector.broadcast %cst_198 : f32 to vector<8x8xf32>
    %261 = arith.mulf %259, %260 : vector<8x8xf32>
    %cst_199 = arith.constant dense<0xFF800000> : vector<8xf32>
    %262 = vector.multi_reduction <maximumf>, %261, %cst_199 [1] : vector<8x8xf32> to vector<8xf32>
    %263 = vector.shape_cast %262 : vector<8xf32> to vector<8x1xf32>
    %264 = vector.broadcast %263 : vector<8x1xf32> to vector<8x8xf32>
    %265 = arith.subf %261, %264 : vector<8x8xf32>
    %266 = math.exp %265 : vector<8x8xf32>
    %cst_200 = arith.constant dense<0.000000e+00> : vector<8xf32>
    %267 = vector.multi_reduction <add>, %266, %cst_200 [1] : vector<8x8xf32> to vector<8xf32>
    %268 = vector.shape_cast %267 : vector<8xf32> to vector<8x1xf32>
    %269 = vector.broadcast %268 : vector<8x1xf32> to vector<8x8xf32>
    %270 = arith.divf %266, %269 : vector<8x8xf32>
    %cst_201 = arith.constant dense<0.000000e+00> : vector<8x4xf32>
    %271 = tpu.matmul %270, %257, %cst_201 {dimension_numbers = #tpu.dot_dimension_numbers<[1], [0], [0], [1], [0, 0, 1, 1], [], []>} : vector<8x8xf32>, vector<8x4xf32>, vector<8x4xf32> -> vector<8x4xf32>
    %c6_202 = arith.constant 6 : index
    %c0_203 = arith.constant 0 : index
    %c0_204 = arith.constant 0 : index
    %272 = vector.load %arg8[%c6_202, %c0_203, %c0_204] : memref<8x4x32xf32, #tpu.memory_space<vmem>>, vector<1x4x32xf32>
    %273 = vector.shape_cast %272 : vector<1x4x32xf32> to vector<4x32xf32>
    %cst_205 = arith.constant dense<0.000000e+00> : vector<8x32xf32>
    %274 = tpu.matmul %271, %273, %cst_205 {dimension_numbers = #tpu.dot_dimension_numbers<[1], [0], [0], [1], [0, 0, 1, 1], [], []>} : vector<8x4xf32>, vector<4x32xf32>, vector<8x32xf32> -> vector<8x32xf32>
    %275 = arith.addf %236, %274 : vector<8x32xf32>
    %c7 = arith.constant 7 : index
    %c0_206 = arith.constant 0 : index
    %c0_207 = arith.constant 0 : index
    %276 = vector.load %arg2[%c7, %c0_206, %c0_207] : memref<8x32x4xf32, #tpu.memory_space<vmem>>, vector<1x32x4xf32>
    %277 = vector.shape_cast %276 : vector<1x32x4xf32> to vector<32x4xf32>
    %cst_208 = arith.constant dense<0.000000e+00> : vector<8x4xf32>
    %278 = tpu.matmul %1, %277, %cst_208 {dimension_numbers = #tpu.dot_dimension_numbers<[1], [0], [0], [1], [0, 0, 1, 1], [], []>} : vector<8x32xf32>, vector<32x4xf32>, vector<8x4xf32> -> vector<8x4xf32>
    %c7_209 = arith.constant 7 : index
    %c0_210 = arith.constant 0 : index
    %c0_211 = arith.constant 0 : index
    %279 = vector.load %arg5[%c7_209, %c0_210, %c0_211] : memref<8x1x4xf32, #tpu.memory_space<vmem>>, vector<1x1x4xf32>
    %280 = vector.shape_cast %279 : vector<1x1x4xf32> to vector<1x4xf32>
    %281 = vector.broadcast %280 : vector<1x4xf32> to vector<8x4xf32>
    %282 = arith.addf %278, %281 : vector<8x4xf32>
    %c7_212 = arith.constant 7 : index
    %c0_213 = arith.constant 0 : index
    %c0_214 = arith.constant 0 : index
    %283 = vector.load %arg3[%c7_212, %c0_213, %c0_214] : memref<8x32x4xf32, #tpu.memory_space<vmem>>, vector<1x32x4xf32>
    %284 = vector.shape_cast %283 : vector<1x32x4xf32> to vector<32x4xf32>
    %cst_215 = arith.constant dense<0.000000e+00> : vector<8x4xf32>
    %285 = tpu.matmul %1, %284, %cst_215 {dimension_numbers = #tpu.dot_dimension_numbers<[1], [0], [0], [1], [0, 0, 1, 1], [], []>} : vector<8x32xf32>, vector<32x4xf32>, vector<8x4xf32> -> vector<8x4xf32>
    %c7_216 = arith.constant 7 : index
    %c0_217 = arith.constant 0 : index
    %c0_218 = arith.constant 0 : index
    %286 = vector.load %arg6[%c7_216, %c0_217, %c0_218] : memref<8x1x4xf32, #tpu.memory_space<vmem>>, vector<1x1x4xf32>
    %287 = vector.shape_cast %286 : vector<1x1x4xf32> to vector<1x4xf32>
    %288 = vector.broadcast %287 : vector<1x4xf32> to vector<8x4xf32>
    %289 = arith.addf %285, %288 : vector<8x4xf32>
    %c7_219 = arith.constant 7 : index
    %c0_220 = arith.constant 0 : index
    %c0_221 = arith.constant 0 : index
    %290 = vector.load %arg4[%c7_219, %c0_220, %c0_221] : memref<8x32x4xf32, #tpu.memory_space<vmem>>, vector<1x32x4xf32>
    %291 = vector.shape_cast %290 : vector<1x32x4xf32> to vector<32x4xf32>
    %cst_222 = arith.constant dense<0.000000e+00> : vector<8x4xf32>
    %292 = tpu.matmul %1, %291, %cst_222 {dimension_numbers = #tpu.dot_dimension_numbers<[1], [0], [0], [1], [0, 0, 1, 1], [], []>} : vector<8x32xf32>, vector<32x4xf32>, vector<8x4xf32> -> vector<8x4xf32>
    %c7_223 = arith.constant 7 : index
    %c0_224 = arith.constant 0 : index
    %c0_225 = arith.constant 0 : index
    %293 = vector.load %arg7[%c7_223, %c0_224, %c0_225] : memref<8x1x4xf32, #tpu.memory_space<vmem>>, vector<1x1x4xf32>
    %294 = vector.shape_cast %293 : vector<1x1x4xf32> to vector<1x4xf32>
    %295 = vector.broadcast %294 : vector<1x4xf32> to vector<8x4xf32>
    %296 = arith.addf %292, %295 : vector<8x4xf32>
    %297 = tpu.transpose %289, [1, 0] : vector<8x4xf32> -> vector<4x8xf32>
    %cst_226 = arith.constant dense<0.000000e+00> : vector<8x8xf32>
    %298 = tpu.matmul %282, %297, %cst_226 {dimension_numbers = #tpu.dot_dimension_numbers<[1], [0], [0], [1], [0, 0, 1, 1], [], []>} : vector<8x4xf32>, vector<4x8xf32>, vector<8x8xf32> -> vector<8x8xf32>
    %cst_227 = arith.constant 5.000000e-01 : f32
    %299 = vector.broadcast %cst_227 : f32 to vector<8x8xf32>
    %300 = arith.mulf %298, %299 : vector<8x8xf32>
    %cst_228 = arith.constant dense<0xFF800000> : vector<8xf32>
    %301 = vector.multi_reduction <maximumf>, %300, %cst_228 [1] : vector<8x8xf32> to vector<8xf32>
    %302 = vector.shape_cast %301 : vector<8xf32> to vector<8x1xf32>
    %303 = vector.broadcast %302 : vector<8x1xf32> to vector<8x8xf32>
    %304 = arith.subf %300, %303 : vector<8x8xf32>
    %305 = math.exp %304 : vector<8x8xf32>
    %cst_229 = arith.constant dense<0.000000e+00> : vector<8xf32>
    %306 = vector.multi_reduction <add>, %305, %cst_229 [1] : vector<8x8xf32> to vector<8xf32>
    %307 = vector.shape_cast %306 : vector<8xf32> to vector<8x1xf32>
    %308 = vector.broadcast %307 : vector<8x1xf32> to vector<8x8xf32>
    %309 = arith.divf %305, %308 : vector<8x8xf32>
    %cst_230 = arith.constant dense<0.000000e+00> : vector<8x4xf32>
    %310 = tpu.matmul %309, %296, %cst_230 {dimension_numbers = #tpu.dot_dimension_numbers<[1], [0], [0], [1], [0, 0, 1, 1], [], []>} : vector<8x8xf32>, vector<8x4xf32>, vector<8x4xf32> -> vector<8x4xf32>
    %c7_231 = arith.constant 7 : index
    %c0_232 = arith.constant 0 : index
    %c0_233 = arith.constant 0 : index
    %311 = vector.load %arg8[%c7_231, %c0_232, %c0_233] : memref<8x4x32xf32, #tpu.memory_space<vmem>>, vector<1x4x32xf32>
    %312 = vector.shape_cast %311 : vector<1x4x32xf32> to vector<4x32xf32>
    %cst_234 = arith.constant dense<0.000000e+00> : vector<8x32xf32>
    %313 = tpu.matmul %310, %312, %cst_234 {dimension_numbers = #tpu.dot_dimension_numbers<[1], [0], [0], [1], [0, 0, 1, 1], [], []>} : vector<8x4xf32>, vector<4x32xf32>, vector<8x32xf32> -> vector<8x32xf32>
    %314 = arith.addf %275, %313 : vector<8x32xf32>
    %c0_235 = arith.constant 0 : index
    %c0_236 = arith.constant 0 : index
    %315 = vector.load %arg9[%c0_235, %c0_236] : memref<1x32xf32, #tpu.memory_space<vmem>>, vector<1x32xf32>
    %316 = vector.broadcast %315 : vector<1x32xf32> to vector<8x32xf32>
    %317 = arith.addf %314, %316 : vector<8x32xf32>
    %c0_237 = arith.constant 0 : index
    %c0_238 = arith.constant 0 : index
    %c0_239 = arith.constant 0 : index
    %318 = vector.load %arg10[%c0_237, %c0_238, %c0_239] : memref<1x8x32xf32, #tpu.memory_space<vmem>>, vector<1x8x32xf32>
    %319 = vector.shape_cast %318 : vector<1x8x32xf32> to vector<8x32xf32>
    %320 = vector.shape_cast %317 : vector<8x32xf32> to vector<1x8x32xf32>
    tpu.vector_store %arg10[%c0_237, %c0_238, %c0_239], %320 {strides = array<i32>} : memref<1x8x32xf32, #tpu.memory_space<vmem>>, vector<1x8x32xf32>,
    return
  }
  func.func @transform_0(%arg0: i32) -> (i32, i32, i32) {
    %c0_i32 = arith.constant 0 : i32
    %c0_i32_0 = arith.constant 0 : i32
    %c0_i32_1 = arith.constant 0 : i32
    return %arg0, %c0_i32, %c0_i32_0 : i32, i32, i32
  }
  func.func @transform_1(%arg0: i32) -> (i32, i32, i32) {
    %c0_i32 = arith.constant 0 : i32
    %c0_i32_0 = arith.constant 0 : i32
    %c0_i32_1 = arith.constant 0 : i32
    %c0_i32_2 = arith.constant 0 : i32
    return %c0_i32, %c0_i32_0, %c0_i32_1 : i32, i32, i32
  }
  func.func @transform_2(%arg0: i32) -> (i32, i32, i32) {
    %c0_i32 = arith.constant 0 : i32
    %c0_i32_0 = arith.constant 0 : i32
    %c0_i32_1 = arith.constant 0 : i32
    %c0_i32_2 = arith.constant 0 : i32
    return %c0_i32, %c0_i32_0, %c0_i32_1 : i32, i32, i32
  }
  func.func @transform_3(%arg0: i32) -> (i32, i32, i32) {
    %c0_i32 = arith.constant 0 : i32
    %c0_i32_0 = arith.constant 0 : i32
    %c0_i32_1 = arith.constant 0 : i32
    %c0_i32_2 = arith.constant 0 : i32
    return %c0_i32, %c0_i32_0, %c0_i32_1 : i32, i32, i32
  }
  func.func @transform_4(%arg0: i32) -> (i32, i32, i32) {
    %c0_i32 = arith.constant 0 : i32
    %c0_i32_0 = arith.constant 0 : i32
    %c0_i32_1 = arith.constant 0 : i32
    %c0_i32_2 = arith.constant 0 : i32
    return %c0_i32, %c0_i32_0, %c0_i32_1 : i32, i32, i32
  }
  func.func @transform_5(%arg0: i32) -> (i32, i32, i32) {
    %c0_i32 = arith.constant 0 : i32
    %c0_i32_0 = arith.constant 0 : i32
    %c0_i32_1 = arith.constant 0 : i32
    %c0_i32_2 = arith.constant 0 : i32
    return %c0_i32, %c0_i32_0, %c0_i32_1 : i32, i32, i32
  }
  func.func @transform_6(%arg0: i32) -> (i32, i32, i32) {
    %c0_i32 = arith.constant 0 : i32
    %c0_i32_0 = arith.constant 0 : i32
    %c0_i32_1 = arith.constant 0 : i32
    %c0_i32_2 = arith.constant 0 : i32
    return %c0_i32, %c0_i32_0, %c0_i32_1 : i32, i32, i32
  }
  func.func @transform_7(%arg0: i32) -> (i32, i32, i32) {
    %c0_i32 = arith.constant 0 : i32
    %c0_i32_0 = arith.constant 0 : i32
    %c0_i32_1 = arith.constant 0 : i32
    %c0_i32_2 = arith.constant 0 : i32
    return %c0_i32, %c0_i32_0, %c0_i32_1 : i32, i32, i32
  }
  func.func @transform_8(%arg0: i32) -> (i32, i32) {
    %c0_i32 = arith.constant 0 : i32
    %c0_i32_0 = arith.constant 0 : i32
    %c0_i32_1 = arith.constant 0 : i32
    return %c0_i32, %c0_i32_0 : i32, i32
  }
  func.func @transform_9(%arg0: i32) -> (i32, i32, i32) {
    %c0_i32 = arith.constant 0 : i32
    %c0_i32_0 = arith.constant 0 : i32
    %c0_i32_1 = arith.constant 0 : i32
    return %arg0, %c0_i32, %c0_i32_0 : i32, i32, i32
  }
}

</mosaic_0001>

<llo_original>
// kernel: temporal_attention.1
$region0: #{temporal_attention.1}
  #allocation0 [shape = 'u32[]', space=smem, size = 0x4, offset = 0x4, fixed_abs, tag = 'smem constant byte address 0x4 - core index']
  #allocation1 [shape = 'u32[144,128]{1,0:T(1,128)}', space=vmem, size = 0x12000, scoped, tag = 'internal scratch']
  %s0 = inlined_call_operand.vmem [shape: f32[2,8,32], index: 0, kind: input, shape index: {}]
  %s1 = inlined_call_operand.vmem [shape: f32[8,32,4], index: 1, kind: input, shape index: {}]
  %s2 = inlined_call_operand.vmem [shape: f32[8,32,4], index: 2, kind: input, shape index: {}]
  %s3 = inlined_call_operand.vmem [shape: f32[8,32,4], index: 3, kind: input, shape index: {}]
  %s4 = inlined_call_operand.vmem [shape: f32[8,1,4], index: 4, kind: input, shape index: {}]
  %s5 = inlined_call_operand.vmem [shape: f32[8,1,4], index: 5, kind: input, shape index: {}]
  %s6 = inlined_call_operand.vmem [shape: f32[8,1,4], index: 6, kind: input, shape index: {}]
  %s7 = inlined_call_operand.vmem [shape: f32[8,4,32], index: 7, kind: input, shape index: {}]
  %s8 = inlined_call_operand.vmem [shape: f32[1,32], index: 8, kind: input, shape index: {}]
  %s9 = inlined_call_operand.hbm [shape: f32[2,8,32], index: 9, kind: output, shape index: {}]
  %s10 = sld [smem:[#allocation0]]
  $region69: #{temporal_attention.1} parent=0
    _
  %s12 = ssub.s32 1, %s10
  %s13 = scalar_select 0, %s12, %s10
  $region1: #{temporal_attention.1} parent=0
    #allocation2 [shape = 'u8[8192]{0}', space=vmem, size = 0x2000, scoped, tag = 'output window, operand 0']
    #allocation3 [shape = 's32[2]{0}', space=sflag, size = 0x8, scoped, tag = 'scoped memory for temporal_attention.1']
    %14 = vsyncpa [#allocation3], 0
    %s15 = scalar_lea.sflag [#allocation3], 1
    %16 = vsyncpa %s15, 0
    loop: start=0, step=1, limit=4
    $region2: #{temporal_attention.1} parent=1 // loop_pre_header
      _
    $region3: #{temporal_attention.1} parent=1 // loop_header
      %s18 = sphi 0, %s22
      %p19 = scmp.ge.s32.totalorder %s18, 4
      %s28 = sphi 0, %s30
      %s31 = sphi 0, %s28
      %s32 = sphi 0, %s31
      %s48 = sphi 0, %s32
      %s52 = sphi 0, %s52
      %s54 = sphi 0, %s52
      %s55 = sphi 0, %s54
      %s69 = sphi 0, %s55
      %s73 = sphi 0, %s73
      %s75 = sphi 0, %s73
      %s76 = sphi 0, %s75
      %s90 = sphi 0, %s76
      %s94 = sphi 0, %s94
      %s96 = sphi 0, %s94
      %s97 = sphi 0, %s96
      %s111 = sphi 0, %s97
      %s115 = sphi 0, %s115
      %s117 = sphi 0, %s115
      %s118 = sphi 0, %s117
      %s132 = sphi 0, %s118
      %s136 = sphi 0, %s136
      %s138 = sphi 0, %s136
      %s139 = sphi 0, %s138
      %s153 = sphi 0, %s139
      %s157 = sphi 0, %s157
      %s159 = sphi 0, %s157
      %s160 = sphi 0, %s159
      %s174 = sphi 0, %s160
      %s178 = sphi 0, %s178
      %s180 = sphi 0, %s178
      %s181 = sphi 0, %s180
      %s195 = sphi 0, %s181
      %s199 = sphi 0, %s199
      %s201 = sphi 0, %s199
      %s202 = sphi 0, %s201
      %s216 = sphi 0, %s202
      %s222 = sphi 0, %s224
      %s225 = sphi 0, %s222
      %s226 = sphi 0, %s225
      %s242 = sphi 0, %s226
    $region4: #{temporal_attention.1} parent=1 // loop_header_branch
      %21 = sbr.rel (%p19) target = $region8
    $region5: #{temporal_attention.1} parent=1 // loop_body
      %s23 = ssub.s32 %s18, 1
      %s24 = ssub.s32 %s18, 2
      %s25 = sadd.s32 %s18, 1
      %s26 = ssub.s32 %s18, %s25
      %p27 = scmp.eq.s32.totalorder %s26, 0
      %s29 = sadd.s32 %s28, 1
      %s30 = scalar_select %p27, %s28, %s29
      %p33 = pneg %p27
      %p34 = scmp.eq.s32.totalorder %s18, 1
      %p35 = por %p33, %p34
      %p36 = scmp.ne.s32.totalorder %s28, %s31
      %p37 = scmp.eq.s32.totalorder %s18, 0
      %p38 = por %p36, %p37
      %p39 = scmp.ne.s32.totalorder %s28, %s31
      %p40 = scmp.eq.s32.totalorder %s23, 1
      %p41 = por %p39, %p40
      %p42 = scmp.ne.s32.totalorder %s31, %s32
      %p43 = scmp.eq.s32.totalorder %s23, 0
      %p44 = por %p42, %p43
      %p45 = scmp.ne.s32.totalorder %s31, %s32
      %p46 = scmp.eq.s32.totalorder %s24, 1
      %p47 = por %p45, %p46
      %p49 = scmp.ne.s32.totalorder %s32, %s48
      %p50 = scmp.eq.s32.totalorder %s24, 0
      %p51 = por %p49, %p50
      %s53 = sadd.s32 %s52, 1
      %p56 = scmp.eq.s32.totalorder %s18, 1
      %p57 = scmp.ne.s32.totalorder %s52, %s54
      %p58 = scmp.eq.s32.totalorder %s18, 0
      %p59 = por %p57, %p58
      %p60 = scmp.ne.s32.totalorder %s52, %s54
      %p61 = scmp.eq.s32.totalorder %s23, 1
      %p62 = por %p60, %p61
      %p63 = scmp.ne.s32.totalorder %s54, %s55
      %p64 = scmp.eq.s32.totalorder %s23, 0
      %p65 = por %p63, %p64
      %p66 = scmp.ne.s32.totalorder %s54, %s55
      %p67 = scmp.eq.s32.totalorder %s24, 1
      %p68 = por %p66, %p67
      %p70 = scmp.ne.s32.totalorder %s55, %s69
      %p71 = scmp.eq.s32.totalorder %s24, 0
      %p72 = por %p70, %p71
      %s74 = sadd.s32 %s73, 1
      %p77 = scmp.eq.s32.totalorder %s18, 1
      %p78 = scmp.ne.s32.totalorder %s73, %s75
      %p79 = scmp.eq.s32.totalorder %s18, 0
      %p80 = por %p78, %p79
      %p81 = scmp.ne.s32.totalorder %s73, %s75
      %p82 = scmp.eq.s32.totalorder %s23, 1
      %p83 = por %p81, %p82
      %p84 = scmp.ne.s32.totalorder %s75, %s76
      %p85 = scmp.eq.s32.totalorder %s23, 0
      %p86 = por %p84, %p85
      %p87 = scmp.ne.s32.totalorder %s75, %s76
      %p88 = scmp.eq.s32.totalorder %s24, 1
      %p89 = por %p87, %p88
      %p91 = scmp.ne.s32.totalorder %s76, %s90
      %p92 = scmp.eq.s32.totalorder %s24, 0
      %p93 = por %p91, %p92
      %s95 = sadd.s32 %s94, 1
      %p98 = scmp.eq.s32.totalorder %s18, 1
      %p99 = scmp.ne.s32.totalorder %s94, %s96
      %p100 = scmp.eq.s32.totalorder %s18, 0
      %p101 = por %p99, %p100
      %p102 = scmp.ne.s32.totalorder %s94, %s96
      %p103 = scmp.eq.s32.totalorder %s23, 1
      %p104 = por %p102, %p103
      %p105 = scmp.ne.s32.totalorder %s96, %s97
      %p106 = scmp.eq.s32.totalorder %s23, 0
      %p107 = por %p105, %p106
      %p108 = scmp.ne.s32.totalorder %s96, %s97
      %p109 = scmp.eq.s32.totalorder %s24, 1
      %p110 = por %p108, %p109
      %p112 = scmp.ne.s32.totalorder %s97, %s111
      %p113 = scmp.eq.s32.totalorder %s24, 0
      %p114 = por %p112, %p113
      %s116 = sadd.s32 %s115, 1
      %p119 = scmp.eq.s32.totalorder %s18, 1
      %p120 = scmp.ne.s32.totalorder %s115, %s117
      %p121 = scmp.eq.s32.totalorder %s18, 0
      %p122 = por %p120, %p121
      %p123 = scmp.ne.s32.totalorder %s115, %s117
      %p124 = scmp.eq.s32.totalorder %s23, 1
      %p125 = por %p123, %p124
      %p126 = scmp.ne.s32.totalorder %s117, %s118
      %p127 = scmp.eq.s32.totalorder %s23, 0
      %p128 = por %p126, %p127
      %p129 = scmp.ne.s32.totalorder %s117, %s118
      %p130 = scmp.eq.s32.totalorder %s24, 1
      %p131 = por %p129, %p130
      %p133 = scmp.ne.s32.totalorder %s118, %s132
      %p134 = scmp.eq.s32.totalorder %s24, 0
      %p135 = por %p133, %p134
      %s137 = sadd.s32 %s136, 1
      %p140 = scmp.eq.s32.totalorder %s18, 1
      %p141 = scmp.ne.s32.totalorder %s136, %s138
      %p142 = scmp.eq.s32.totalorder %s18, 0
      %p143 = por %p141, %p142
      %p144 = scmp.ne.s32.totalorder %s136, %s138
      %p145 = scmp.eq.s32.totalorder %s23, 1
      %p146 = por %p144, %p145
      %p147 = scmp.ne.s32.totalorder %s138, %s139
      %p148 = scmp.eq.s32.totalorder %s23, 0
      %p149 = por %p147, %p148
      %p150 = scmp.ne.s32.totalorder %s138, %s139
      %p151 = scmp.eq.s32.totalorder %s24, 1
      %p152 = por %p150, %p151
      %p154 = scmp.ne.s32.totalorder %s139, %s153
      %p155 = scmp.eq.s32.totalorder %s24, 0
      %p156 = por %p154, %p155
      %s158 = sadd.s32 %s157, 1
      %p161 = scmp.eq.s32.totalorder %s18, 1
      %p162 = scmp.ne.s32.totalorder %s157, %s159
      %p163 = scmp.eq.s32.totalorder %s18, 0
      %p164 = por %p162, %p163
      %p165 = scmp.ne.s32.totalorder %s157, %s159
      %p166 = scmp.eq.s32.totalorder %s23, 1
      %p167 = por %p165, %p166
      %p168 = scmp.ne.s32.totalorder %s159, %s160
      %p169 = scmp.eq.s32.totalorder %s23, 0
      %p170 = por %p168, %p169
      %p171 = scmp.ne.s32.totalorder %s159, %s160
      %p172 = scmp.eq.s32.totalorder %s24, 1
      %p173 = por %p171, %p172
      %p175 = scmp.ne.s32.totalorder %s160, %s174
      %p176 = scmp.eq.s32.totalorder %s24, 0
      %p177 = por %p175, %p176
      %s179 = sadd.s32 %s178, 1
      %p182 = scmp.eq.s32.totalorder %s18, 1
      %p183 = scmp.ne.s32.totalorder %s178, %s180
      %p184 = scmp.eq.s32.totalorder %s18, 0
      %p185 = por %p183, %p184
      %p186 = scmp.ne.s32.totalorder %s178, %s180
      %p187 = scmp.eq.s32.totalorder %s23, 1
      %p188 = por %p186, %p187
      %p189 = scmp.ne.s32.totalorder %s180, %s181
      %p190 = scmp.eq.s32.totalorder %s23, 0
      %p191 = por %p189, %p190
      %p192 = scmp.ne.s32.totalorder %s180, %s181
      %p193 = scmp.eq.s32.totalorder %s24, 1
      %p194 = por %p192, %p193
      %p196 = scmp.ne.s32.totalorder %s181, %s195
      %p197 = scmp.eq.s32.totalorder %s24, 0
      %p198 = por %p196, %p197
      %s200 = sadd.s32 %s199, 1
      %p203 = scmp.eq.s32.totalorder %s18, 1
      %p204 = scmp.ne.s32.totalorder %s199, %s201
      %p205 = scmp.eq.s32.totalorder %s18, 0
      %p206 = por %p204, %p205
      %p207 = scmp.ne.s32.totalorder %s199, %s201
      %p208 = scmp.eq.s32.totalorder %s23, 1
      %p209 = por %p207, %p208
      %p210 = scmp.ne.s32.totalorder %s201, %s202
      %p211 = scmp.eq.s32.totalorder %s23, 0
      %p212 = por %p210, %p211
      %p213 = scmp.ne.s32.totalorder %s201, %s202
      %p214 = scmp.eq.s32.totalorder %s24, 1
      %p215 = por %p213, %p214
      %p217 = scmp.ne.s32.totalorder %s202, %s216
      %p218 = scmp.eq.s32.totalorder %s24, 0
      %p219 = por %p217, %p218
      %s220 = ssub.s32 %s18, %s25
      %p221 = scmp.eq.s32.totalorder %s220, 0
      %s223 = sadd.s32 %s222, 1
      %s224 = scalar_select %p221, %s222, %s223
      %p227 = pneg %p221
      %p228 = scmp.eq.s32.totalorder %s18, 1
      %p229 = por %p227, %p228
      %p230 = scmp.ne.s32.totalorder %s222, %s225
      %p231 = scmp.eq.s32.totalorder %s18, 0
      %p232 = por %p230, %p231
      %p233 = scmp.ne.s32.totalorder %s222, %s225
      %p234 = scmp.eq.s32.totalorder %s23, 1
      %p235 = por %p233, %p234
      %p236 = scmp.ne.s32.totalorder %s225, %s226
      %p237 = scmp.eq.s32.totalorder %s23, 0
      %p238 = por %p236, %p237
      %p239 = scmp.ne.s32.totalorder %s225, %s226
      %p240 = scmp.eq.s32.totalorder %s24, 1
      %p241 = por %p239, %p240
      %p243 = scmp.ne.s32.totalorder %s226, %s242
      %p244 = scmp.eq.s32.totalorder %s24, 0
      %p245 = por %p243, %p244
      %p246 = scmp.le.s32.totalorder 1, %s18
      %p247 = scmp.lt.s32.totalorder %s18, 3
      %p248 = pnand %p246, %p247
      %p249 = pneg %p248
      // Predicated region
      $region9: #{temporal_attention.1} parent=5 // pred_check
        _
      $region10: #{temporal_attention.1} parent=5 // pred_check_branch
        %251 = sbr.rel (%p248) target = $region12
      $region11: #{temporal_attention.1} parent=5 // pred_region
        %s252 = ssub.s32 %s18, 1
        // Predicated region
        $region13: #{temporal_attention.1} parent=11 // pred_check
          %p253 = pneg %p65
        $region14: #{temporal_attention.1} parent=11 // pred_check_branch
          %255 = sbr.rel (%p253) target = $region16
        $region15: #{temporal_attention.1} parent=11 // pred_region
          _
        $region16: #{temporal_attention.1} parent=11 // pred_fallthru
          _
        // Predicated region
        $region17: #{temporal_attention.1} parent=11 // pred_check
          %p256 = pneg %p86
        $region18: #{temporal_attention.1} parent=11 // pred_check_branch
          %258 = sbr.rel (%p256) target = $region20
        $region19: #{temporal_attention.1} parent=11 // pred_region
          _
        $region20: #{temporal_attention.1} parent=11 // pred_fallthru
          _
        // Predicated region
        $region21: #{temporal_attention.1} parent=11 // pred_check
          %p259 = pneg %p107
        $region22: #{temporal_attention.1} parent=11 // pred_check_branch
          %261 = sbr.rel (%p259) target = $region24
        $region23: #{temporal_attention.1} parent=11 // pred_region
          _
        $region24: #{temporal_attention.1} parent=11 // pred_fallthru
          _
        // Predicated region
        $region25: #{temporal_attention.1} parent=11 // pred_check
          %p262 = pneg %p128
        $region26: #{temporal_attention.1} parent=11 // pred_check_branch
          %264 = sbr.rel (%p262) target = $region28
        $region27: #{temporal_attention.1} parent=11 // pred_region
          _
        $region28: #{temporal_attention.1} parent=11 // pred_fallthru
          _
        // Predicated region
        $region29: #{temporal_attention.1} parent=11 // pred_check
          %p265 = pneg %p149
        $region30: #{temporal_attention.1} parent=11 // pred_check_branch
          %267 = sbr.rel (%p265) target = $region32
        $region31: #{temporal_attention.1} parent=11 // pred_region
          _
        $region32: #{temporal_attention.1} parent=11 // pred_fallthru
          _
        // Predicated region
        $region33: #{temporal_attention.1} parent=11 // pred_check
          %p268 = pneg %p170
        $region34: #{temporal_attention.1} parent=11 // pred_check_branch
          %270 = sbr.rel (%p268) target = $region36
        $region35: #{temporal_attention.1} parent=11 // pred_region
          _
        $region36: #{temporal_attention.1} parent=11 // pred_fallthru
          _
        // Predicated region
        $region37: #{temporal_attention.1} parent=11 // pred_check
          %p271 = pneg %p191
        $region38: #{temporal_attention.1} parent=11 // pred_check_branch
          %273 = sbr.rel (%p271) target = $region40
        $region39: #{temporal_attention.1} parent=11 // pred_region
          _
        $region40: #{temporal_attention.1} parent=11 // pred_fallthru
          _
        // Predicated region
        $region41: #{temporal_attention.1} parent=11 // pred_check
          %p274 = pneg %p212
        $region42: #{temporal_attention.1} parent=11 // pred_check_branch
          %276 = sbr.rel (%p274) target = $region44
        $region43: #{temporal_attention.1} parent=11 // pred_region
          _
        $region44: #{temporal_attention.1} parent=11 // pred_fallthru
          _
      $region12: #{temporal_attention.1} parent=5 // pred_fallthru
        _
      %p277 = scmp.lt.s32.totalorder %s18, 2
      // Predicated region
      $region45: #{temporal_attention.1} parent=5 // pred_check
        %p278 = pneg %p277
      $region46: #{temporal_attention.1} parent=5 // pred_check_branch
        %280 = sbr.rel (%p278) target = $region48
      $region47: #{temporal_attention.1} parent=5 // pred_region
        // Predicated region
        $region49: #{temporal_attention.1} parent=47 // pred_check
          %p281 = pneg %p38
        $region50: #{temporal_attention.1} parent=47 // pred_check_branch
          %283 = sbr.rel (%p281) target = $region52
        $region51: #{temporal_attention.1} parent=47 // pred_region
          %p284 = scmp.lt.s32.totalorder %s18, 1
          %s285 = scalar_select %p284, %s18, 1
          %s286 = smul.addr %s285, 8
          %s287 = scalar_lea.vmem %s0, %s286
        $region52: #{temporal_attention.1} parent=47 // pred_fallthru
          _
      $region48: #{temporal_attention.1} parent=5 // pred_fallthru
        _
      %p288 = scmp.le.s32.totalorder 1, %s18
      %p289 = scmp.lt.s32.totalorder %s18, 3
      %p290 = pnand %p288, %p289
      %p291 = pneg %p290
      // Predicated region
      $region53: #{temporal_attention.1} parent=5 // pred_check
        _
      $region54: #{temporal_attention.1} parent=5 // pred_check_branch
        %293 = sbr.rel (%p290) target = $region56
      $region55: #{temporal_attention.1} parent=5 // pred_region
        %s294 = ssub.s32 %s18, 1
        %p295 = scmp.lt.s32.totalorder %s23, 1
        %s296 = scalar_select %p295, %s23, 1
        %s297 = smul.addr %s296, 8
        %s298 = scalar_lea.vmem %s0, %s297
        %p299 = pneg %p44
        %p300 = pneg %p41
        %p301 = pneg %p65
        %p302 = pneg %p62
        %p303 = pneg %p86
        %p304 = pneg %p83
        %p305 = pneg %p107
        %p306 = pneg %p104
        %p307 = pneg %p128
        %p308 = pneg %p125
        %p309 = pneg %p149
        %p310 = pneg %p146
        %p311 = pneg %p170
        %p312 = pneg %p167
        %p313 = pneg %p191
        %p314 = pneg %p188
        %p315 = pneg %p212
        %p316 = pneg %p209
        %p317 = pneg %p238
        %p318 = pneg %p235
        %s319 = sand.u32 %s225, 1
        %s320 = scalar_lea.sflag [#allocation3], %s319
        %s321 = sand.u32 %s225, 1
        %s322 = smul.addr %s321, 8
        %s323 = scalar_lea.vmem [#allocation2], %s322
        %p324 = scmp.lt.s32.totalorder %s23, 1
        %s325 = scalar_select %p324, %s23, 1
        %s326 = smul.addr %s325, 8
        %s327 = scalar_lea.vmem %s0, %s326
        %v328 = vld [vmem:[%s327] sm:$0xff]
        %v329 = vld [vmem:[%s1] sm:$0xff]
        %v330 = vld [vmem:[%s1 + $0x8] sm:$0xff]
        %v331 = vld [vmem:[%s1 + $0x10] sm:$0xff]
        %v332 = vld [vmem:[%s1 + $0x18] sm:$0xff]
        %v333 = vld [vmem:[%s4] sm:$0x1]
        %v335 = vlaneseq
        %v336 = vshrl.u32 %v335, 7
        %v337 = vsub.s32 0, %v336
        %v338 = vrot.slane %v333, %v337
        %vm340 = vcmask 261120
        %v342 = vsel %vm340, %v328, 0
        %344 = vmatprep.subr.mxu0 0.0
        %345 = vmatpush1.msra.mxu0 %v329
        %346 = vmatprep.subr.mxu0 0.0
        %347 = vmatpush1.msra.mxu0 %v330
        %348 = vmatprep.subr.mxu0 0.0
        %349 = vmatpush1.msra.mxu0 %v331
        %350 = vmatprep.subr.mxu0 0.0
        %351 = vmatpush1.msra.mxu0 %v332
        %352 = vmatprep.subr.mxu0 0.0
        %353 = vmatpush1.msra.mxu0 0.0
        %354 = vmatprep.subr.mxu0 0.0
        %355 = vmatpush1.msra.mxu0 0.0
        %356 = vmatprep.subr.mxu0 0.0
        %357 = vmatpush1.msra.mxu0 0.0
        %358 = vmatprep.subr.mxu0 0.0
        %359 = vmatpush1.msra.mxu0 0.0
        %360 = vmatprep.subr.mxu0 0.0
        %361 = vmatpush1.msra.mxu0 0.0
        %362 = vmatprep.subr.mxu0 0.0
        %363 = vmatpush1.msra.mxu0 0.0
        %364 = vmatprep.subr.mxu0 0.0
        %365 = vmatpush1.msra.mxu0 0.0
        %366 = vmatprep.subr.mxu0 0.0
        %367 = vmatpush1.msra.mxu0 0.0
        %368 = vmatprep.subr.mxu0 0.0
        %369 = vmatpush1.msra.mxu0 0.0
        %370 = vmatprep.subr.mxu0 0.0
        %371 = vmatpush1.msra.mxu0 0.0
        %372 = vmatprep.subr.mxu0 0.0
        %373 = vmatpush1.msra.mxu0 0.0
        %374 = vmatprep.subr.mxu0 0.0
        %375 = vmatpush1.msra.mxu0 0.0
        %376 = vmatprep.subr.mxu0 0.0
        %377 = vmatpush1.msra.mxu0 0.0
        %378 = vmatprep.subr.mxu0 0.0
        %379 = vmatpush1.msra.mxu0 0.0
        %380 = vmatprep.subr.mxu0 0.0
        %381 = vmatpush1.msra.mxu0 0.0
        %382 = vmatprep.subr.mxu0 0.0
        %383 = vmatpush1.msra.mxu0 0.0
        %384 = vmatprep.subr.mxu0 0.0
        %385 = vmatpush1.msra.mxu0 0.0
        %386 = vmatprep.subr.mxu0 0.0
        %387 = vmatpush1.msra.mxu0 0.0
        %388 = vmatprep.subr.mxu0 0.0
        %389 = vmatpush1.msra.mxu0 0.0
        %390 = vmatprep.subr.mxu0 0.0
        %391 = vmatpush1.msra.mxu0 0.0
        %392 = vmatprep.subr.mxu0 0.0
        %393 = vmatpush1.msra.mxu0 0.0
        %394 = vmatprep.subr.mxu0 0.0
        %395 = vmatpush1.msra.mxu0 0.0
        %396 = vmatprep.subr.mxu0 0.0
        %397 = vmatpush1.msra.mxu0 0.0
        %398 = vmatprep.subr.mxu0 0.0
        %399 = vmatpush1.msra.mxu0 0.0
        %400 = vmatprep.subr.mxu0 0.0
        %401 = vmatpush1.msra.mxu0 0.0
        %402 = vmatprep.subr.mxu0 0.0
        %403 = vmatpush1.msra.mxu0 0.0
        %404 = vmatprep.subr.mxu0 0.0
        %405 = vmatpush1.msra.mxu0 0.0
        %406 = vmatprep.subr.mxu0 0.0
        %407 = vmatpush1.msra.mxu0 0.0
        %408 = vmatprep.mubr.f32.mxu0 0.0
        %409 = vmatmul.mubr.f32.gmra.mrb[0].mxu0 %v342
        %v410 = vpop.f32.mrb[0].mxu0
        %v411 = vadd.f32 %v338, %v410
        %v412 = vpop.f32.mrb[0].mxu0
        %413 = vdwg.mxu0
        %v414 = vld [vmem:[%s2] sm:$0xff]
        %v415 = vld [vmem:[%s2 + $0x8] sm:$0xff]
        %v416 = vld [vmem:[%s2 + $0x10] sm:$0xff]
        %v417 = vld [vmem:[%s2 + $0x18] sm:$0xff]
        %v418 = vld [vmem:[%s5] sm:$0x1]
        %v420 = vlaneseq
        %v421 = vshrl.u32 %v420, 7
        %v422 = vsub.s32 0, %v421
        %v423 = vrot.slane %v418, %v422
        %425 = vmatprep.subr.mxu0 0.0
        %426 = vmatpush1.msra.mxu0 %v414
        %427 = vmatprep.subr.mxu0 0.0
        %428 = vmatpush1.msra.mxu0 %v415
        %429 = vmatprep.subr.mxu0 0.0
        %430 = vmatpush1.msra.mxu0 %v416
        %431 = vmatprep.subr.mxu0 0.0
        %432 = vmatpush1.msra.mxu0 %v417
        %433 = vmatprep.subr.mxu0 0.0
        %434 = vmatpush1.msra.mxu0 0.0
        %435 = vmatprep.subr.mxu0 0.0
        %436 = vmatpush1.msra.mxu0 0.0
        %437 = vmatprep.subr.mxu0 0.0
        %438 = vmatpush1.msra.mxu0 0.0
        %439 = vmatprep.subr.mxu0 0.0
        %440 = vmatpush1.msra.mxu0 0.0
        %441 = vmatprep.subr.mxu0 0.0
        %442 = vmatpush1.msra.mxu0 0.0
        %443 = vmatprep.subr.mxu0 0.0
        %444 = vmatpush1.msra.mxu0 0.0
        %445 = vmatprep.subr.mxu0 0.0
        %446 = vmatpush1.msra.mxu0 0.0
        %447 = vmatprep.subr.mxu0 0.0
        %448 = vmatpush1.msra.mxu0 0.0
        %449 = vmatprep.subr.mxu0 0.0
        %450 = vmatpush1.msra.mxu0 0.0
        %451 = vmatprep.subr.mxu0 0.0
        %452 = vmatpush1.msra.mxu0 0.0
        %453 = vmatprep.subr.mxu0 0.0
        %454 = vmatpush1.msra.mxu0 0.0
        %455 = vmatprep.subr.mxu0 0.0
        %456 = vmatpush1.msra.mxu0 0.0
        %457 = vmatprep.subr.mxu0 0.0
        %458 = vmatpush1.msra.mxu0 0.0
        %459 = vmatprep.subr.mxu0 0.0
        %460 = vmatpush1.msra.mxu0 0.0
        %461 = vmatprep.subr.mxu0 0.0
        %462 = vmatpush1.msra.mxu0 0.0
        %463 = vmatprep.subr.mxu0 0.0
        %464 = vmatpush1.msra.mxu0 0.0
        %465 = vmatprep.subr.mxu0 0.0
        %466 = vmatpush1.msra.mxu0 0.0
        %467 = vmatprep.subr.mxu0 0.0
        %468 = vmatpush1.msra.mxu0 0.0
        %469 = vmatprep.subr.mxu0 0.0
        %470 = vmatpush1.msra.mxu0 0.0
        %471 = vmatprep.subr.mxu0 0.0
        %472 = vmatpush1.msra.mxu0 0.0
        %473 = vmatprep.subr.mxu0 0.0
        %474 = vmatpush1.msra.mxu0 0.0
        %475 = vmatprep.subr.mxu0 0.0
        %476 = vmatpush1.msra.mxu0 0.0
        %477 = vmatprep.subr.mxu0 0.0
        %478 = vmatpush1.msra.mxu0 0.0
        %479 = vmatprep.subr.mxu0 0.0
        %480 = vmatpush1.msra.mxu0 0.0
        %481 = vmatprep.subr.mxu0 0.0
        %482 = vmatpush1.msra.mxu0 0.0
        %483 = vmatprep.subr.mxu0 0.0
        %484 = vmatpush1.msra.mxu0 0.0
        %485 = vmatprep.subr.mxu0 0.0
        %486 = vmatpush1.msra.mxu0 0.0
        %487 = vmatprep.subr.mxu0 0.0
        %488 = vmatpush1.msra.mxu0 0.0
        %489 = vmatprep.mubr.f32.mxu0 0.0
        %490 = vmatmul.mubr.f32.gmra.mrb[0].mxu0 %v342
        %v491 = vpop.f32.mrb[0].mxu0
        %v492 = vadd.f32 %v423, %v491
        %v493 = vpop.f32.mrb[0].mxu0
        %494 = vdwg.mxu0
        %v495 = vld [vmem:[%s3] sm:$0xff]
        %v496 = vld [vmem:[%s3 + $0x8] sm:$0xff]
        %v497 = vld [vmem:[%s3 + $0x10] sm:$0xff]
        %v498 = vld [vmem:[%s3 + $0x18] sm:$0xff]
        %v499 = vld [vmem:[%s6] sm:$0x1]
        %v501 = vlaneseq
        %v502 = vshrl.u32 %v501, 7
        %v503 = vsub.s32 0, %v502
        %v504 = vrot.slane %v499, %v503
        %506 = vmatprep.subr.mxu0 0.0
        %507 = vmatpush1.msra.mxu0 %v495
        %508 = vmatprep.subr.mxu0 0.0
        %509 = vmatpush1.msra.mxu0 %v496
        %510 = vmatprep.subr.mxu0 0.0
        %511 = vmatpush1.msra.mxu0 %v497
        %512 = vmatprep.subr.mxu0 0.0
        %513 = vmatpush1.msra.mxu0 %v498
        %514 = vmatprep.subr.mxu0 0.0
        %515 = vmatpush1.msra.mxu0 0.0
        %516 = vmatprep.subr.mxu0 0.0
        %517 = vmatpush1.msra.mxu0 0.0
        %518 = vmatprep.subr.mxu0 0.0
        %519 = vmatpush1.msra.mxu0 0.0
        %520 = vmatprep.subr.mxu0 0.0
        %521 = vmatpush1.msra.mxu0 0.0
        %522 = vmatprep.subr.mxu0 0.0
        %523 = vmatpush1.msra.mxu0 0.0
        %524 = vmatprep.subr.mxu0 0.0
        %525 = vmatpush1.msra.mxu0 0.0
        %526 = vmatprep.subr.mxu0 0.0
        %527 = vmatpush1.msra.mxu0 0.0
        %528 = vmatprep.subr.mxu0 0.0
        %529 = vmatpush1.msra.mxu0 0.0
        %530 = vmatprep.subr.mxu0 0.0
        %531 = vmatpush1.msra.mxu0 0.0
        %532 = vmatprep.subr.mxu0 0.0
        %533 = vmatpush1.msra.mxu0 0.0
        %534 = vmatprep.subr.mxu0 0.0
        %535 = vmatpush1.msra.mxu0 0.0
        %536 = vmatprep.subr.mxu0 0.0
        %537 = vmatpush1.msra.mxu0 0.0
        %538 = vmatprep.subr.mxu0 0.0
        %539 = vmatpush1.msra.mxu0 0.0
        %540 = vmatprep.subr.mxu0 0.0
        %541 = vmatpush1.msra.mxu0 0.0
        %542 = vmatprep.subr.mxu0 0.0
        %543 = vmatpush1.msra.mxu0 0.0
        %544 = vmatprep.subr.mxu0 0.0
        %545 = vmatpush1.msra.mxu0 0.0
        %546 = vmatprep.subr.mxu0 0.0
        %547 = vmatpush1.msra.mxu0 0.0
        %548 = vmatprep.subr.mxu0 0.0
        %549 = vmatpush1.msra.mxu0 0.0
        %550 = vmatprep.subr.mxu0 0.0
        %551 = vmatpush1.msra.mxu0 0.0
        %552 = vmatprep.subr.mxu0 0.0
        %553 = vmatpush1.msra.mxu0 0.0
        %554 = vmatprep.subr.mxu0 0.0
        %555 = vmatpush1.msra.mxu0 0.0
        %556 = vmatprep.subr.mxu0 0.0
        %557 = vmatpush1.msra.mxu0 0.0
        %558 = vmatprep.subr.mxu0 0.0
        %559 = vmatpush1.msra.mxu0 0.0
        %560 = vmatprep.subr.mxu0 0.0
        %561 = vmatpush1.msra.mxu0 0.0
        %562 = vmatprep.subr.mxu0 0.0
        %563 = vmatpush1.msra.mxu0 0.0
        %564 = vmatprep.subr.mxu0 0.0
        %565 = vmatpush1.msra.mxu0 0.0
        %566 = vmatprep.subr.mxu0 0.0
        %567 = vmatpush1.msra.mxu0 0.0
        %568 = vmatprep.subr.mxu0 0.0
        %569 = vmatpush1.msra.mxu0 0.0
        %570 = vmatprep.mubr.f32.mxu0 0.0
        %571 = vmatmul.mubr.f32.gmra.mrb[0].mxu0 %v342
        %v572 = vpop.f32.mrb[0].mxu0
        %v573 = vadd.f32 %v504, %v572
        %v574 = vpop.f32.mrb[0].mxu0
        %575 = vdwg.mxu0
        %vm576 = vcmask 31744
        %v578 = vsel %vm576, %v411, 0
        %v581 = vsel %vm576, %v492, 0
        %583 = vmatprep.subr.mxu0 0.0
        %584 = vmatpush1.xpose.msra.mxu0 %v581
        %585 = vmatprep.subr.mxu0 0.0
        %586 = vmatpush1.xpose.msra.mxu0 0.0
        %587 = vmatprep.subr.mxu0 0.0
        %588 = vmatpush1.xpose.msra.mxu0 0.0
        %589 = vmatprep.subr.mxu0 0.0
        %590 = vmatpush1.xpose.msra.mxu0 0.0
        %591 = vmatprep.subr.mxu0 0.0
        %592 = vmatpush1.xpose.msra.mxu0 0.0
        %593 = vmatprep.subr.mxu0 0.0
        %594 = vmatpush1.xpose.msra.mxu0 0.0
        %595 = vmatprep.subr.mxu0 0.0
        %596 = vmatpush1.xpose.msra.mxu0 0.0
        %597 = vmatprep.subr.mxu0 0.0
        %598 = vmatpush1.xpose.msra.mxu0 0.0
        %599 = vmatprep.subr.mxu0 0.0
        %600 = vmatpush1.xpose.msra.mxu0 0.0
        %601 = vmatprep.subr.mxu0 0.0
        %602 = vmatpush1.xpose.msra.mxu0 0.0
        %603 = vmatprep.subr.mxu0 0.0
        %604 = vmatpush1.xpose.msra.mxu0 0.0
        %605 = vmatprep.subr.mxu0 0.0
        %606 = vmatpush1.xpose.msra.mxu0 0.0
        %607 = vmatprep.subr.mxu0 0.0
        %608 = vmatpush1.xpose.msra.mxu0 0.0
        %609 = vmatprep.subr.mxu0 0.0
        %610 = vmatpush1.xpose.msra.mxu0 0.0
        %611 = vmatprep.subr.mxu0 0.0
        %612 = vmatpush1.xpose.msra.mxu0 0.0
        %613 = vmatprep.subr.mxu0 0.0
        %614 = vmatpush1.xpose.msra.mxu0 0.0
        %615 = vmatprep.subr.mxu0 0.0
        %616 = vmatpush1.xpose.msra.mxu0 0.0
        %617 = vmatprep.subr.mxu0 0.0
        %618 = vmatpush1.xpose.msra.mxu0 0.0
        %619 = vmatprep.subr.mxu0 0.0
        %620 = vmatpush1.xpose.msra.mxu0 0.0
        %621 = vmatprep.subr.mxu0 0.0
        %622 = vmatpush1.xpose.msra.mxu0 0.0
        %623 = vmatprep.subr.mxu0 0.0
        %624 = vmatpush1.xpose.msra.mxu0 0.0
        %625 = vmatprep.subr.mxu0 0.0
        %626 = vmatpush1.xpose.msra.mxu0 0.0
        %627 = vmatprep.subr.mxu0 0.0
        %628 = vmatpush1.xpose.msra.mxu0 0.0
        %629 = vmatprep.subr.mxu0 0.0
        %630 = vmatpush1.xpose.msra.mxu0 0.0
        %631 = vmatprep.subr.mxu0 0.0
        %632 = vmatpush1.xpose.msra.mxu0 0.0
        %633 = vmatprep.subr.mxu0 0.0
        %634 = vmatpush1.xpose.msra.mxu0 0.0
        %635 = vmatprep.subr.mxu0 0.0
        %636 = vmatpush1.xpose.msra.mxu0 0.0
        %637 = vmatprep.subr.mxu0 0.0
        %638 = vmatpush1.xpose.msra.mxu0 0.0
        %639 = vmatprep.subr.mxu0 0.0
        %640 = vmatpush1.xpose.msra.mxu0 0.0
        %641 = vmatprep.subr.mxu0 0.0
        %642 = vmatpush1.xpose.msra.mxu0 0.0
        %643 = vmatprep.subr.mxu0 0.0
        %644 = vmatpush1.xpose.msra.mxu0 0.0
        %645 = vmatprep.subr.mxu0 0.0
        %646 = vmatpush1.xpose.msra.mxu0 0.0
        %647 = vmatprep.mubr.f32.mxu0 0.0
        %648 = vmatmul.mubr.f32.gmra.mrb[0].mxu0 %v578
        %v649 = vpop.f32.mrb[0].mxu0
        %v650 = vadd.f32 0.0, %v649
        %v651 = vpop.f32.mrb[0].mxu0
        %652 = vdwg.mxu0
        %v653 = vmul.f32 %v650, 0.5
        %vm654 = vcmask 64512
        %v655 = vsel %vm654, %v653, -inf
        %656 = vmax.xlane.f32.xlu0 %v655
        %v657 = vpop.xlane.xlu0 %656
        %v658 = vsub.f32 %v653, %v657
        %v659 = vmul.f32 %v658, 1.442695
        %v660 = vpow.pop %v659
        %v661 = vsel %vm654, %v660, 0.0
        %662 = vadd.xlane.f32.xlu0 %v661
        %v663 = vpop.xlane.xlu0 %662
        %v664 = vrcp.pop %v663
        %v665 = vmul.f32 %v660, %v664
        %v667 = vsel %vm654, %v665, 0
        %669 = vmatprep.subr.mxu0 0.0
        %670 = vmatpush1.msra.mxu0 %v573
        %671 = vmatprep.subr.mxu0 0.0
        %672 = vmatpush1.msra.mxu0 0.0
        %673 = vmatprep.subr.mxu0 0.0
        %674 = vmatpush1.msra.mxu0 0.0
        %675 = vmatprep.subr.mxu0 0.0
        %676 = vmatpush1.msra.mxu0 0.0
        %677 = vmatprep.subr.mxu0 0.0
        %678 = vmatpush1.msra.mxu0 0.0
        %679 = vmatprep.subr.mxu0 0.0
        %680 = vmatpush1.msra.mxu0 0.0
        %681 = vmatprep.subr.mxu0 0.0
        %682 = vmatpush1.msra.mxu0 0.0
        %683 = vmatprep.subr.mxu0 0.0
        %684 = vmatpush1.msra.mxu0 0.0
        %685 = vmatprep.subr.mxu0 0.0
        %686 = vmatpush1.msra.mxu0 0.0
        %687 = vmatprep.subr.mxu0 0.0
        %688 = vmatpush1.msra.mxu0 0.0
        %689 = vmatprep.subr.mxu0 0.0
        %690 = vmatpush1.msra.mxu0 0.0
        %691 = vmatprep.subr.mxu0 0.0
        %692 = vmatpush1.msra.mxu0 0.0
        %693 = vmatprep.subr.mxu0 0.0
        %694 = vmatpush1.msra.mxu0 0.0
        %695 = vmatprep.subr.mxu0 0.0
        %696 = vmatpush1.msra.mxu0 0.0
        %697 = vmatprep.subr.mxu0 0.0
        %698 = vmatpush1.msra.mxu0 0.0
        %699 = vmatprep.subr.mxu0 0.0
        %700 = vmatpush1.msra.mxu0 0.0
        %701 = vmatprep.subr.mxu0 0.0
        %702 = vmatpush1.msra.mxu0 0.0
        %703 = vmatprep.subr.mxu0 0.0
        %704 = vmatpush1.msra.mxu0 0.0
        %705 = vmatprep.subr.mxu0 0.0
        %706 = vmatpush1.msra.mxu0 0.0
        %707 = vmatprep.subr.mxu0 0.0
        %708 = vmatpush1.msra.mxu0 0.0
        %709 = vmatprep.subr.mxu0 0.0
        %710 = vmatpush1.msra.mxu0 0.0
        %711 = vmatprep.subr.mxu0 0.0
        %712 = vmatpush1.msra.mxu0 0.0
        %713 = vmatprep.subr.mxu0 0.0
        %714 = vmatpush1.msra.mxu0 0.0
        %715 = vmatprep.subr.mxu0 0.0
        %716 = vmatpush1.msra.mxu0 0.0
        %717 = vmatprep.subr.mxu0 0.0
        %718 = vmatpush1.msra.mxu0 0.0
        %719 = vmatprep.subr.mxu0 0.0
        %720 = vmatpush1.msra.mxu0 0.0
        %721 = vmatprep.subr.mxu0 0.0
        %722 = vmatpush1.msra.mxu0 0.0
        %723 = vmatprep.subr.mxu0 0.0
        %724 = vmatpush1.msra.mxu0 0.0
        %725 = vmatprep.subr.mxu0 0.0
        %726 = vmatpush1.msra.mxu0 0.0
        %727 = vmatprep.subr.mxu0 0.0
        %728 = vmatpush1.msra.mxu0 0.0
        %729 = vmatprep.subr.mxu0 0.0
        %730 = vmatpush1.msra.mxu0 0.0
        %731 = vmatprep.subr.mxu0 0.0
        %732 = vmatpush1.msra.mxu0 0.0
        %733 = vmatprep.mubr.f32.mxu0 0.0
        %734 = vmatmul.mubr.f32.gmra.mrb[0].mxu0 %v667
        %v735 = vpop.f32.mrb[0].mxu0
        %v736 = vadd.f32 0.0, %v735
        %v737 = vpop.f32.mrb[0].mxu0
        %738 = vdwg.mxu0
        %v739 = vld [vmem:[%s7] sm:$0xf]
        %s740 = scalar_lea.vmem %s1, 32
        %v741 = vld [vmem:[%s740] sm:$0xff]
        %v742 = vld [vmem:[%s740 + $0x8] sm:$0xff]
        %v743 = vld [vmem:[%s740 + $0x10] sm:$0xff]
        %v744 = vld [vmem:[%s740 + $0x18] sm:$0xff]
        %s745 = scalar_lea.vmem %s4, 1
        %v746 = vld [vmem:[%s745] sm:$0x1]
        %v748 = vlaneseq
        %v749 = vshrl.u32 %v748, 7
        %v750 = vsub.s32 0, %v749
        %v751 = vrot.slane %v746, %v750
        %753 = vmatprep.subr.mxu0 0.0
        %754 = vmatpush1.msra.mxu0 %v741
        %755 = vmatprep.subr.mxu0 0.0
        %756 = vmatpush1.msra.mxu0 %v742
        %757 = vmatprep.subr.mxu0 0.0
        %758 = vmatpush1.msra.mxu0 %v743
        %759 = vmatprep.subr.mxu0 0.0
        %760 = vmatpush1.msra.mxu0 %v744
        %761 = vmatprep.subr.mxu0 0.0
        %762 = vmatpush1.msra.mxu0 0.0
        %763 = vmatprep.subr.mxu0 0.0
        %764 = vmatpush1.msra.mxu0 0.0
        %765 = vmatprep.subr.mxu0 0.0
        %766 = vmatpush1.msra.mxu0 0.0
        %767 = vmatprep.subr.mxu0 0.0
        %768 = vmatpush1.msra.mxu0 0.0
        %769 = vmatprep.subr.mxu0 0.0
        %770 = vmatpush1.msra.mxu0 0.0
        %771 = vmatprep.subr.mxu0 0.0
        %772 = vmatpush1.msra.mxu0 0.0
        %773 = vmatprep.subr.mxu0 0.0
        %774 = vmatpush1.msra.mxu0 0.0
        %775 = vmatprep.subr.mxu0 0.0
        %776 = vmatpush1.msra.mxu0 0.0
        %777 = vmatprep.subr.mxu0 0.0
        %778 = vmatpush1.msra.mxu0 0.0
        %779 = vmatprep.subr.mxu0 0.0
        %780 = vmatpush1.msra.mxu0 0.0
        %781 = vmatprep.subr.mxu0 0.0
        %782 = vmatpush1.msra.mxu0 0.0
        %783 = vmatprep.subr.mxu0 0.0
        %784 = vmatpush1.msra.mxu0 0.0
        %785 = vmatprep.subr.mxu0 0.0
        %786 = vmatpush1.msra.mxu0 0.0
        %787 = vmatprep.subr.mxu0 0.0
        %788 = vmatpush1.msra.mxu0 0.0
        %789 = vmatprep.subr.mxu0 0.0
        %790 = vmatpush1.msra.mxu0 0.0
        %791 = vmatprep.subr.mxu0 0.0
        %792 = vmatpush1.msra.mxu0 0.0
        %793 = vmatprep.subr.mxu0 0.0
        %794 = vmatpush1.msra.mxu0 0.0
        %795 = vmatprep.subr.mxu0 0.0
        %796 = vmatpush1.msra.mxu0 0.0
        %797 = vmatprep.subr.mxu0 0.0
        %798 = vmatpush1.msra.mxu0 0.0
        %799 = vmatprep.subr.mxu0 0.0
        %800 = vmatpush1.msra.mxu0 0.0
        %801 = vmatprep.subr.mxu0 0.0
        %802 = vmatpush1.msra.mxu0 0.0
        %803 = vmatprep.subr.mxu0 0.0
        %804 = vmatpush1.msra.mxu0 0.0
        %805 = vmatprep.subr.mxu0 0.0
        %806 = vmatpush1.msra.mxu0 0.0
        %807 = vmatprep.subr.mxu0 0.0
        %808 = vmatpush1.msra.mxu0 0.0
        %809 = vmatprep.subr.mxu0 0.0
        %810 = vmatpush1.msra.mxu0 0.0
        %811 = vmatprep.subr.mxu0 0.0
        %812 = vmatpush1.msra.mxu0 0.0
        %813 = vmatprep.subr.mxu0 0.0
        %814 = vmatpush1.msra.mxu0 0.0
        %815 = vmatprep.subr.mxu0 0.0
        %816 = vmatpush1.msra.mxu0 0.0
        %817 = vmatprep.mubr.f32.mxu0 0.0
        %818 = vmatmul.mubr.f32.gmra.mrb[0].mxu0 %v342
        %v819 = vpop.f32.mrb[0].mxu0
        %v820 = vadd.f32 %v751, %v819
        %v821 = vpop.f32.mrb[0].mxu0
        %822 = vdwg.mxu0
        %s823 = scalar_lea.vmem %s2, 32
        %v824 = vld [vmem:[%s823] sm:$0xff]
        %v825 = vld [vmem:[%s823 + $0x8] sm:$0xff]
        %v826 = vld [vmem:[%s823 + $0x10] sm:$0xff]
        %v827 = vld [vmem:[%s823 + $0x18] sm:$0xff]
        %s828 = scalar_lea.vmem %s5, 1
        %v829 = vld [vmem:[%s828] sm:$0x1]
        %v831 = vlaneseq
        %v832 = vshrl.u32 %v831, 7
        %v833 = vsub.s32 0, %v832
        %v834 = vrot.slane %v829, %v833
        %836 = vmatprep.subr.mxu0 0.0
        %837 = vmatpush1.msra.mxu0 %v824
        %838 = vmatprep.subr.mxu0 0.0
        %839 = vmatpush1.msra.mxu0 %v825
        %840 = vmatprep.subr.mxu0 0.0
        %841 = vmatpush1.msra.mxu0 %v826
        %842 = vmatprep.subr.mxu0 0.0
        %843 = vmatpush1.msra.mxu0 %v827
        %844 = vmatprep.subr.mxu0 0.0
        %845 = vmatpush1.msra.mxu0 0.0
        %846 = vmatprep.subr.mxu0 0.0
        %847 = vmatpush1.msra.mxu0 0.0
        %848 = vmatprep.subr.mxu0 0.0
        %849 = vmatpush1.msra.mxu0 0.0
        %850 = vmatprep.subr.mxu0 0.0
        %851 = vmatpush1.msra.mxu0 0.0
        %852 = vmatprep.subr.mxu0 0.0
        %853 = vmatpush1.msra.mxu0 0.0
        %854 = vmatprep.subr.mxu0 0.0
        %855 = vmatpush1.msra.mxu0 0.0
        %856 = vmatprep.subr.mxu0 0.0
        %857 = vmatpush1.msra.mxu0 0.0
        %858 = vmatprep.subr.mxu0 0.0
        %859 = vmatpush1.msra.mxu0 0.0
        %860 = vmatprep.subr.mxu0 0.0
        %861 = vmatpush1.msra.mxu0 0.0
        %862 = vmatprep.subr.mxu0 0.0
        %863 = vmatpush1.msra.mxu0 0.0
        %864 = vmatprep.subr.mxu0 0.0
        %865 = vmatpush1.msra.mxu0 0.0
        %866 = vmatprep.subr.mxu0 0.0
        %867 = vmatpush1.msra.mxu0 0.0
        %868 = vmatprep.subr.mxu0 0.0
        %869 = vmatpush1.msra.mxu0 0.0
        %870 = vmatprep.subr.mxu0 0.0
        %871 = vmatpush1.msra.mxu0 0.0
        %872 = vmatprep.subr.mxu0 0.0
        %873 = vmatpush1.msra.mxu0 0.0
        %874 = vmatprep.subr.mxu0 0.0
        %875 = vmatpush1.msra.mxu0 0.0
        %876 = vmatprep.subr.mxu0 0.0
        %877 = vmatpush1.msra.mxu0 0.0
        %878 = vmatprep.subr.mxu0 0.0
        %879 = vmatpush1.msra.mxu0 0.0
        %880 = vmatprep.subr.mxu0 0.0
        %881 = vmatpush1.msra.mxu0 0.0
        %882 = vmatprep.subr.mxu0 0.0
        %883 = vmatpush1.msra.mxu0 0.0
        %884 = vmatprep.subr.mxu0 0.0
        %885 = vmatpush1.msra.mxu0 0.0
        %886 = vmatprep.subr.mxu0 0.0
        %887 = vmatpush1.msra.mxu0 0.0
        %888 = vmatprep.subr.mxu0 0.0
        %889 = vmatpush1.msra.mxu0 0.0
        %890 = vmatprep.subr.mxu0 0.0
        %891 = vmatpush1.msra.mxu0 0.0
        %892 = vmatprep.subr.mxu0 0.0
        %893 = vmatpush1.msra.mxu0 0.0
        %894 = vmatprep.subr.mxu0 0.0
        %895 = vmatpush1.msra.mxu0 0.0
        %896 = vmatprep.subr.mxu0 0.0
        %897 = vmatpush1.msra.mxu0 0.0
        %898 = vmatprep.subr.mxu0 0.0
        %899 = vmatpush1.msra.mxu0 0.0
        %900 = vmatprep.mubr.f32.mxu0 0.0
        %901 = vmatmul.mubr.f32.gmra.mrb[0].mxu0 %v342
        %v902 = vpop.f32.mrb[0].mxu0
        %v903 = vadd.f32 %v834, %v902
        %v904 = vpop.f32.mrb[0].mxu0
        %905 = vdwg.mxu0
        %s906 = scalar_lea.vmem %s3, 32
        %v907 = vld [vmem:[%s906] sm:$0xff]
        %v908 = vld [vmem:[%s906 + $0x8] sm:$0xff]
        %v909 = vld [vmem:[%s906 + $0x10] sm:$0xff]
        %v910 = vld [vmem:[%s906 + $0x18] sm:$0xff]
        %s911 = scalar_lea.vmem %s6, 1
        %v912 = vld [vmem:[%s911] sm:$0x1]
        %v914 = vlaneseq
        %v915 = vshrl.u32 %v914, 7
        %v916 = vsub.s32 0, %v915
        %v917 = vrot.slane %v912, %v916
        %919 = vmatprep.subr.mxu0 0.0
        %920 = vmatpush1.msra.mxu0 %v907
        %921 = vmatprep.subr.mxu0 0.0
        %922 = vmatpush1.msra.mxu0 %v908
        %923 = vmatprep.subr.mxu0 0.0
        %924 = vmatpush1.msra.mxu0 %v909
        %925 = vmatprep.subr.mxu0 0.0
        %926 = vmatpush1.msra.mxu0 %v910
        %927 = vmatprep.subr.mxu0 0.0
        %928 = vmatpush1.msra.mxu0 0.0
        %929 = vmatprep.subr.mxu0 0.0
        %930 = vmatpush1.msra.mxu0 0.0
        %931 = vmatprep.subr.mxu0 0.0
        %932 = vmatpush1.msra.mxu0 0.0
        %933 = vmatprep.subr.mxu0 0.0
        %934 = vmatpush1.msra.mxu0 0.0
        %935 = vmatprep.subr.mxu0 0.0
        %936 = vmatpush1.msra.mxu0 0.0
        %937 = vmatprep.subr.mxu0 0.0
        %938 = vmatpush1.msra.mxu0 0.0
        %939 = vmatprep.subr.mxu0 0.0
        %940 = vmatpush1.msra.mxu0 0.0
        %941 = vmatprep.subr.mxu0 0.0
        %942 = vmatpush1.msra.mxu0 0.0
        %943 = vmatprep.subr.mxu0 0.0
        %944 = vmatpush1.msra.mxu0 0.0
        %945 = vmatprep.subr.mxu0 0.0
        %946 = vmatpush1.msra.mxu0 0.0
        %947 = vmatprep.subr.mxu0 0.0
        %948 = vmatpush1.msra.mxu0 0.0
        %949 = vmatprep.subr.mxu0 0.0
        %950 = vmatpush1.msra.mxu0 0.0
        %951 = vmatprep.subr.mxu0 0.0
        %952 = vmatpush1.msra.mxu0 0.0
        %953 = vmatprep.subr.mxu0 0.0
        %954 = vmatpush1.msra.mxu0 0.0
        %955 = vmatprep.subr.mxu0 0.0
        %956 = vmatpush1.msra.mxu0 0.0
        %957 = vmatprep.subr.mxu0 0.0
        %958 = vmatpush1.msra.mxu0 0.0
        %959 = vmatprep.subr.mxu0 0.0
        %960 = vmatpush1.msra.mxu0 0.0
        %961 = vmatprep.subr.mxu0 0.0
        %962 = vmatpush1.msra.mxu0 0.0
        %963 = vmatprep.subr.mxu0 0.0
        %964 = vmatpush1.msra.mxu0 0.0
        %965 = vmatprep.subr.mxu0 0.0
        %966 = vmatpush1.msra.mxu0 0.0
        %967 = vmatprep.subr.mxu0 0.0
        %968 = vmatpush1.msra.mxu0 0.0
        %969 = vmatprep.subr.mxu0 0.0
        %970 = vmatpush1.msra.mxu0 0.0
        %971 = vmatprep.subr.mxu0 0.0
        %972 = vmatpush1.msra.mxu0 0.0
        %973 = vmatprep.subr.mxu0 0.0
        %974 = vmatpush1.msra.mxu0 0.0
        %975 = vmatprep.subr.mxu0 0.0
        %976 = vmatpush1.msra.mxu0 0.0
        %977 = vmatprep.subr.mxu0 0.0
        %978 = vmatpush1.msra.mxu0 0.0
        %979 = vmatprep.subr.mxu0 0.0
        %980 = vmatpush1.msra.mxu0 0.0
        %981 = vmatprep.subr.mxu0 0.0
        %982 = vmatpush1.msra.mxu0 0.0
        %983 = vmatprep.mubr.f32.mxu0 0.0
        %984 = vmatmul.mubr.f32.gmra.mrb[0].mxu0 %v342
        %v985 = vpop.f32.mrb[0].mxu0
        %v986 = vadd.f32 %v917, %v985
        %v987 = vpop.f32.mrb[0].mxu0
        %988 = vdwg.mxu0
        %v990 = vsel %vm576, %v820, 0
        %v993 = vsel %vm576, %v903, 0
        %995 = vmatprep.subr.mxu0 0.0
        %996 = vmatpush1.xpose.msra.mxu0 %v993
        %997 = vmatprep.subr.mxu0 0.0
        %998 = vmatpush1.xpose.msra.mxu0 0.0
        %999 = vmatprep.subr.mxu0 0.0
        %1000 = vmatpush1.xpose.msra.mxu0 0.0
        %1001 = vmatprep.subr.mxu0 0.0
        %1002 = vmatpush1.xpose.msra.mxu0 0.0
        %1003 = vmatprep.subr.mxu0 0.0
        %1004 = vmatpush1.xpose.msra.mxu0 0.0
        %1005 = vmatprep.subr.mxu0 0.0
        %1006 = vmatpush1.xpose.msra.mxu0 0.0
        %1007 = vmatprep.subr.mxu0 0.0
        %1008 = vmatpush1.xpose.msra.mxu0 0.0
        %1009 = vmatprep.subr.mxu0 0.0
        %1010 = vmatpush1.xpose.msra.mxu0 0.0
        %1011 = vmatprep.subr.mxu0 0.0
        %1012 = vmatpush1.xpose.msra.mxu0 0.0
        %1013 = vmatprep.subr.mxu0 0.0
        %1014 = vmatpush1.xpose.msra.mxu0 0.0
        %1015 = vmatprep.subr.mxu0 0.0
        %1016 = vmatpush1.xpose.msra.mxu0 0.0
        %1017 = vmatprep.subr.mxu0 0.0
        %1018 = vmatpush1.xpose.msra.mxu0 0.0
        %1019 = vmatprep.subr.mxu0 0.0
        %1020 = vmatpush1.xpose.msra.mxu0 0.0
        %1021 = vmatprep.subr.mxu0 0.0
        %1022 = vmatpush1.xpose.msra.mxu0 0.0
        %1023 = vmatprep.subr.mxu0 0.0
        %1024 = vmatpush1.xpose.msra.mxu0 0.0
        %1025 = vmatprep.subr.mxu0 0.0
        %1026 = vmatpush1.xpose.msra.mxu0 0.0
        %1027 = vmatprep.subr.mxu0 0.0
        %1028 = vmatpush1.xpose.msra.mxu0 0.0
        %1029 = vmatprep.subr.mxu0 0.0
        %1030 = vmatpush1.xpose.msra.mxu0 0.0
        %1031 = vmatprep.subr.mxu0 0.0
        %1032 = vmatpush1.xpose.msra.mxu0 0.0
        %1033 = vmatprep.subr.mxu0 0.0
        %1034 = vmatpush1.xpose.msra.mxu0 0.0
        %1035 = vmatprep.subr.mxu0 0.0
        %1036 = vmatpush1.xpose.msra.mxu0 0.0
        %1037 = vmatprep.subr.mxu0 0.0
        %1038 = vmatpush1.xpose.msra.mxu0 0.0
        %1039 = vmatprep.subr.mxu0 0.0
        %1040 = vmatpush1.xpose.msra.mxu0 0.0
        %1041 = vmatprep.subr.mxu0 0.0
        %1042 = vmatpush1.xpose.msra.mxu0 0.0
        %1043 = vmatprep.subr.mxu0 0.0
        %1044 = vmatpush1.xpose.msra.mxu0 0.0
        %1045 = vmatprep.subr.mxu0 0.0
        %1046 = vmatpush1.xpose.msra.mxu0 0.0
        %1047 = vmatprep.subr.mxu0 0.0
        %1048 = vmatpush1.xpose.msra.mxu0 0.0
        %1049 = vmatprep.subr.mxu0 0.0
        %1050 = vmatpush1.xpose.msra.mxu0 0.0
        %1051 = vmatprep.subr.mxu0 0.0
        %1052 = vmatpush1.xpose.msra.mxu0 0.0
        %1053 = vmatprep.subr.mxu0 0.0
        %1054 = vmatpush1.xpose.msra.mxu0 0.0
        %1055 = vmatprep.subr.mxu0 0.0
        %1056 = vmatpush1.xpose.msra.mxu0 0.0
        %1057 = vmatprep.subr.mxu0 0.0
        %1058 = vmatpush1.xpose.msra.mxu0 0.0
        %1059 = vmatprep.mubr.f32.mxu0 0.0
        %1060 = vmatmul.mubr.f32.gmra.mrb[0].mxu0 %v990
        %v1061 = vpop.f32.mrb[0].mxu0
        %v1062 = vadd.f32 0.0, %v1061
        %v1063 = vpop.f32.mrb[0].mxu0
        %1064 = vdwg.mxu0
        %v1065 = vmul.f32 %v1062, 0.5
        %v1066 = vsel %vm654, %v1065, -inf
        %1067 = vmax.xlane.f32.xlu0 %v1066
        %v1068 = vpop.xlane.xlu0 %1067
        %v1069 = vsub.f32 %v1065, %v1068
        %v1070 = vmul.f32 %v1069, 1.442695
        %v1071 = vpow.pop %v1070
        %v1072 = vsel %vm654, %v1071, 0.0
        %1073 = vadd.xlane.f32.xlu0 %v1072
        %v1074 = vpop.xlane.xlu0 %1073
        %v1075 = vrcp.pop %v1074
        %v1076 = vmul.f32 %v1071, %v1075
        %v1078 = vsel %vm654, %v1076, 0
        %1080 = vmatprep.subr.mxu0 0.0
        %1081 = vmatpush1.msra.mxu0 %v986
        %1082 = vmatprep.subr.mxu0 0.0
        %1083 = vmatpush1.msra.mxu0 0.0
        %1084 = vmatprep.subr.mxu0 0.0
        %1085 = vmatpush1.msra.mxu0 0.0
        %1086 = vmatprep.subr.mxu0 0.0
        %1087 = vmatpush1.msra.mxu0 0.0
        %1088 = vmatprep.subr.mxu0 0.0
        %1089 = vmatpush1.msra.mxu0 0.0
        %1090 = vmatprep.subr.mxu0 0.0
        %1091 = vmatpush1.msra.mxu0 0.0
        %1092 = vmatprep.subr.mxu0 0.0
        %1093 = vmatpush1.msra.mxu0 0.0
        %1094 = vmatprep.subr.mxu0 0.0
        %1095 = vmatpush1.msra.mxu0 0.0
        %1096 = vmatprep.subr.mxu0 0.0
        %1097 = vmatpush1.msra.mxu0 0.0
        %1098 = vmatprep.subr.mxu0 0.0
        %1099 = vmatpush1.msra.mxu0 0.0
        %1100 = vmatprep.subr.mxu0 0.0
        %1101 = vmatpush1.msra.mxu0 0.0
        %1102 = vmatprep.subr.mxu0 0.0
        %1103 = vmatpush1.msra.mxu0 0.0
        %1104 = vmatprep.subr.mxu0 0.0
        %1105 = vmatpush1.msra.mxu0 0.0
        %1106 = vmatprep.subr.mxu0 0.0
        %1107 = vmatpush1.msra.mxu0 0.0
        %1108 = vmatprep.subr.mxu0 0.0
        %1109 = vmatpush1.msra.mxu0 0.0
        %1110 = vmatprep.subr.mxu0 0.0
        %1111 = vmatpush1.msra.mxu0 0.0
        %1112 = vmatprep.subr.mxu0 0.0
        %1113 = vmatpush1.msra.mxu0 0.0
        %1114 = vmatprep.subr.mxu0 0.0
        %1115 = vmatpush1.msra.mxu0 0.0
        %1116 = vmatprep.subr.mxu0 0.0
        %1117 = vmatpush1.msra.mxu0 0.0
        %1118 = vmatprep.subr.mxu0 0.0
        %1119 = vmatpush1.msra.mxu0 0.0
        %1120 = vmatprep.subr.mxu0 0.0
        %1121 = vmatpush1.msra.mxu0 0.0
        %1122 = vmatprep.subr.mxu0 0.0
        %1123 = vmatpush1.msra.mxu0 0.0
        %1124 = vmatprep.subr.mxu0 0.0
        %1125 = vmatpush1.msra.mxu0 0.0
        %1126 = vmatprep.subr.mxu0 0.0
        %1127 = vmatpush1.msra.mxu0 0.0
        %1128 = vmatprep.subr.mxu0 0.0
        %1129 = vmatpush1.msra.mxu0 0.0
        %1130 = vmatprep.subr.mxu0 0.0
        %1131 = vmatpush1.msra.mxu0 0.0
        %1132 = vmatprep.subr.mxu0 0.0
        %1133 = vmatpush1.msra.mxu0 0.0
        %1134 = vmatprep.subr.mxu0 0.0
        %1135 = vmatpush1.msra.mxu0 0.0
        %1136 = vmatprep.subr.mxu0 0.0
        %1137 = vmatpush1.msra.mxu0 0.0
        %1138 = vmatprep.subr.mxu0 0.0
        %1139 = vmatpush1.msra.mxu0 0.0
        %1140 = vmatprep.subr.mxu0 0.0
        %1141 = vmatpush1.msra.mxu0 0.0
        %1142 = vmatprep.subr.mxu0 0.0
        %1143 = vmatpush1.msra.mxu0 0.0
        %1144 = vmatprep.mubr.f32.mxu0 0.0
        %1145 = vmatmul.mubr.f32.gmra.mrb[0].mxu0 %v1078
        %v1146 = vpop.f32.mrb[0].mxu0
        %v1147 = vadd.f32 0.0, %v1146
        %v1148 = vpop.f32.mrb[0].mxu0
        %1149 = vdwg.mxu0
        %s1150 = scalar_lea.vmem %s7, 4
        %v1151 = vld [vmem:[%s1150] sm:$0xf]
        %v1153 = vsel %vm576, %v1147, 0
        %vm1155 = vcmask 1043456
        %v1157 = vsel %vm1155, %v1151, 0
        %1159 = vmatprep.subr.mxu0 0.0
        %1160 = vmatpush1.msra.mxu0 %v1157
        %1161 = vmatprep.subr.mxu0 0.0
        %1162 = vmatpush1.msra.mxu0 0.0
        %1163 = vmatprep.subr.mxu0 0.0
        %1164 = vmatpush1.msra.mxu0 0.0
        %1165 = vmatprep.subr.mxu0 0.0
        %1166 = vmatpush1.msra.mxu0 0.0
        %1167 = vmatprep.subr.mxu0 0.0
        %1168 = vmatpush1.msra.mxu0 0.0
        %1169 = vmatprep.subr.mxu0 0.0
        %1170 = vmatpush1.msra.mxu0 0.0
        %1171 = vmatprep.subr.mxu0 0.0
        %1172 = vmatpush1.msra.mxu0 0.0
        %1173 = vmatprep.subr.mxu0 0.0
        %1174 = vmatpush1.msra.mxu0 0.0
        %1175 = vmatprep.subr.mxu0 0.0
        %1176 = vmatpush1.msra.mxu0 0.0
        %1177 = vmatprep.subr.mxu0 0.0
        %1178 = vmatpush1.msra.mxu0 0.0
        %1179 = vmatprep.subr.mxu0 0.0
        %1180 = vmatpush1.msra.mxu0 0.0
        %1181 = vmatprep.subr.mxu0 0.0
        %1182 = vmatpush1.msra.mxu0 0.0
        %1183 = vmatprep.subr.mxu0 0.0
        %1184 = vmatpush1.msra.mxu0 0.0
        %1185 = vmatprep.subr.mxu0 0.0
        %1186 = vmatpush1.msra.mxu0 0.0
        %1187 = vmatprep.subr.mxu0 0.0
        %1188 = vmatpush1.msra.mxu0 0.0
        %1189 = vmatprep.subr.mxu0 0.0
        %1190 = vmatpush1.msra.mxu0 0.0
        %1191 = vmatprep.subr.mxu0 0.0
        %1192 = vmatpush1.msra.mxu0 0.0
        %1193 = vmatprep.subr.mxu0 0.0
        %1194 = vmatpush1.msra.mxu0 0.0
        %1195 = vmatprep.subr.mxu0 0.0
        %1196 = vmatpush1.msra.mxu0 0.0
        %1197 = vmatprep.subr.mxu0 0.0
        %1198 = vmatpush1.msra.mxu0 0.0
        %1199 = vmatprep.subr.mxu0 0.0
        %1200 = vmatpush1.msra.mxu0 0.0
        %1201 = vmatprep.subr.mxu0 0.0
        %1202 = vmatpush1.msra.mxu0 0.0
        %1203 = vmatprep.subr.mxu0 0.0
        %1204 = vmatpush1.msra.mxu0 0.0
        %1205 = vmatprep.subr.mxu0 0.0
        %1206 = vmatpush1.msra.mxu0 0.0
        %1207 = vmatprep.subr.mxu0 0.0
        %1208 = vmatpush1.msra.mxu0 0.0
        %1209 = vmatprep.subr.mxu0 0.0
        %1210 = vmatpush1.msra.mxu0 0.0
        %1211 = vmatprep.subr.mxu0 0.0
        %1212 = vmatpush1.msra.mxu0 0.0
        %1213 = vmatprep.subr.mxu0 0.0
        %1214 = vmatpush1.msra.mxu0 0.0
        %1215 = vmatprep.subr.mxu0 0.0
        %1216 = vmatpush1.msra.mxu0 0.0
        %1217 = vmatprep.subr.mxu0 0.0
        %1218 = vmatpush1.msra.mxu0 0.0
        %1219 = vmatprep.subr.mxu0 0.0
        %1220 = vmatpush1.msra.mxu0 0.0
        %1221 = vmatprep.subr.mxu0 0.0
        %1222 = vmatpush1.msra.mxu0 0.0
        %1223 = vmatprep.mubr.f32.mxu0 0.0
        %1224 = vmatmul.mubr.f32.gmra.mrb[0].mxu0 %v1153
        %v1225 = vpop.f32.mrb[0].mxu0
        %v1226 = vadd.f32 0.0, %v1225
        %v1227 = vpop.f32.mrb[0].mxu0
        %1228 = vdwg.mxu0
        %v1230 = vsel %vm576, %v736, 0
        %v1233 = vsel %vm1155, %v739, 0
        %1235 = vmatprep.subr.mxu0 0.0
        %1236 = vmatpush1.msra.mxu0 %v1233
        %1237 = vmatprep.subr.mxu0 0.0
        %1238 = vmatpush1.msra.mxu0 0.0
        %1239 = vmatprep.subr.mxu0 0.0
        %1240 = vmatpush1.msra.mxu0 0.0
        %1241 = vmatprep.subr.mxu0 0.0
        %1242 = vmatpush1.msra.mxu0 0.0
        %1243 = vmatprep.subr.mxu0 0.0
        %1244 = vmatpush1.msra.mxu0 0.0
        %1245 = vmatprep.subr.mxu0 0.0
        %1246 = vmatpush1.msra.mxu0 0.0
        %1247 = vmatprep.subr.mxu0 0.0
        %1248 = vmatpush1.msra.mxu0 0.0
        %1249 = vmatprep.subr.mxu0 0.0
        %1250 = vmatpush1.msra.mxu0 0.0
        %1251 = vmatprep.subr.mxu0 0.0
        %1252 = vmatpush1.msra.mxu0 0.0
        %1253 = vmatprep.subr.mxu0 0.0
        %1254 = vmatpush1.msra.mxu0 0.0
        %1255 = vmatprep.subr.mxu0 0.0
        %1256 = vmatpush1.msra.mxu0 0.0
        %1257 = vmatprep.subr.mxu0 0.0
        %1258 = vmatpush1.msra.mxu0 0.0
        %1259 = vmatprep.subr.mxu0 0.0
        %1260 = vmatpush1.msra.mxu0 0.0
        %1261 = vmatprep.subr.mxu0 0.0
        %1262 = vmatpush1.msra.mxu0 0.0
        %1263 = vmatprep.subr.mxu0 0.0
        %1264 = vmatpush1.msra.mxu0 0.0
        %1265 = vmatprep.subr.mxu0 0.0
        %1266 = vmatpush1.msra.mxu0 0.0
        %1267 = vmatprep.subr.mxu0 0.0
        %1268 = vmatpush1.msra.mxu0 0.0
        %1269 = vmatprep.subr.mxu0 0.0
        %1270 = vmatpush1.msra.mxu0 0.0
        %1271 = vmatprep.subr.mxu0 0.0
        %1272 = vmatpush1.msra.mxu0 0.0
        %1273 = vmatprep.subr.mxu0 0.0
        %1274 = vmatpush1.msra.mxu0 0.0
        %1275 = vmatprep.subr.mxu0 0.0
        %1276 = vmatpush1.msra.mxu0 0.0
        %1277 = vmatprep.subr.mxu0 0.0
        %1278 = vmatpush1.msra.mxu0 0.0
        %1279 = vmatprep.subr.mxu0 0.0
        %1280 = vmatpush1.msra.mxu0 0.0
        %1281 = vmatprep.subr.mxu0 0.0
        %1282 = vmatpush1.msra.mxu0 0.0
        %1283 = vmatprep.subr.mxu0 0.0
        %1284 = vmatpush1.msra.mxu0 0.0
        %1285 = vmatprep.subr.mxu0 0.0
        %1286 = vmatpush1.msra.mxu0 0.0
        %1287 = vmatprep.subr.mxu0 0.0
        %1288 = vmatpush1.msra.mxu0 0.0
        %1289 = vmatprep.subr.mxu0 0.0
        %1290 = vmatpush1.msra.mxu0 0.0
        %1291 = vmatprep.subr.mxu0 0.0
        %1292 = vmatpush1.msra.mxu0 0.0
        %1293 = vmatprep.subr.mxu0 0.0
        %1294 = vmatpush1.msra.mxu0 0.0
        %1295 = vmatprep.subr.mxu0 0.0
        %1296 = vmatpush1.msra.mxu0 0.0
        %1297 = vmatprep.subr.mxu0 0.0
        %1298 = vmatpush1.msra.mxu0 0.0
        %1299 = vmatprep.mubr.f32.mxu0 0.0
        %1300 = vmatmul.mubr.f32.gmra.mrb[0].mxu0 %v1230
        %v1301 = vpop.f32.mrb[0].mxu0
        %v1302 = vadd.f32 %v1226, %v1301
        %v1303 = vpop.f32.mrb[0].mxu0
        %1304 = vdwg.mxu0
        %s1305 = scalar_lea.vmem %s1, 64
        %v1306 = vld [vmem:[%s1305] sm:$0xff]
        %v1307 = vld [vmem:[%s1305 + $0x8] sm:$0xff]
        %v1308 = vld [vmem:[%s1305 + $0x10] sm:$0xff]
        %v1309 = vld [vmem:[%s1305 + $0x18] sm:$0xff]
        %s1310 = scalar_lea.vmem %s4, 2
        %v1311 = vld [vmem:[%s1310] sm:$0x1]
        %v1313 = vlaneseq
        %v1314 = vshrl.u32 %v1313, 7
        %v1315 = vsub.s32 0, %v1314
        %v1316 = vrot.slane %v1311, %v1315
        %1318 = vmatprep.subr.mxu0 0.0
        %1319 = vmatpush1.msra.mxu0 %v1306
        %1320 = vmatprep.subr.mxu0 0.0
        %1321 = vmatpush1.msra.mxu0 %v1307
        %1322 = vmatprep.subr.mxu0 0.0
        %1323 = vmatpush1.msra.mxu0 %v1308
        %1324 = vmatprep.subr.mxu0 0.0
        %1325 = vmatpush1.msra.mxu0 %v1309
        %1326 = vmatprep.subr.mxu0 0.0
        %1327 = vmatpush1.msra.mxu0 0.0
        %1328 = vmatprep.subr.mxu0 0.0
        %1329 = vmatpush1.msra.mxu0 0.0
        %1330 = vmatprep.subr.mxu0 0.0
        %1331 = vmatpush1.msra.mxu0 0.0
        %1332 = vmatprep.subr.mxu0 0.0
        %1333 = vmatpush1.msra.mxu0 0.0
        %1334 = vmatprep.subr.mxu0 0.0
        %1335 = vmatpush1.msra.mxu0 0.0
        %1336 = vmatprep.subr.mxu0 0.0
        %1337 = vmatpush1.msra.mxu0 0.0
        %1338 = vmatprep.subr.mxu0 0.0
        %1339 = vmatpush1.msra.mxu0 0.0
        %1340 = vmatprep.subr.mxu0 0.0
        %1341 = vmatpush1.msra.mxu0 0.0
        %1342 = vmatprep.subr.mxu0 0.0
        %1343 = vmatpush1.msra.mxu0 0.0
        %1344 = vmatprep.subr.mxu0 0.0
        %1345 = vmatpush1.msra.mxu0 0.0
        %1346 = vmatprep.subr.mxu0 0.0
        %1347 = vmatpush1.msra.mxu0 0.0
        %1348 = vmatprep.subr.mxu0 0.0
        %1349 = vmatpush1.msra.mxu0 0.0
        %1350 = vmatprep.subr.mxu0 0.0
        %1351 = vmatpush1.msra.mxu0 0.0
        %1352 = vmatprep.subr.mxu0 0.0
        %1353 = vmatpush1.msra.mxu0 0.0
        %1354 = vmatprep.subr.mxu0 0.0
        %1355 = vmatpush1.msra.mxu0 0.0
        %1356 = vmatprep.subr.mxu0 0.0
        %1357 = vmatpush1.msra.mxu0 0.0
        %1358 = vmatprep.subr.mxu0 0.0
        %1359 = vmatpush1.msra.mxu0 0.0
        %1360 = vmatprep.subr.mxu0 0.0
        %1361 = vmatpush1.msra.mxu0 0.0
        %1362 = vmatprep.subr.mxu0 0.0
        %1363 = vmatpush1.msra.mxu0 0.0
        %1364 = vmatprep.subr.mxu0 0.0
        %1365 = vmatpush1.msra.mxu0 0.0
        %1366 = vmatprep.subr.mxu0 0.0
        %1367 = vmatpush1.msra.mxu0 0.0
        %1368 = vmatprep.subr.mxu0 0.0
        %1369 = vmatpush1.msra.mxu0 0.0
        %1370 = vmatprep.subr.mxu0 0.0
        %1371 = vmatpush1.msra.mxu0 0.0
        %1372 = vmatprep.subr.mxu0 0.0
        %1373 = vmatpush1.msra.mxu0 0.0
        %1374 = vmatprep.subr.mxu0 0.0
        %1375 = vmatpush1.msra.mxu0 0.0
        %1376 = vmatprep.subr.mxu0 0.0
        %1377 = vmatpush1.msra.mxu0 0.0
        %1378 = vmatprep.subr.mxu0 0.0
        %1379 = vmatpush1.msra.mxu0 0.0
        %1380 = vmatprep.subr.mxu0 0.0
        %1381 = vmatpush1.msra.mxu0 0.0
        %1382 = vmatprep.mubr.f32.mxu0 0.0
        %1383 = vmatmul.mubr.f32.gmra.mrb[0].mxu0 %v342
        %v1384 = vpop.f32.mrb[0].mxu0
        %v1385 = vadd.f32 %v1316, %v1384
        %v1386 = vpop.f32.mrb[0].mxu0
        %1387 = vdwg.mxu0
        %s1388 = scalar_lea.vmem %s2, 64
        %v1389 = vld [vmem:[%s1388] sm:$0xff]
        %v1390 = vld [vmem:[%s1388 + $0x8] sm:$0xff]
        %v1391 = vld [vmem:[%s1388 + $0x10] sm:$0xff]
        %v1392 = vld [vmem:[%s1388 + $0x18] sm:$0xff]
        %s1393 = scalar_lea.vmem %s5, 2
        %v1394 = vld [vmem:[%s1393] sm:$0x1]
        %v1396 = vlaneseq
        %v1397 = vshrl.u32 %v1396, 7
        %v1398 = vsub.s32 0, %v1397
        %v1399 = vrot.slane %v1394, %v1398
        %1401 = vmatprep.subr.mxu0 0.0
        %1402 = vmatpush1.msra.mxu0 %v1389
        %1403 = vmatprep.subr.mxu0 0.0
        %1404 = vmatpush1.msra.mxu0 %v1390
        %1405 = vmatprep.subr.mxu0 0.0
        %1406 = vmatpush1.msra.mxu0 %v1391
        %1407 = vmatprep.subr.mxu0 0.0
        %1408 = vmatpush1.msra.mxu0 %v1392
        %1409 = vmatprep.subr.mxu0 0.0
        %1410 = vmatpush1.msra.mxu0 0.0
        %1411 = vmatprep.subr.mxu0 0.0
        %1412 = vmatpush1.msra.mxu0 0.0
        %1413 = vmatprep.subr.mxu0 0.0
        %1414 = vmatpush1.msra.mxu0 0.0
        %1415 = vmatprep.subr.mxu0 0.0
        %1416 = vmatpush1.msra.mxu0 0.0
        %1417 = vmatprep.subr.mxu0 0.0
        %1418 = vmatpush1.msra.mxu0 0.0
        %1419 = vmatprep.subr.mxu0 0.0
        %1420 = vmatpush1.msra.mxu0 0.0
        %1421 = vmatprep.subr.mxu0 0.0
        %1422 = vmatpush1.msra.mxu0 0.0
        %1423 = vmatprep.subr.mxu0 0.0
        %1424 = vmatpush1.msra.mxu0 0.0
        %1425 = vmatprep.subr.mxu0 0.0
        %1426 = vmatpush1.msra.mxu0 0.0
        %1427 = vmatprep.subr.mxu0 0.0
        %1428 = vmatpush1.msra.mxu0 0.0
        %1429 = vmatprep.subr.mxu0 0.0
        %1430 = vmatpush1.msra.mxu0 0.0
        %1431 = vmatprep.subr.mxu0 0.0
        %1432 = vmatpush1.msra.mxu0 0.0
        %1433 = vmatprep.subr.mxu0 0.0
        %1434 = vmatpush1.msra.mxu0 0.0
        %1435 = vmatprep.subr.mxu0 0.0
        %1436 = vmatpush1.msra.mxu0 0.0
        %1437 = vmatprep.subr.mxu0 0.0
        %1438 = vmatpush1.msra.mxu0 0.0
        %1439 = vmatprep.subr.mxu0 0.0
        %1440 = vmatpush1.msra.mxu0 0.0
        %1441 = vmatprep.subr.mxu0 0.0
        %1442 = vmatpush1.msra.mxu0 0.0
        %1443 = vmatprep.subr.mxu0 0.0
        %1444 = vmatpush1.msra.mxu0 0.0
        %1445 = vmatprep.subr.mxu0 0.0
        %1446 = vmatpush1.msra.mxu0 0.0
        %1447 = vmatprep.subr.mxu0 0.0
        %1448 = vmatpush1.msra.mxu0 0.0
        %1449 = vmatprep.subr.mxu0 0.0
        %1450 = vmatpush1.msra.mxu0 0.0
        %1451 = vmatprep.subr.mxu0 0.0
        %1452 = vmatpush1.msra.mxu0 0.0
        %1453 = vmatprep.subr.mxu0 0.0
        %1454 = vmatpush1.msra.mxu0 0.0
        %1455 = vmatprep.subr.mxu0 0.0
        %1456 = vmatpush1.msra.mxu0 0.0
        %1457 = vmatprep.subr.mxu0 0.0
        %1458 = vmatpush1.msra.mxu0 0.0
        %1459 = vmatprep.subr.mxu0 0.0
        %1460 = vmatpush1.msra.mxu0 0.0
        %1461 = vmatprep.subr.mxu0 0.0
        %1462 = vmatpush1.msra.mxu0 0.0
        %1463 = vmatprep.subr.mxu0 0.0
        %1464 = vmatpush1.msra.mxu0 0.0
        %1465 = vmatprep.mubr.f32.mxu0 0.0
        %1466 = vmatmul.mubr.f32.gmra.mrb[0].mxu0 %v342
        %v1467 = vpop.f32.mrb[0].mxu0
        %v1468 = vadd.f32 %v1399, %v1467
        %v1469 = vpop.f32.mrb[0].mxu0
        %1470 = vdwg.mxu0
        %s1471 = scalar_lea.vmem %s3, 64
        %v1472 = vld [vmem:[%s1471] sm:$0xff]
        %v1473 = vld [vmem:[%s1471 + $0x8] sm:$0xff]
        %v1474 = vld [vmem:[%s1471 + $0x10] sm:$0xff]
        %v1475 = vld [vmem:[%s1471 + $0x18] sm:$0xff]
        %s1476 = scalar_lea.vmem %s6, 2
        %v1477 = vld [vmem:[%s1476] sm:$0x1]
        %v1479 = vlaneseq
        %v1480 = vshrl.u32 %v1479, 7
        %v1481 = vsub.s32 0, %v1480
        %v1482 = vrot.slane %v1477, %v1481
        %1484 = vmatprep.subr.mxu0 0.0
        %1485 = vmatpush1.msra.mxu0 %v1472
        %1486 = vmatprep.subr.mxu0 0.0
        %1487 = vmatpush1.msra.mxu0 %v1473
        %1488 = vmatprep.subr.mxu0 0.0
        %1489 = vmatpush1.msra.mxu0 %v1474
        %1490 = vmatprep.subr.mxu0 0.0
        %1491 = vmatpush1.msra.mxu0 %v1475
        %1492 = vmatprep.subr.mxu0 0.0
        %1493 = vmatpush1.msra.mxu0 0.0
        %1494 = vmatprep.subr.mxu0 0.0
        %1495 = vmatpush1.msra.mxu0 0.0
        %1496 = vmatprep.subr.mxu0 0.0
        %1497 = vmatpush1.msra.mxu0 0.0
        %1498 = vmatprep.subr.mxu0 0.0
        %1499 = vmatpush1.msra.mxu0 0.0
        %1500 = vmatprep.subr.mxu0 0.0
        %1501 = vmatpush1.msra.mxu0 0.0
        %1502 = vmatprep.subr.mxu0 0.0
        %1503 = vmatpush1.msra.mxu0 0.0
        %1504 = vmatprep.subr.mxu0 0.0
        %1505 = vmatpush1.msra.mxu0 0.0
        %1506 = vmatprep.subr.mxu0 0.0
        %1507 = vmatpush1.msra.mxu0 0.0
        %1508 = vmatprep.subr.mxu0 0.0
        %1509 = vmatpush1.msra.mxu0 0.0
        %1510 = vmatprep.subr.mxu0 0.0
        %1511 = vmatpush1.msra.mxu0 0.0
        %1512 = vmatprep.subr.mxu0 0.0
        %1513 = vmatpush1.msra.mxu0 0.0
        %1514 = vmatprep.subr.mxu0 0.0
        %1515 = vmatpush1.msra.mxu0 0.0
        %1516 = vmatprep.subr.mxu0 0.0
        %1517 = vmatpush1.msra.mxu0 0.0
        %1518 = vmatprep.subr.mxu0 0.0
        %1519 = vmatpush1.msra.mxu0 0.0
        %1520 = vmatprep.subr.mxu0 0.0
        %1521 = vmatpush1.msra.mxu0 0.0
        %1522 = vmatprep.subr.mxu0 0.0
        %1523 = vmatpush1.msra.mxu0 0.0
        %1524 = vmatprep.subr.mxu0 0.0
        %1525 = vmatpush1.msra.mxu0 0.0
        %1526 = vmatprep.subr.mxu0 0.0
        %1527 = vmatpush1.msra.mxu0 0.0
        %1528 = vmatprep.subr.mxu0 0.0
        %1529 = vmatpush1.msra.mxu0 0.0
        %1530 = vmatprep.subr.mxu0 0.0
        %1531 = vmatpush1.msra.mxu0 0.0
        %1532 = vmatprep.subr.mxu0 0.0
        %1533 = vmatpush1.msra.mxu0 0.0
        %1534 = vmatprep.subr.mxu0 0.0
        %1535 = vmatpush1.msra.mxu0 0.0
        %1536 = vmatprep.subr.mxu0 0.0
        %1537 = vmatpush1.msra.mxu0 0.0
        %1538 = vmatprep.subr.mxu0 0.0
        %1539 = vmatpush1.msra.mxu0 0.0
        %1540 = vmatprep.subr.mxu0 0.0
        %1541 = vmatpush1.msra.mxu0 0.0
        %1542 = vmatprep.subr.mxu0 0.0
        %1543 = vmatpush1.msra.mxu0 0.0
        %1544 = vmatprep.subr.mxu0 0.0
        %1545 = vmatpush1.msra.mxu0 0.0
        %1546 = vmatprep.subr.mxu0 0.0
        %1547 = vmatpush1.msra.mxu0 0.0
        %1548 = vmatprep.mubr.f32.mxu0 0.0
        %1549 = vmatmul.mubr.f32.gmra.mrb[0].mxu0 %v342
        %v1550 = vpop.f32.mrb[0].mxu0
        %v1551 = vadd.f32 %v1482, %v1550
        %v1552 = vpop.f32.mrb[0].mxu0
        %1553 = vdwg.mxu0
        %v1555 = vsel %vm576, %v1385, 0
        %v1558 = vsel %vm576, %v1468, 0
        %1560 = vmatprep.subr.mxu0 0.0
        %1561 = vmatpush1.xpose.msra.mxu0 %v1558
        %1562 = vmatprep.subr.mxu0 0.0
        %1563 = vmatpush1.xpose.msra.mxu0 0.0
        %1564 = vmatprep.subr.mxu0 0.0
        %1565 = vmatpush1.xpose.msra.mxu0 0.0
        %1566 = vmatprep.subr.mxu0 0.0
        %1567 = vmatpush1.xpose.msra.mxu0 0.0
        %1568 = vmatprep.subr.mxu0 0.0
        %1569 = vmatpush1.xpose.msra.mxu0 0.0
        %1570 = vmatprep.subr.mxu0 0.0
        %1571 = vmatpush1.xpose.msra.mxu0 0.0
        %1572 = vmatprep.subr.mxu0 0.0
        %1573 = vmatpush1.xpose.msra.mxu0 0.0
        %1574 = vmatprep.subr.mxu0 0.0
        %1575 = vmatpush1.xpose.msra.mxu0 0.0
        %1576 = vmatprep.subr.mxu0 0.0
        %1577 = vmatpush1.xpose.msra.mxu0 0.0
        %1578 = vmatprep.subr.mxu0 0.0
        %1579 = vmatpush1.xpose.msra.mxu0 0.0
        %1580 = vmatprep.subr.mxu0 0.0
        %1581 = vmatpush1.xpose.msra.mxu0 0.0
        %1582 = vmatprep.subr.mxu0 0.0
        %1583 = vmatpush1.xpose.msra.mxu0 0.0
        %1584 = vmatprep.subr.mxu0 0.0
        %1585 = vmatpush1.xpose.msra.mxu0 0.0
        %1586 = vmatprep.subr.mxu0 0.0
        %1587 = vmatpush1.xpose.msra.mxu0 0.0
        %1588 = vmatprep.subr.mxu0 0.0
        %1589 = vmatpush1.xpose.msra.mxu0 0.0
        %1590 = vmatprep.subr.mxu0 0.0
        %1591 = vmatpush1.xpose.msra.mxu0 0.0
        %1592 = vmatprep.subr.mxu0 0.0
        %1593 = vmatpush1.xpose.msra.mxu0 0.0
        %1594 = vmatprep.subr.mxu0 0.0
        %1595 = vmatpush1.xpose.msra.mxu0 0.0
        %1596 = vmatprep.subr.mxu0 0.0
        %1597 = vmatpush1.xpose.msra.mxu0 0.0
        %1598 = vmatprep.subr.mxu0 0.0
        %1599 = vmatpush1.xpose.msra.mxu0 0.0
        %1600 = vmatprep.subr.mxu0 0.0
        %1601 = vmatpush1.xpose.msra.mxu0 0.0
        %1602 = vmatprep.subr.mxu0 0.0
        %1603 = vmatpush1.xpose.msra.mxu0 0.0
        %1604 = vmatprep.subr.mxu0 0.0
        %1605 = vmatpush1.xpose.msra.mxu0 0.0
        %1606 = vmatprep.subr.mxu0 0.0
        %1607 = vmatpush1.xpose.msra.mxu0 0.0
        %1608 = vmatprep.subr.mxu0 0.0
        %1609 = vmatpush1.xpose.msra.mxu0 0.0
        %1610 = vmatprep.subr.mxu0 0.0
        %1611 = vmatpush1.xpose.msra.mxu0 0.0
        %1612 = vmatprep.subr.mxu0 0.0
        %1613 = vmatpush1.xpose.msra.mxu0 0.0
        %1614 = vmatprep.subr.mxu0 0.0
        %1615 = vmatpush1.xpose.msra.mxu0 0.0
        %1616 = vmatprep.subr.mxu0 0.0
        %1617 = vmatpush1.xpose.msra.mxu0 0.0
        %1618 = vmatprep.subr.mxu0 0.0
        %1619 = vmatpush1.xpose.msra.mxu0 0.0
        %1620 = vmatprep.subr.mxu0 0.0
        %1621 = vmatpush1.xpose.msra.mxu0 0.0
        %1622 = vmatprep.subr.mxu0 0.0
        %1623 = vmatpush1.xpose.msra.mxu0 0.0
        %1624 = vmatprep.mubr.f32.mxu0 0.0
        %1625 = vmatmul.mubr.f32.gmra.mrb[0].mxu0 %v1555
        %v1626 = vpop.f32.mrb[0].mxu0
        %v1627 = vadd.f32 0.0, %v1626
        %v1628 = vpop.f32.mrb[0].mxu0
        %1629 = vdwg.mxu0
        %v1630 = vmul.f32 %v1627, 0.5
        %v1631 = vsel %vm654, %v1630, -inf
        %1632 = vmax.xlane.f32.xlu0 %v1631
        %v1633 = vpop.xlane.xlu0 %1632
        %v1634 = vsub.f32 %v1630, %v1633
        %v1635 = vmul.f32 %v1634, 1.442695
        %v1636 = vpow.pop %v1635
        %v1637 = vsel %vm654, %v1636, 0.0
        %1638 = vadd.xlane.f32.xlu0 %v1637
        %v1639 = vpop.xlane.xlu0 %1638
        %v1640 = vrcp.pop %v1639
        %v1641 = vmul.f32 %v1636, %v1640
        %v1643 = vsel %vm654, %v1641, 0
        %1645 = vmatprep.subr.mxu0 0.0
        %1646 = vmatpush1.msra.mxu0 %v1551
        %1647 = vmatprep.subr.mxu0 0.0
        %1648 = vmatpush1.msra.mxu0 0.0
        %1649 = vmatprep.subr.mxu0 0.0
        %1650 = vmatpush1.msra.mxu0 0.0
        %1651 = vmatprep.subr.mxu0 0.0
        %1652 = vmatpush1.msra.mxu0 0.0
        %1653 = vmatprep.subr.mxu0 0.0
        %1654 = vmatpush1.msra.mxu0 0.0
        %1655 = vmatprep.subr.mxu0 0.0
        %1656 = vmatpush1.msra.mxu0 0.0
        %1657 = vmatprep.subr.mxu0 0.0
        %1658 = vmatpush1.msra.mxu0 0.0
        %1659 = vmatprep.subr.mxu0 0.0
        %1660 = vmatpush1.msra.mxu0 0.0
        %1661 = vmatprep.subr.mxu0 0.0
        %1662 = vmatpush1.msra.mxu0 0.0
        %1663 = vmatprep.subr.mxu0 0.0
        %1664 = vmatpush1.msra.mxu0 0.0
        %1665 = vmatprep.subr.mxu0 0.0
        %1666 = vmatpush1.msra.mxu0 0.0
        %1667 = vmatprep.subr.mxu0 0.0
        %1668 = vmatpush1.msra.mxu0 0.0
        %1669 = vmatprep.subr.mxu0 0.0
        %1670 = vmatpush1.msra.mxu0 0.0
        %1671 = vmatprep.subr.mxu0 0.0
        %1672 = vmatpush1.msra.mxu0 0.0
        %1673 = vmatprep.subr.mxu0 0.0
        %1674 = vmatpush1.msra.mxu0 0.0
        %1675 = vmatprep.subr.mxu0 0.0
        %1676 = vmatpush1.msra.mxu0 0.0
        %1677 = vmatprep.subr.mxu0 0.0
        %1678 = vmatpush1.msra.mxu0 0.0
        %1679 = vmatprep.subr.mxu0 0.0
        %1680 = vmatpush1.msra.mxu0 0.0
        %1681 = vmatprep.subr.mxu0 0.0
        %1682 = vmatpush1.msra.mxu0 0.0
        %1683 = vmatprep.subr.mxu0 0.0
        %1684 = vmatpush1.msra.mxu0 0.0
        %1685 = vmatprep.subr.mxu0 0.0
        %1686 = vmatpush1.msra.mxu0 0.0
        %1687 = vmatprep.subr.mxu0 0.0
        %1688 = vmatpush1.msra.mxu0 0.0
        %1689 = vmatprep.subr.mxu0 0.0
        %1690 = vmatpush1.msra.mxu0 0.0
        %1691 = vmatprep.subr.mxu0 0.0
        %1692 = vmatpush1.msra.mxu0 0.0
        %1693 = vmatprep.subr.mxu0 0.0
        %1694 = vmatpush1.msra.mxu0 0.0
        %1695 = vmatprep.subr.mxu0 0.0
        %1696 = vmatpush1.msra.mxu0 0.0
        %1697 = vmatprep.subr.mxu0 0.0
        %1698 = vmatpush1.msra.mxu0 0.0
        %1699 = vmatprep.subr.mxu0 0.0
        %1700 = vmatpush1.msra.mxu0 0.0
        %1701 = vmatprep.subr.mxu0 0.0
        %1702 = vmatpush1.msra.mxu0 0.0
        %1703 = vmatprep.subr.mxu0 0.0
        %1704 = vmatpush1.msra.mxu0 0.0
        %1705 = vmatprep.subr.mxu0 0.0
        %1706 = vmatpush1.msra.mxu0 0.0
        %1707 = vmatprep.subr.mxu0 0.0
        %1708 = vmatpush1.msra.mxu0 0.0
        %1709 = vmatprep.mubr.f32.mxu0 0.0
        %1710 = vmatmul.mubr.f32.gmra.mrb[0].mxu0 %v1643
        %v1711 = vpop.f32.mrb[0].mxu0
        %v1712 = vadd.f32 0.0, %v1711
        %v1713 = vpop.f32.mrb[0].mxu0
        %1714 = vdwg.mxu0
        %s1715 = scalar_lea.vmem %s7, 8
        %v1716 = vld [vmem:[%s1715] sm:$0xf]
        %v1718 = vsel %vm576, %v1712, 0
        %v1721 = vsel %vm1155, %v1716, 0
        %1723 = vmatprep.subr.mxu0 0.0
        %1724 = vmatpush1.msra.mxu0 %v1721
        %1725 = vmatprep.subr.mxu0 0.0
        %1726 = vmatpush1.msra.mxu0 0.0
        %1727 = vmatprep.subr.mxu0 0.0
        %1728 = vmatpush1.msra.mxu0 0.0
        %1729 = vmatprep.subr.mxu0 0.0
        %1730 = vmatpush1.msra.mxu0 0.0
        %1731 = vmatprep.subr.mxu0 0.0
        %1732 = vmatpush1.msra.mxu0 0.0
        %1733 = vmatprep.subr.mxu0 0.0
        %1734 = vmatpush1.msra.mxu0 0.0
        %1735 = vmatprep.subr.mxu0 0.0
        %1736 = vmatpush1.msra.mxu0 0.0
        %1737 = vmatprep.subr.mxu0 0.0
        %1738 = vmatpush1.msra.mxu0 0.0
        %1739 = vmatprep.subr.mxu0 0.0
        %1740 = vmatpush1.msra.mxu0 0.0
        %1741 = vmatprep.subr.mxu0 0.0
        %1742 = vmatpush1.msra.mxu0 0.0
        %1743 = vmatprep.subr.mxu0 0.0
        %1744 = vmatpush1.msra.mxu0 0.0
        %1745 = vmatprep.subr.mxu0 0.0
        %1746 = vmatpush1.msra.mxu0 0.0
        %1747 = vmatprep.subr.mxu0 0.0
        %1748 = vmatpush1.msra.mxu0 0.0
        %1749 = vmatprep.subr.mxu0 0.0
        %1750 = vmatpush1.msra.mxu0 0.0
        %1751 = vmatprep.subr.mxu0 0.0
        %1752 = vmatpush1.msra.mxu0 0.0
        %1753 = vmatprep.subr.mxu0 0.0
        %1754 = vmatpush1.msra.mxu0 0.0
        %1755 = vmatprep.subr.mxu0 0.0
        %1756 = vmatpush1.msra.mxu0 0.0
        %1757 = vmatprep.subr.mxu0 0.0
        %1758 = vmatpush1.msra.mxu0 0.0
        %1759 = vmatprep.subr.mxu0 0.0
        %1760 = vmatpush1.msra.mxu0 0.0
        %1761 = vmatprep.subr.mxu0 0.0
        %1762 = vmatpush1.msra.mxu0 0.0
        %1763 = vmatprep.subr.mxu0 0.0
        %1764 = vmatpush1.msra.mxu0 0.0
        %1765 = vmatprep.subr.mxu0 0.0
        %1766 = vmatpush1.msra.mxu0 0.0
        %1767 = vmatprep.subr.mxu0 0.0
        %1768 = vmatpush1.msra.mxu0 0.0
        %1769 = vmatprep.subr.mxu0 0.0
        %1770 = vmatpush1.msra.mxu0 0.0
        %1771 = vmatprep.subr.mxu0 0.0
        %1772 = vmatpush1.msra.mxu0 0.0
        %1773 = vmatprep.subr.mxu0 0.0
        %1774 = vmatpush1.msra.mxu0 0.0
        %1775 = vmatprep.subr.mxu0 0.0
        %1776 = vmatpush1.msra.mxu0 0.0
        %1777 = vmatprep.subr.mxu0 0.0
        %1778 = vmatpush1.msra.mxu0 0.0
        %1779 = vmatprep.subr.mxu0 0.0
        %1780 = vmatpush1.msra.mxu0 0.0
        %1781 = vmatprep.subr.mxu0 0.0
        %1782 = vmatpush1.msra.mxu0 0.0
        %1783 = vmatprep.subr.mxu0 0.0
        %1784 = vmatpush1.msra.mxu0 0.0
        %1785 = vmatprep.subr.mxu0 0.0
        %1786 = vmatpush1.msra.mxu0 0.0
        %1787 = vmatprep.mubr.f32.mxu0 0.0
        %1788 = vmatmul.mubr.f32.gmra.mrb[0].mxu0 %v1718
        %v1789 = vpop.f32.mrb[0].mxu0
        %v1790 = vadd.f32 0.0, %v1789
        %v1791 = vpop.f32.mrb[0].mxu0
        %1792 = vdwg.mxu0
        %v1793 = vadd.f32 %v1302, %v1790
        %s1794 = scalar_lea.vmem %s1, 96
        %v1795 = vld [vmem:[%s1794] sm:$0xff]
        %v1796 = vld [vmem:[%s1794 + $0x8] sm:$0xff]
        %v1797 = vld [vmem:[%s1794 + $0x10] sm:$0xff]
        %v1798 = vld [vmem:[%s1794 + $0x18] sm:$0xff]
        %s1799 = scalar_lea.vmem %s4, 3
        %v1800 = vld [vmem:[%s1799] sm:$0x1]
        %v1802 = vlaneseq
        %v1803 = vshrl.u32 %v1802, 7
        %v1804 = vsub.s32 0, %v1803
        %v1805 = vrot.slane %v1800, %v1804
        %1807 = vmatprep.subr.mxu0 0.0
        %1808 = vmatpush1.msra.mxu0 %v1795
        %1809 = vmatprep.subr.mxu0 0.0
        %1810 = vmatpush1.msra.mxu0 %v1796
        %1811 = vmatprep.subr.mxu0 0.0
        %1812 = vmatpush1.msra.mxu0 %v1797
        %1813 = vmatprep.subr.mxu0 0.0
        %1814 = vmatpush1.msra.mxu0 %v1798
        %1815 = vmatprep.subr.mxu0 0.0
        %1816 = vmatpush1.msra.mxu0 0.0
        %1817 = vmatprep.subr.mxu0 0.0
        %1818 = vmatpush1.msra.mxu0 0.0
        %1819 = vmatprep.subr.mxu0 0.0
        %1820 = vmatpush1.msra.mxu0 0.0
        %1821 = vmatprep.subr.mxu0 0.0
        %1822 = vmatpush1.msra.mxu0 0.0
        %1823 = vmatprep.subr.mxu0 0.0
        %1824 = vmatpush1.msra.mxu0 0.0
        %1825 = vmatprep.subr.mxu0 0.0
        %1826 = vmatpush1.msra.mxu0 0.0
        %1827 = vmatprep.subr.mxu0 0.0
        %1828 = vmatpush1.msra.mxu0 0.0
        %1829 = vmatprep.subr.mxu0 0.0
        %1830 = vmatpush1.msra.mxu0 0.0
        %1831 = vmatprep.subr.mxu0 0.0
        %1832 = vmatpush1.msra.mxu0 0.0
        %1833 = vmatprep.subr.mxu0 0.0
        %1834 = vmatpush1.msra.mxu0 0.0
        %1835 = vmatprep.subr.mxu0 0.0
        %1836 = vmatpush1.msra.mxu0 0.0
        %1837 = vmatprep.subr.mxu0 0.0
        %1838 = vmatpush1.msra.mxu0 0.0
        %1839 = vmatprep.subr.mxu0 0.0
        %1840 = vmatpush1.msra.mxu0 0.0
        %1841 = vmatprep.subr.mxu0 0.0
        %1842 = vmatpush1.msra.mxu0 0.0
        %1843 = vmatprep.subr.mxu0 0.0
        %1844 = vmatpush1.msra.mxu0 0.0
        %1845 = vmatprep.subr.mxu0 0.0
        %1846 = vmatpush1.msra.mxu0 0.0
        %1847 = vmatprep.subr.mxu0 0.0
        %1848 = vmatpush1.msra.mxu0 0.0
        %1849 = vmatprep.subr.mxu0 0.0
        %1850 = vmatpush1.msra.mxu0 0.0
        %1851 = vmatprep.subr.mxu0 0.0
        %1852 = vmatpush1.msra.mxu0 0.0
        %1853 = vmatprep.subr.mxu0 0.0
        %1854 = vmatpush1.msra.mxu0 0.0
        %1855 = vmatprep.subr.mxu0 0.0
        %1856 = vmatpush1.msra.mxu0 0.0
        %1857 = vmatprep.subr.mxu0 0.0
        %1858 = vmatpush1.msra.mxu0 0.0
        %1859 = vmatprep.subr.mxu0 0.0
        %1860 = vmatpush1.msra.mxu0 0.0
        %1861 = vmatprep.subr.mxu0 0.0
        %1862 = vmatpush1.msra.mxu0 0.0
        %1863 = vmatprep.subr.mxu0 0.0
        %1864 = vmatpush1.msra.mxu0 0.0
        %1865 = vmatprep.subr.mxu0 0.0
        %1866 = vmatpush1.msra.mxu0 0.0
        %1867 = vmatprep.subr.mxu0 0.0
        %1868 = vmatpush1.msra.mxu0 0.0
        %1869 = vmatprep.subr.mxu0 0.0
        %1870 = vmatpush1.msra.mxu0 0.0
        %1871 = vmatprep.mubr.f32.mxu0 0.0
        %1872 = vmatmul.mubr.f32.gmra.mrb[0].mxu0 %v342
        %v1873 = vpop.f32.mrb[0].mxu0
        %v1874 = vadd.f32 %v1805, %v1873
        %v1875 = vpop.f32.mrb[0].mxu0
        %1876 = vdwg.mxu0
        %s1877 = scalar_lea.vmem %s2, 96
        %v1878 = vld [vmem:[%s1877] sm:$0xff]
        %v1879 = vld [vmem:[%s1877 + $0x8] sm:$0xff]
        %v1880 = vld [vmem:[%s1877 + $0x10] sm:$0xff]
        %v1881 = vld [vmem:[%s1877 + $0x18] sm:$0xff]
        %s1882 = scalar_lea.vmem %s5, 3
        %v1883 = vld [vmem:[%s1882] sm:$0x1]
        %v1885 = vlaneseq
        %v1886 = vshrl.u32 %v1885, 7
        %v1887 = vsub.s32 0, %v1886
        %v1888 = vrot.slane %v1883, %v1887
        %1890 = vmatprep.subr.mxu0 0.0
        %1891 = vmatpush1.msra.mxu0 %v1878
        %1892 = vmatprep.subr.mxu0 0.0
        %1893 = vmatpush1.msra.mxu0 %v1879
        %1894 = vmatprep.subr.mxu0 0.0
        %1895 = vmatpush1.msra.mxu0 %v1880
        %1896 = vmatprep.subr.mxu0 0.0
        %1897 = vmatpush1.msra.mxu0 %v1881
        %1898 = vmatprep.subr.mxu0 0.0
        %1899 = vmatpush1.msra.mxu0 0.0
        %1900 = vmatprep.subr.mxu0 0.0
        %1901 = vmatpush1.msra.mxu0 0.0
        %1902 = vmatprep.subr.mxu0 0.0
        %1903 = vmatpush1.msra.mxu0 0.0
        %1904 = vmatprep.subr.mxu0 0.0
        %1905 = vmatpush1.msra.mxu0 0.0
        %1906 = vmatprep.subr.mxu0 0.0
        %1907 = vmatpush1.msra.mxu0 0.0
        %1908 = vmatprep.subr.mxu0 0.0
        %1909 = vmatpush1.msra.mxu0 0.0
        %1910 = vmatprep.subr.mxu0 0.0
        %1911 = vmatpush1.msra.mxu0 0.0
        %1912 = vmatprep.subr.mxu0 0.0
        %1913 = vmatpush1.msra.mxu0 0.0
        %1914 = vmatprep.subr.mxu0 0.0
        %1915 = vmatpush1.msra.mxu0 0.0
        %1916 = vmatprep.subr.mxu0 0.0
        %1917 = vmatpush1.msra.mxu0 0.0
        %1918 = vmatprep.subr.mxu0 0.0
        %1919 = vmatpush1.msra.mxu0 0.0
        %1920 = vmatprep.subr.mxu0 0.0
        %1921 = vmatpush1.msra.mxu0 0.0
        %1922 = vmatprep.subr.mxu0 0.0
        %1923 = vmatpush1.msra.mxu0 0.0
        %1924 = vmatprep.subr.mxu0 0.0
        %1925 = vmatpush1.msra.mxu0 0.0
        %1926 = vmatprep.subr.mxu0 0.0
        %1927 = vmatpush1.msra.mxu0 0.0
        %1928 = vmatprep.subr.mxu0 0.0
        %1929 = vmatpush1.msra.mxu0 0.0
        %1930 = vmatprep.subr.mxu0 0.0
        %1931 = vmatpush1.msra.mxu0 0.0
        %1932 = vmatprep.subr.mxu0 0.0
        %1933 = vmatpush1.msra.mxu0 0.0
        %1934 = vmatprep.subr.mxu0 0.0
        %1935 = vmatpush1.msra.mxu0 0.0
        %1936 = vmatprep.subr.mxu0 0.0
        %1937 = vmatpush1.msra.mxu0 0.0
        %1938 = vmatprep.subr.mxu0 0.0
        %1939 = vmatpush1.msra.mxu0 0.0
        %1940 = vmatprep.subr.mxu0 0.0
        %1941 = vmatpush1.msra.mxu0 0.0
        %1942 = vmatprep.subr.mxu0 0.0
        %1943 = vmatpush1.msra.mxu0 0.0
        %1944 = vmatprep.subr.mxu0 0.0
        %1945 = vmatpush1.msra.mxu0 0.0
        %1946 = vmatprep.subr.mxu0 0.0
        %1947 = vmatpush1.msra.mxu0 0.0
        %1948 = vmatprep.subr.mxu0 0.0
        %1949 = vmatpush1.msra.mxu0 0.0
        %1950 = vmatprep.subr.mxu0 0.0
        %1951 = vmatpush1.msra.mxu0 0.0
        %1952 = vmatprep.subr.mxu0 0.0
        %1953 = vmatpush1.msra.mxu0 0.0
        %1954 = vmatprep.mubr.f32.mxu0 0.0
        %1955 = vmatmul.mubr.f32.gmra.mrb[0].mxu0 %v342
        %v1956 = vpop.f32.mrb[0].mxu0
        %v1957 = vadd.f32 %v1888, %v1956
        %v1958 = vpop.f32.mrb[0].mxu0
        %1959 = vdwg.mxu0
        %s1960 = scalar_lea.vmem %s3, 96
        %v1961 = vld [vmem:[%s1960] sm:$0xff]
        %v1962 = vld [vmem:[%s1960 + $0x8] sm:$0xff]
        %v1963 = vld [vmem:[%s1960 + $0x10] sm:$0xff]
        %v1964 = vld [vmem:[%s1960 + $0x18] sm:$0xff]
        %s1965 = scalar_lea.vmem %s6, 3
        %v1966 = vld [vmem:[%s1965] sm:$0x1]
        %v1968 = vlaneseq
        %v1969 = vshrl.u32 %v1968, 7
        %v1970 = vsub.s32 0, %v1969
        %v1971 = vrot.slane %v1966, %v1970
        %1973 = vmatprep.subr.mxu0 0.0
        %1974 = vmatpush1.msra.mxu0 %v1961
        %1975 = vmatprep.subr.mxu0 0.0
        %1976 = vmatpush1.msra.mxu0 %v1962
        %1977 = vmatprep.subr.mxu0 0.0
        %1978 = vmatpush1.msra.mxu0 %v1963
        %1979 = vmatprep.subr.mxu0 0.0
        %1980 = vmatpush1.msra.mxu0 %v1964
        %1981 = vmatprep.subr.mxu0 0.0
        %1982 = vmatpush1.msra.mxu0 0.0
        %1983 = vmatprep.subr.mxu0 0.0
        %1984 = vmatpush1.msra.mxu0 0.0
        %1985 = vmatprep.subr.mxu0 0.0
        %1986 = vmatpush1.msra.mxu0 0.0
        %1987 = vmatprep.subr.mxu0 0.0
        %1988 = vmatpush1.msra.mxu0 0.0
        %1989 = vmatprep.subr.mxu0 0.0
        %1990 = vmatpush1.msra.mxu0 0.0
        %1991 = vmatprep.subr.mxu0 0.0
        %1992 = vmatpush1.msra.mxu0 0.0
        %1993 = vmatprep.subr.mxu0 0.0
        %1994 = vmatpush1.msra.mxu0 0.0
        %1995 = vmatprep.subr.mxu0 0.0
        %1996 = vmatpush1.msra.mxu0 0.0
        %1997 = vmatprep.subr.mxu0 0.0
        %1998 = vmatpush1.msra.mxu0 0.0
        %1999 = vmatprep.subr.mxu0 0.0
        %2000 = vmatpush1.msra.mxu0 0.0
        %2001 = vmatprep.subr.mxu0 0.0
        %2002 = vmatpush1.msra.mxu0 0.0
        %2003 = vmatprep.subr.mxu0 0.0
        %2004 = vmatpush1.msra.mxu0 0.0
        %2005 = vmatprep.subr.mxu0 0.0
        %2006 = vmatpush1.msra.mxu0 0.0
        %2007 = vmatprep.subr.mxu0 0.0
        %2008 = vmatpush1.msra.mxu0 0.0
        %2009 = vmatprep.subr.mxu0 0.0
        %2010 = vmatpush1.msra.mxu0 0.0
        %2011 = vmatprep.subr.mxu0 0.0
        %2012 = vmatpush1.msra.mxu0 0.0
        %2013 = vmatprep.subr.mxu0 0.0
        %2014 = vmatpush1.msra.mxu0 0.0
        %2015 = vmatprep.subr.mxu0 0.0
        %2016 = vmatpush1.msra.mxu0 0.0
        %2017 = vmatprep.subr.mxu0 0.0
        %2018 = vmatpush1.msra.mxu0 0.0
        %2019 = vmatprep.subr.mxu0 0.0
        %2020 = vmatpush1.msra.mxu0 0.0
        %2021 = vmatprep.subr.mxu0 0.0
        %2022 = vmatpush1.msra.mxu0 0.0
        %2023 = vmatprep.subr.mxu0 0.0
        %2024 = vmatpush1.msra.mxu0 0.0
        %2025 = vmatprep.subr.mxu0 0.0
        %2026 = vmatpush1.msra.mxu0 0.0
        %2027 = vmatprep.subr.mxu0 0.0
        %2028 = vmatpush1.msra.mxu0 0.0
        %2029 = vmatprep.subr.mxu0 0.0
        %2030 = vmatpush1.msra.mxu0 0.0
        %2031 = vmatprep.subr.mxu0 0.0
        %2032 = vmatpush1.msra.mxu0 0.0
        %2033 = vmatprep.subr.mxu0 0.0
        %2034 = vmatpush1.msra.mxu0 0.0
        %2035 = vmatprep.subr.mxu0 0.0
        %2036 = vmatpush1.msra.mxu0 0.0
        %2037 = vmatprep.mubr.f32.mxu0 0.0
        %2038 = vmatmul.mubr.f32.gmra.mrb[0].mxu0 %v342
        %v2039 = vpop.f32.mrb[0].mxu0
        %v2040 = vadd.f32 %v1971, %v2039
        %v2041 = vpop.f32.mrb[0].mxu0
        %2042 = vdwg.mxu0
        %v2044 = vsel %vm576, %v1874, 0
        %v2047 = vsel %vm576, %v1957, 0
        %2049 = vmatprep.subr.mxu0 0.0
        %2050 = vmatpush1.xpose.msra.mxu0 %v2047
        %2051 = vmatprep.subr.mxu0 0.0
        %2052 = vmatpush1.xpose.msra.mxu0 0.0
        %2053 = vmatprep.subr.mxu0 0.0
        %2054 = vmatpush1.xpose.msra.mxu0 0.0
        %2055 = vmatprep.subr.mxu0 0.0
        %2056 = vmatpush1.xpose.msra.mxu0 0.0
        %2057 = vmatprep.subr.mxu0 0.0
        %2058 = vmatpush1.xpose.msra.mxu0 0.0
        %2059 = vmatprep.subr.mxu0 0.0
        %2060 = vmatpush1.xpose.msra.mxu0 0.0
        %2061 = vmatprep.subr.mxu0 0.0
        %2062 = vmatpush1.xpose.msra.mxu0 0.0
        %2063 = vmatprep.subr.mxu0 0.0
        %2064 = vmatpush1.xpose.msra.mxu0 0.0
        %2065 = vmatprep.subr.mxu0 0.0
        %2066 = vmatpush1.xpose.msra.mxu0 0.0
        %2067 = vmatprep.subr.mxu0 0.0
        %2068 = vmatpush1.xpose.msra.mxu0 0.0
        %2069 = vmatprep.subr.mxu0 0.0
        %2070 = vmatpush1.xpose.msra.mxu0 0.0
        %2071 = vmatprep.subr.mxu0 0.0
        %2072 = vmatpush1.xpose.msra.mxu0 0.0
        %2073 = vmatprep.subr.mxu0 0.0
        %2074 = vmatpush1.xpose.msra.mxu0 0.0
        %2075 = vmatprep.subr.mxu0 0.0
        %2076 = vmatpush1.xpose.msra.mxu0 0.0
        %2077 = vmatprep.subr.mxu0 0.0
        %2078 = vmatpush1.xpose.msra.mxu0 0.0
        %2079 = vmatprep.subr.mxu0 0.0
        %2080 = vmatpush1.xpose.msra.mxu0 0.0
        %2081 = vmatprep.subr.mxu0 0.0
        %2082 = vmatpush1.xpose.msra.mxu0 0.0
        %2083 = vmatprep.subr.mxu0 0.0
        %2084 = vmatpush1.xpose.msra.mxu0 0.0
        %2085 = vmatprep.subr.mxu0 0.0
        %2086 = vmatpush1.xpose.msra.mxu0 0.0
        %2087 = vmatprep.subr.mxu0 0.0
        %2088 = vmatpush1.xpose.msra.mxu0 0.0
        %2089 = vmatprep.subr.mxu0 0.0
        %2090 = vmatpush1.xpose.msra.mxu0 0.0
        %2091 = vmatprep.subr.mxu0 0.0
        %2092 = vmatpush1.xpose.msra.mxu0 0.0
        %2093 = vmatprep.subr.mxu0 0.0
        %2094 = vmatpush1.xpose.msra.mxu0 0.0
        %2095 = vmatprep.subr.mxu0 0.0
        %2096 = vmatpush1.xpose.msra.mxu0 0.0
        %2097 = vmatprep.subr.mxu0 0.0
        %2098 = vmatpush1.xpose.msra.mxu0 0.0
        %2099 = vmatprep.subr.mxu0 0.0
        %2100 = vmatpush1.xpose.msra.mxu0 0.0
        %2101 = vmatprep.subr.mxu0 0.0
        %2102 = vmatpush1.xpose.msra.mxu0 0.0
        %2103 = vmatprep.subr.mxu0 0.0
        %2104 = vmatpush1.xpose.msra.mxu0 0.0
        %2105 = vmatprep.subr.mxu0 0.0
        %2106 = vmatpush1.xpose.msra.mxu0 0.0
        %2107 = vmatprep.subr.mxu0 0.0
        %2108 = vmatpush1.xpose.msra.mxu0 0.0
        %2109 = vmatprep.subr.mxu0 0.0
        %2110 = vmatpush1.xpose.msra.mxu0 0.0
        %2111 = vmatprep.subr.mxu0 0.0
        %2112 = vmatpush1.xpose.msra.mxu0 0.0
        %2113 = vmatprep.mubr.f32.mxu0 0.0
        %2114 = vmatmul.mubr.f32.gmra.mrb[0].mxu0 %v2044
        %v2115 = vpop.f32.mrb[0].mxu0
        %v2116 = vadd.f32 0.0, %v2115
        %v2117 = vpop.f32.mrb[0].mxu0
        %2118 = vdwg.mxu0
        %v2119 = vmul.f32 %v2116, 0.5
        %v2120 = vsel %vm654, %v2119, -inf
        %2121 = vmax.xlane.f32.xlu0 %v2120
        %v2122 = vpop.xlane.xlu0 %2121
        %v2123 = vsub.f32 %v2119, %v2122
        %v2124 = vmul.f32 %v2123, 1.442695
        %v2125 = vpow.pop %v2124
        %v2126 = vsel %vm654, %v2125, 0.0
        %2127 = vadd.xlane.f32.xlu0 %v2126
        %v2128 = vpop.xlane.xlu0 %2127
        %v2129 = vrcp.pop %v2128
        %v2130 = vmul.f32 %v2125, %v2129
        %v2132 = vsel %vm654, %v2130, 0
        %2134 = vmatprep.subr.mxu0 0.0
        %2135 = vmatpush1.msra.mxu0 %v2040
        %2136 = vmatprep.subr.mxu0 0.0
        %2137 = vmatpush1.msra.mxu0 0.0
        %2138 = vmatprep.subr.mxu0 0.0
        %2139 = vmatpush1.msra.mxu0 0.0
        %2140 = vmatprep.subr.mxu0 0.0
        %2141 = vmatpush1.msra.mxu0 0.0
        %2142 = vmatprep.subr.mxu0 0.0
        %2143 = vmatpush1.msra.mxu0 0.0
        %2144 = vmatprep.subr.mxu0 0.0
        %2145 = vmatpush1.msra.mxu0 0.0
        %2146 = vmatprep.subr.mxu0 0.0
        %2147 = vmatpush1.msra.mxu0 0.0
        %2148 = vmatprep.subr.mxu0 0.0
        %2149 = vmatpush1.msra.mxu0 0.0
        %2150 = vmatprep.subr.mxu0 0.0
        %2151 = vmatpush1.msra.mxu0 0.0
        %2152 = vmatprep.subr.mxu0 0.0
        %2153 = vmatpush1.msra.mxu0 0.0
        %2154 = vmatprep.subr.mxu0 0.0
        %2155 = vmatpush1.msra.mxu0 0.0
        %2156 = vmatprep.subr.mxu0 0.0
        %2157 = vmatpush1.msra.mxu0 0.0
        %2158 = vmatprep.subr.mxu0 0.0
        %2159 = vmatpush1.msra.mxu0 0.0
        %2160 = vmatprep.subr.mxu0 0.0
        %2161 = vmatpush1.msra.mxu0 0.0
        %2162 = vmatprep.subr.mxu0 0.0
        %2163 = vmatpush1.msra.mxu0 0.0
        %2164 = vmatprep.subr.mxu0 0.0
        %2165 = vmatpush1.msra.mxu0 0.0
        %2166 = vmatprep.subr.mxu0 0.0
        %2167 = vmatpush1.msra.mxu0 0.0
        %2168 = vmatprep.subr.mxu0 0.0
        %2169 = vmatpush1.msra.mxu0 0.0
        %2170 = vmatprep.subr.mxu0 0.0
        %2171 = vmatpush1.msra.mxu0 0.0
        %2172 = vmatprep.subr.mxu0 0.0
        %2173 = vmatpush1.msra.mxu0 0.0
        %2174 = vmatprep.subr.mxu0 0.0
        %2175 = vmatpush1.msra.mxu0 0.0
        %2176 = vmatprep.subr.mxu0 0.0
        %2177 = vmatpush1.msra.mxu0 0.0
        %2178 = vmatprep.subr.mxu0 0.0
        %2179 = vmatpush1.msra.mxu0 0.0
        %2180 = vmatprep.subr.mxu0 0.0
        %2181 = vmatpush1.msra.mxu0 0.0
        %2182 = vmatprep.subr.mxu0 0.0
        %2183 = vmatpush1.msra.mxu0 0.0
        %2184 = vmatprep.subr.mxu0 0.0
        %2185 = vmatpush1.msra.mxu0 0.0
        %2186 = vmatprep.subr.mxu0 0.0
        %2187 = vmatpush1.msra.mxu0 0.0
        %2188 = vmatprep.subr.mxu0 0.0
        %2189 = vmatpush1.msra.mxu0 0.0
        %2190 = vmatprep.subr.mxu0 0.0
        %2191 = vmatpush1.msra.mxu0 0.0
        %2192 = vmatprep.subr.mxu0 0.0
        %2193 = vmatpush1.msra.mxu0 0.0
        %2194 = vmatprep.subr.mxu0 0.0
        %2195 = vmatpush1.msra.mxu0 0.0
        %2196 = vmatprep.subr.mxu0 0.0
        %2197 = vmatpush1.msra.mxu0 0.0
        %2198 = vmatprep.mubr.f32.mxu0 0.0
        %2199 = vmatmul.mubr.f32.gmra.mrb[0].mxu0 %v2132
        %v2200 = vpop.f32.mrb[0].mxu0
        %v2201 = vadd.f32 0.0, %v2200
        %v2202 = vpop.f32.mrb[0].mxu0
        %2203 = vdwg.mxu0
        %s2204 = scalar_lea.vmem %s7, 12
        %v2205 = vld [vmem:[%s2204] sm:$0xf]
        %v2207 = vsel %vm576, %v2201, 0
        %v2210 = vsel %vm1155, %v2205, 0
        %2212 = vmatprep.subr.mxu0 0.0
        %2213 = vmatpush1.msra.mxu0 %v2210
        %2214 = vmatprep.subr.mxu0 0.0
        %2215 = vmatpush1.msra.mxu0 0.0
        %2216 = vmatprep.subr.mxu0 0.0
        %2217 = vmatpush1.msra.mxu0 0.0
        %2218 = vmatprep.subr.mxu0 0.0
        %2219 = vmatpush1.msra.mxu0 0.0
        %2220 = vmatprep.subr.mxu0 0.0
        %2221 = vmatpush1.msra.mxu0 0.0
        %2222 = vmatprep.subr.mxu0 0.0
        %2223 = vmatpush1.msra.mxu0 0.0
        %2224 = vmatprep.subr.mxu0 0.0
        %2225 = vmatpush1.msra.mxu0 0.0
        %2226 = vmatprep.subr.mxu0 0.0
        %2227 = vmatpush1.msra.mxu0 0.0
        %2228 = vmatprep.subr.mxu0 0.0
        %2229 = vmatpush1.msra.mxu0 0.0
        %2230 = vmatprep.subr.mxu0 0.0
        %2231 = vmatpush1.msra.mxu0 0.0
        %2232 = vmatprep.subr.mxu0 0.0
        %2233 = vmatpush1.msra.mxu0 0.0
        %2234 = vmatprep.subr.mxu0 0.0
        %2235 = vmatpush1.msra.mxu0 0.0
        %2236 = vmatprep.subr.mxu0 0.0
        %2237 = vmatpush1.msra.mxu0 0.0
        %2238 = vmatprep.subr.mxu0 0.0
        %2239 = vmatpush1.msra.mxu0 0.0
        %2240 = vmatprep.subr.mxu0 0.0
        %2241 = vmatpush1.msra.mxu0 0.0
        %2242 = vmatprep.subr.mxu0 0.0
        %2243 = vmatpush1.msra.mxu0 0.0
        %2244 = vmatprep.subr.mxu0 0.0
        %2245 = vmatpush1.msra.mxu0 0.0
        %2246 = vmatprep.subr.mxu0 0.0
        %2247 = vmatpush1.msra.mxu0 0.0
        %2248 = vmatprep.subr.mxu0 0.0
        %2249 = vmatpush1.msra.mxu0 0.0
        %2250 = vmatprep.subr.mxu0 0.0
        %2251 = vmatpush1.msra.mxu0 0.0
        %2252 = vmatprep.subr.mxu0 0.0
        %2253 = vmatpush1.msra.mxu0 0.0
        %2254 = vmatprep.subr.mxu0 0.0
        %2255 = vmatpush1.msra.mxu0 0.0
        %2256 = vmatprep.subr.mxu0 0.0
        %2257 = vmatpush1.msra.mxu0 0.0
        %2258 = vmatprep.subr.mxu0 0.0
        %2259 = vmatpush1.msra.mxu0 0.0
        %2260 = vmatprep.subr.mxu0 0.0
        %2261 = vmatpush1.msra.mxu0 0.0
        %2262 = vmatprep.subr.mxu0 0.0
        %2263 = vmatpush1.msra.mxu0 0.0
        %2264 = vmatprep.subr.mxu0 0.0
        %2265 = vmatpush1.msra.mxu0 0.0
        %2266 = vmatprep.subr.mxu0 0.0
        %2267 = vmatpush1.msra.mxu0 0.0
        %2268 = vmatprep.subr.mxu0 0.0
        %2269 = vmatpush1.msra.mxu0 0.0
        %2270 = vmatprep.subr.mxu0 0.0
        %2271 = vmatpush1.msra.mxu0 0.0
        %2272 = vmatprep.subr.mxu0 0.0
        %2273 = vmatpush1.msra.mxu0 0.0
        %2274 = vmatprep.subr.mxu0 0.0
        %2275 = vmatpush1.msra.mxu0 0.0
        %2276 = vmatprep.mubr.f32.mxu0 0.0
        %2277 = vmatmul.mubr.f32.gmra.mrb[0].mxu0 %v2207
        %v2278 = vpop.f32.mrb[0].mxu0
        %v2279 = vadd.f32 0.0, %v2278
        %v2280 = vpop.f32.mrb[0].mxu0
        %2281 = vdwg.mxu0
        %v2282 = vadd.f32 %v1793, %v2279
        %s2283 = scalar_lea.vmem %s1, 128
        %v2284 = vld [vmem:[%s2283] sm:$0xff]
        %v2285 = vld [vmem:[%s2283 + $0x8] sm:$0xff]
        %v2286 = vld [vmem:[%s2283 + $0x10] sm:$0xff]
        %v2287 = vld [vmem:[%s2283 + $0x18] sm:$0xff]
        %s2288 = scalar_lea.vmem %s4, 4
        %v2289 = vld [vmem:[%s2288] sm:$0x1]
        %v2291 = vlaneseq
        %v2292 = vshrl.u32 %v2291, 7
        %v2293 = vsub.s32 0, %v2292
        %v2294 = vrot.slane %v2289, %v2293
        %2296 = vmatprep.subr.mxu0 0.0
        %2297 = vmatpush1.msra.mxu0 %v2284
        %2298 = vmatprep.subr.mxu0 0.0
        %2299 = vmatpush1.msra.mxu0 %v2285
        %2300 = vmatprep.subr.mxu0 0.0
        %2301 = vmatpush1.msra.mxu0 %v2286
        %2302 = vmatprep.subr.mxu0 0.0
        %2303 = vmatpush1.msra.mxu0 %v2287
        %2304 = vmatprep.subr.mxu0 0.0
        %2305 = vmatpush1.msra.mxu0 0.0
        %2306 = vmatprep.subr.mxu0 0.0
        %2307 = vmatpush1.msra.mxu0 0.0
        %2308 = vmatprep.subr.mxu0 0.0
        %2309 = vmatpush1.msra.mxu0 0.0
        %2310 = vmatprep.subr.mxu0 0.0
        %2311 = vmatpush1.msra.mxu0 0.0
        %2312 = vmatprep.subr.mxu0 0.0
        %2313 = vmatpush1.msra.mxu0 0.0
        %2314 = vmatprep.subr.mxu0 0.0
        %2315 = vmatpush1.msra.mxu0 0.0
        %2316 = vmatprep.subr.mxu0 0.0
        %2317 = vmatpush1.msra.mxu0 0.0
        %2318 = vmatprep.subr.mxu0 0.0
        %2319 = vmatpush1.msra.mxu0 0.0
        %2320 = vmatprep.subr.mxu0 0.0
        %2321 = vmatpush1.msra.mxu0 0.0
        %2322 = vmatprep.subr.mxu0 0.0
        %2323 = vmatpush1.msra.mxu0 0.0
        %2324 = vmatprep.subr.mxu0 0.0
        %2325 = vmatpush1.msra.mxu0 0.0
        %2326 = vmatprep.subr.mxu0 0.0
        %2327 = vmatpush1.msra.mxu0 0.0
        %2328 = vmatprep.subr.mxu0 0.0
        %2329 = vmatpush1.msra.mxu0 0.0
        %2330 = vmatprep.subr.mxu0 0.0
        %2331 = vmatpush1.msra.mxu0 0.0
        %2332 = vmatprep.subr.mxu0 0.0
        %2333 = vmatpush1.msra.mxu0 0.0
        %2334 = vmatprep.subr.mxu0 0.0
        %2335 = vmatpush1.msra.mxu0 0.0
        %2336 = vmatprep.subr.mxu0 0.0
        %2337 = vmatpush1.msra.mxu0 0.0
        %2338 = vmatprep.subr.mxu0 0.0
        %2339 = vmatpush1.msra.mxu0 0.0
        %2340 = vmatprep.subr.mxu0 0.0
        %2341 = vmatpush1.msra.mxu0 0.0
        %2342 = vmatprep.subr.mxu0 0.0
        %2343 = vmatpush1.msra.mxu0 0.0
        %2344 = vmatprep.subr.mxu0 0.0
        %2345 = vmatpush1.msra.mxu0 0.0
        %2346 = vmatprep.subr.mxu0 0.0
        %2347 = vmatpush1.msra.mxu0 0.0
        %2348 = vmatprep.subr.mxu0 0.0
        %2349 = vmatpush1.msra.mxu0 0.0
        %2350 = vmatprep.subr.mxu0 0.0
        %2351 = vmatpush1.msra.mxu0 0.0
        %2352 = vmatprep.subr.mxu0 0.0
        %2353 = vmatpush1.msra.mxu0 0.0
        %2354 = vmatprep.subr.mxu0 0.0
        %2355 = vmatpush1.msra.mxu0 0.0
        %2356 = vmatprep.subr.mxu0 0.0
        %2357 = vmatpush1.msra.mxu0 0.0
        %2358 = vmatprep.subr.mxu0 0.0
        %2359 = vmatpush1.msra.mxu0 0.0
        %2360 = vmatprep.mubr.f32.mxu0 0.0
        %2361 = vmatmul.mubr.f32.gmra.mrb[0].mxu0 %v342
        %v2362 = vpop.f32.mrb[0].mxu0
        %v2363 = vadd.f32 %v2294, %v2362
        %v2364 = vpop.f32.mrb[0].mxu0
        %2365 = vdwg.mxu0
        %s2366 = scalar_lea.vmem %s2, 128
        %v2367 = vld [vmem:[%s2366] sm:$0xff]
        %v2368 = vld [vmem:[%s2366 + $0x8] sm:$0xff]
        %v2369 = vld [vmem:[%s2366 + $0x10] sm:$0xff]
        %v2370 = vld [vmem:[%s2366 + $0x18] sm:$0xff]
        %s2371 = scalar_lea.vmem %s5, 4
        %v2372 = vld [vmem:[%s2371] sm:$0x1]
        %v2374 = vlaneseq
        %v2375 = vshrl.u32 %v2374, 7
        %v2376 = vsub.s32 0, %v2375
        %v2377 = vrot.slane %v2372, %v2376
        %2379 = vmatprep.subr.mxu0 0.0
        %2380 = vmatpush1.msra.mxu0 %v2367
        %2381 = vmatprep.subr.mxu0 0.0
        %2382 = vmatpush1.msra.mxu0 %v2368
        %2383 = vmatprep.subr.mxu0 0.0
        %2384 = vmatpush1.msra.mxu0 %v2369
        %2385 = vmatprep.subr.mxu0 0.0
        %2386 = vmatpush1.msra.mxu0 %v2370
        %2387 = vmatprep.subr.mxu0 0.0
        %2388 = vmatpush1.msra.mxu0 0.0
        %2389 = vmatprep.subr.mxu0 0.0
        %2390 = vmatpush1.msra.mxu0 0.0
        %2391 = vmatprep.subr.mxu0 0.0
        %2392 = vmatpush1.msra.mxu0 0.0
        %2393 = vmatprep.subr.mxu0 0.0
        %2394 = vmatpush1.msra.mxu0 0.0
        %2395 = vmatprep.subr.mxu0 0.0
        %2396 = vmatpush1.msra.mxu0 0.0
        %2397 = vmatprep.subr.mxu0 0.0
        %2398 = vmatpush1.msra.mxu0 0.0
        %2399 = vmatprep.subr.mxu0 0.0
        %2400 = vmatpush1.msra.mxu0 0.0
        %2401 = vmatprep.subr.mxu0 0.0
        %2402 = vmatpush1.msra.mxu0 0.0
        %2403 = vmatprep.subr.mxu0 0.0
        %2404 = vmatpush1.msra.mxu0 0.0
        %2405 = vmatprep.subr.mxu0 0.0
        %2406 = vmatpush1.msra.mxu0 0.0
        %2407 = vmatprep.subr.mxu0 0.0
        %2408 = vmatpush1.msra.mxu0 0.0
        %2409 = vmatprep.subr.mxu0 0.0
        %2410 = vmatpush1.msra.mxu0 0.0
        %2411 = vmatprep.subr.mxu0 0.0
        %2412 = vmatpush1.msra.mxu0 0.0
        %2413 = vmatprep.subr.mxu0 0.0
        %2414 = vmatpush1.msra.mxu0 0.0
        %2415 = vmatprep.subr.mxu0 0.0
        %2416 = vmatpush1.msra.mxu0 0.0
        %2417 = vmatprep.subr.mxu0 0.0
        %2418 = vmatpush1.msra.mxu0 0.0
        %2419 = vmatprep.subr.mxu0 0.0
        %2420 = vmatpush1.msra.mxu0 0.0
        %2421 = vmatprep.subr.mxu0 0.0
        %2422 = vmatpush1.msra.mxu0 0.0
        %2423 = vmatprep.subr.mxu0 0.0
        %2424 = vmatpush1.msra.mxu0 0.0
        %2425 = vmatprep.subr.mxu0 0.0
        %2426 = vmatpush1.msra.mxu0 0.0
        %2427 = vmatprep.subr.mxu0 0.0
        %2428 = vmatpush1.msra.mxu0 0.0
        %2429 = vmatprep.subr.mxu0 0.0
        %2430 = vmatpush1.msra.mxu0 0.0
        %2431 = vmatprep.subr.mxu0 0.0
        %2432 = vmatpush1.msra.mxu0 0.0
        %2433 = vmatprep.subr.mxu0 0.0
        %2434 = vmatpush1.msra.mxu0 0.0
        %2435 = vmatprep.subr.mxu0 0.0
        %2436 = vmatpush1.msra.mxu0 0.0
        %2437 = vmatprep.subr.mxu0 0.0
        %2438 = vmatpush1.msra.mxu0 0.0
        %2439 = vmatprep.subr.mxu0 0.0
        %2440 = vmatpush1.msra.mxu0 0.0
        %2441 = vmatprep.subr.mxu0 0.0
        %2442 = vmatpush1.msra.mxu0 0.0
        %2443 = vmatprep.mubr.f32.mxu0 0.0
        %2444 = vmatmul.mubr.f32.gmra.mrb[0].mxu0 %v342
        %v2445 = vpop.f32.mrb[0].mxu0
        %v2446 = vadd.f32 %v2377, %v2445
        %v2447 = vpop.f32.mrb[0].mxu0
        %2448 = vdwg.mxu0
        %s2449 = scalar_lea.vmem %s3, 128
        %v2450 = vld [vmem:[%s2449] sm:$0xff]
        %v2451 = vld [vmem:[%s2449 + $0x8] sm:$0xff]
        %v2452 = vld [vmem:[%s2449 + $0x10] sm:$0xff]
        %v2453 = vld [vmem:[%s2449 + $0x18] sm:$0xff]
        %s2454 = scalar_lea.vmem %s6, 4
        %v2455 = vld [vmem:[%s2454] sm:$0x1]
        %v2457 = vlaneseq
        %v2458 = vshrl.u32 %v2457, 7
        %v2459 = vsub.s32 0, %v2458
        %v2460 = vrot.slane %v2455, %v2459
        %2462 = vmatprep.subr.mxu0 0.0
        %2463 = vmatpush1.msra.mxu0 %v2450
        %2464 = vmatprep.subr.mxu0 0.0
        %2465 = vmatpush1.msra.mxu0 %v2451
        %2466 = vmatprep.subr.mxu0 0.0
        %2467 = vmatpush1.msra.mxu0 %v2452
        %2468 = vmatprep.subr.mxu0 0.0
        %2469 = vmatpush1.msra.mxu0 %v2453
        %2470 = vmatprep.subr.mxu0 0.0
        %2471 = vmatpush1.msra.mxu0 0.0
        %2472 = vmatprep.subr.mxu0 0.0
        %2473 = vmatpush1.msra.mxu0 0.0
        %2474 = vmatprep.subr.mxu0 0.0
        %2475 = vmatpush1.msra.mxu0 0.0
        %2476 = vmatprep.subr.mxu0 0.0
        %2477 = vmatpush1.msra.mxu0 0.0
        %2478 = vmatprep.subr.mxu0 0.0
        %2479 = vmatpush1.msra.mxu0 0.0
        %2480 = vmatprep.subr.mxu0 0.0
        %2481 = vmatpush1.msra.mxu0 0.0
        %2482 = vmatprep.subr.mxu0 0.0
        %2483 = vmatpush1.msra.mxu0 0.0
        %2484 = vmatprep.subr.mxu0 0.0
        %2485 = vmatpush1.msra.mxu0 0.0
        %2486 = vmatprep.subr.mxu0 0.0
        %2487 = vmatpush1.msra.mxu0 0.0
        %2488 = vmatprep.subr.mxu0 0.0
        %2489 = vmatpush1.msra.mxu0 0.0
        %2490 = vmatprep.subr.mxu0 0.0
        %2491 = vmatpush1.msra.mxu0 0.0
        %2492 = vmatprep.subr.mxu0 0.0
        %2493 = vmatpush1.msra.mxu0 0.0
        %2494 = vmatprep.subr.mxu0 0.0
        %2495 = vmatpush1.msra.mxu0 0.0
        %2496 = vmatprep.subr.mxu0 0.0
        %2497 = vmatpush1.msra.mxu0 0.0
        %2498 = vmatprep.subr.mxu0 0.0
        %2499 = vmatpush1.msra.mxu0 0.0
        %2500 = vmatprep.subr.mxu0 0.0
        %2501 = vmatpush1.msra.mxu0 0.0
        %2502 = vmatprep.subr.mxu0 0.0
        %2503 = vmatpush1.msra.mxu0 0.0
        %2504 = vmatprep.subr.mxu0 0.0
        %2505 = vmatpush1.msra.mxu0 0.0
        %2506 = vmatprep.subr.mxu0 0.0
        %2507 = vmatpush1.msra.mxu0 0.0
        %2508 = vmatprep.subr.mxu0 0.0
        %2509 = vmatpush1.msra.mxu0 0.0
        %2510 = vmatprep.subr.mxu0 0.0
        %2511 = vmatpush1.msra.mxu0 0.0
        %2512 = vmatprep.subr.mxu0 0.0
        %2513 = vmatpush1.msra.mxu0 0.0
        %2514 = vmatprep.subr.mxu0 0.0
        %2515 = vmatpush1.msra.mxu0 0.0
        %2516 = vmatprep.subr.mxu0 0.0
        %2517 = vmatpush1.msra.mxu0 0.0
        %2518 = vmatprep.subr.mxu0 0.0
        %2519 = vmatpush1.msra.mxu0 0.0
        %2520 = vmatprep.subr.mxu0 0.0
        %2521 = vmatpush1.msra.mxu0 0.0
        %2522 = vmatprep.subr.mxu0 0.0
        %2523 = vmatpush1.msra.mxu0 0.0
        %2524 = vmatprep.subr.mxu0 0.0
        %2525 = vmatpush1.msra.mxu0 0.0
        %2526 = vmatprep.mubr.f32.mxu0 0.0
        %2527 = vmatmul.mubr.f32.gmra.mrb[0].mxu0 %v342
        %v2528 = vpop.f32.mrb[0].mxu0
        %v2529 = vadd.f32 %v2460, %v2528
        %v2530 = vpop.f32.mrb[0].mxu0
        %2531 = vdwg.mxu0
        %v2533 = vsel %vm576, %v2363, 0
        %v2536 = vsel %vm576, %v2446, 0
        %2538 = vmatprep.subr.mxu0 0.0
        %2539 = vmatpush1.xpose.msra.mxu0 %v2536
        %2540 = vmatprep.subr.mxu0 0.0
        %2541 = vmatpush1.xpose.msra.mxu0 0.0
        %2542 = vmatprep.subr.mxu0 0.0
        %2543 = vmatpush1.xpose.msra.mxu0 0.0
        %2544 = vmatprep.subr.mxu0 0.0
        %2545 = vmatpush1.xpose.msra.mxu0 0.0
        %2546 = vmatprep.subr.mxu0 0.0
        %2547 = vmatpush1.xpose.msra.mxu0 0.0
        %2548 = vmatprep.subr.mxu0 0.0
        %2549 = vmatpush1.xpose.msra.mxu0 0.0
        %2550 = vmatprep.subr.mxu0 0.0
        %2551 = vmatpush1.xpose.msra.mxu0 0.0
        %2552 = vmatprep.subr.mxu0 0.0
        %2553 = vmatpush1.xpose.msra.mxu0 0.0
        %2554 = vmatprep.subr.mxu0 0.0
        %2555 = vmatpush1.xpose.msra.mxu0 0.0
        %2556 = vmatprep.subr.mxu0 0.0
        %2557 = vmatpush1.xpose.msra.mxu0 0.0
        %2558 = vmatprep.subr.mxu0 0.0
        %2559 = vmatpush1.xpose.msra.mxu0 0.0
        %2560 = vmatprep.subr.mxu0 0.0
        %2561 = vmatpush1.xpose.msra.mxu0 0.0
        %2562 = vmatprep.subr.mxu0 0.0
        %2563 = vmatpush1.xpose.msra.mxu0 0.0
        %2564 = vmatprep.subr.mxu0 0.0
        %2565 = vmatpush1.xpose.msra.mxu0 0.0
        %2566 = vmatprep.subr.mxu0 0.0
        %2567 = vmatpush1.xpose.msra.mxu0 0.0
        %2568 = vmatprep.subr.mxu0 0.0
        %2569 = vmatpush1.xpose.msra.mxu0 0.0
        %2570 = vmatprep.subr.mxu0 0.0
        %2571 = vmatpush1.xpose.msra.mxu0 0.0
        %2572 = vmatprep.subr.mxu0 0.0
        %2573 = vmatpush1.xpose.msra.mxu0 0.0
        %2574 = vmatprep.subr.mxu0 0.0
        %2575 = vmatpush1.xpose.msra.mxu0 0.0
        %2576 = vmatprep.subr.mxu0 0.0
        %2577 = vmatpush1.xpose.msra.mxu0 0.0
        %2578 = vmatprep.subr.mxu0 0.0
        %2579 = vmatpush1.xpose.msra.mxu0 0.0
        %2580 = vmatprep.subr.mxu0 0.0
        %2581 = vmatpush1.xpose.msra.mxu0 0.0
        %2582 = vmatprep.subr.mxu0 0.0
        %2583 = vmatpush1.xpose.msra.mxu0 0.0
        %2584 = vmatprep.subr.mxu0 0.0
        %2585 = vmatpush1.xpose.msra.mxu0 0.0
        %2586 = vmatprep.subr.mxu0 0.0
        %2587 = vmatpush1.xpose.msra.mxu0 0.0
        %2588 = vmatprep.subr.mxu0 0.0
        %2589 = vmatpush1.xpose.msra.mxu0 0.0
        %2590 = vmatprep.subr.mxu0 0.0
        %2591 = vmatpush1.xpose.msra.mxu0 0.0
        %2592 = vmatprep.subr.mxu0 0.0
        %2593 = vmatpush1.xpose.msra.mxu0 0.0
        %2594 = vmatprep.subr.mxu0 0.0
        %2595 = vmatpush1.xpose.msra.mxu0 0.0
        %2596 = vmatprep.subr.mxu0 0.0
        %2597 = vmatpush1.xpose.msra.mxu0 0.0
        %2598 = vmatprep.subr.mxu0 0.0
        %2599 = vmatpush1.xpose.msra.mxu0 0.0
        %2600 = vmatprep.subr.mxu0 0.0
        %2601 = vmatpush1.xpose.msra.mxu0 0.0
        %2602 = vmatprep.mubr.f32.mxu0 0.0
        %2603 = vmatmul.mubr.f32.gmra.mrb[0].mxu0 %v2533
        %v2604 = vpop.f32.mrb[0].mxu0
        %v2605 = vadd.f32 0.0, %v2604
        %v2606 = vpop.f32.mrb[0].mxu0
        %2607 = vdwg.mxu0
        %v2608 = vmul.f32 %v2605, 0.5
        %v2609 = vsel %vm654, %v2608, -inf
        %2610 = vmax.xlane.f32.xlu0 %v2609
        %v2611 = vpop.xlane.xlu0 %2610
        %v2612 = vsub.f32 %v2608, %v2611
        %v2613 = vmul.f32 %v2612, 1.442695
        %v2614 = vpow.pop %v2613
        %v2615 = vsel %vm654, %v2614, 0.0
        %2616 = vadd.xlane.f32.xlu0 %v2615
        %v2617 = vpop.xlane.xlu0 %2616
        %v2618 = vrcp.pop %v2617
        %v2619 = vmul.f32 %v2614, %v2618
        %v2621 = vsel %vm654, %v2619, 0
        %2623 = vmatprep.subr.mxu0 0.0
        %2624 = vmatpush1.msra.mxu0 %v2529
        %2625 = vmatprep.subr.mxu0 0.0
        %2626 = vmatpush1.msra.mxu0 0.0
        %2627 = vmatprep.subr.mxu0 0.0
        %2628 = vmatpush1.msra.mxu0 0.0
        %2629 = vmatprep.subr.mxu0 0.0
        %2630 = vmatpush1.msra.mxu0 0.0
        %2631 = vmatprep.subr.mxu0 0.0
        %2632 = vmatpush1.msra.mxu0 0.0
        %2633 = vmatprep.subr.mxu0 0.0
        %2634 = vmatpush1.msra.mxu0 0.0
        %2635 = vmatprep.subr.mxu0 0.0
        %2636 = vmatpush1.msra.mxu0 0.0
        %2637 = vmatprep.subr.mxu0 0.0
        %2638 = vmatpush1.msra.mxu0 0.0
        %2639 = vmatprep.subr.mxu0 0.0
        %2640 = vmatpush1.msra.mxu0 0.0
        %2641 = vmatprep.subr.mxu0 0.0
        %2642 = vmatpush1.msra.mxu0 0.0
        %2643 = vmatprep.subr.mxu0 0.0
        %2644 = vmatpush1.msra.mxu0 0.0
        %2645 = vmatprep.subr.mxu0 0.0
        %2646 = vmatpush1.msra.mxu0 0.0
        %2647 = vmatprep.subr.mxu0 0.0
        %2648 = vmatpush1.msra.mxu0 0.0
        %2649 = vmatprep.subr.mxu0 0.0
        %2650 = vmatpush1.msra.mxu0 0.0
        %2651 = vmatprep.subr.mxu0 0.0
        %2652 = vmatpush1.msra.mxu0 0.0
        %2653 = vmatprep.subr.mxu0 0.0
        %2654 = vmatpush1.msra.mxu0 0.0
        %2655 = vmatprep.subr.mxu0 0.0
        %2656 = vmatpush1.msra.mxu0 0.0
        %2657 = vmatprep.subr.mxu0 0.0
        %2658 = vmatpush1.msra.mxu0 0.0
        %2659 = vmatprep.subr.mxu0 0.0
        %2660 = vmatpush1.msra.mxu0 0.0
        %2661 = vmatprep.subr.mxu0 0.0
        %2662 = vmatpush1.msra.mxu0 0.0
        %2663 = vmatprep.subr.mxu0 0.0
        %2664 = vmatpush1.msra.mxu0 0.0
        %2665 = vmatprep.subr.mxu0 0.0
        %2666 = vmatpush1.msra.mxu0 0.0
        %2667 = vmatprep.subr.mxu0 0.0
        %2668 = vmatpush1.msra.mxu0 0.0
        %2669 = vmatprep.subr.mxu0 0.0
        %2670 = vmatpush1.msra.mxu0 0.0
        %2671 = vmatprep.subr.mxu0 0.0
        %2672 = vmatpush1.msra.mxu0 0.0
        %2673 = vmatprep.subr.mxu0 0.0
        %2674 = vmatpush1.msra.mxu0 0.0
        %2675 = vmatprep.subr.mxu0 0.0
        %2676 = vmatpush1.msra.mxu0 0.0
        %2677 = vmatprep.subr.mxu0 0.0
        %2678 = vmatpush1.msra.mxu0 0.0
        %2679 = vmatprep.subr.mxu0 0.0
        %2680 = vmatpush1.msra.mxu0 0.0
        %2681 = vmatprep.subr.mxu0 0.0
        %2682 = vmatpush1.msra.mxu0 0.0
        %2683 = vmatprep.subr.mxu0 0.0
        %2684 = vmatpush1.msra.mxu0 0.0
        %2685 = vmatprep.subr.mxu0 0.0
        %2686 = vmatpush1.msra.mxu0 0.0
        %2687 = vmatprep.mubr.f32.mxu0 0.0
        %2688 = vmatmul.mubr.f32.gmra.mrb[0].mxu0 %v2621
        %v2689 = vpop.f32.mrb[0].mxu0
        %v2690 = vadd.f32 0.0, %v2689
        %v2691 = vpop.f32.mrb[0].mxu0
        %2692 = vdwg.mxu0
        %s2693 = scalar_lea.vmem %s7, 16
        %v2694 = vld [vmem:[%s2693] sm:$0xf]
        %v2696 = vsel %vm576, %v2690, 0
        %v2699 = vsel %vm1155, %v2694, 0
        %2701 = vmatprep.subr.mxu0 0.0
        %2702 = vmatpush1.msra.mxu0 %v2699
        %2703 = vmatprep.subr.mxu0 0.0
        %2704 = vmatpush1.msra.mxu0 0.0
        %2705 = vmatprep.subr.mxu0 0.0
        %2706 = vmatpush1.msra.mxu0 0.0
        %2707 = vmatprep.subr.mxu0 0.0
        %2708 = vmatpush1.msra.mxu0 0.0
        %2709 = vmatprep.subr.mxu0 0.0
        %2710 = vmatpush1.msra.mxu0 0.0
        %2711 = vmatprep.subr.mxu0 0.0
        %2712 = vmatpush1.msra.mxu0 0.0
        %2713 = vmatprep.subr.mxu0 0.0
        %2714 = vmatpush1.msra.mxu0 0.0
        %2715 = vmatprep.subr.mxu0 0.0
        %2716 = vmatpush1.msra.mxu0 0.0
        %2717 = vmatprep.subr.mxu0 0.0
        %2718 = vmatpush1.msra.mxu0 0.0
        %2719 = vmatprep.subr.mxu0 0.0
        %2720 = vmatpush1.msra.mxu0 0.0
        %2721 = vmatprep.subr.mxu0 0.0
        %2722 = vmatpush1.msra.mxu0 0.0
        %2723 = vmatprep.subr.mxu0 0.0
        %2724 = vmatpush1.msra.mxu0 0.0
        %2725 = vmatprep.subr.mxu0 0.0
        %2726 = vmatpush1.msra.mxu0 0.0
        %2727 = vmatprep.subr.mxu0 0.0
        %2728 = vmatpush1.msra.mxu0 0.0
        %2729 = vmatprep.subr.mxu0 0.0
        %2730 = vmatpush1.msra.mxu0 0.0
        %2731 = vmatprep.subr.mxu0 0.0
        %2732 = vmatpush1.msra.mxu0 0.0
        %2733 = vmatprep.subr.mxu0 0.0
        %2734 = vmatpush1.msra.mxu0 0.0
        %2735 = vmatprep.subr.mxu0 0.0
        %2736 = vmatpush1.msra.mxu0 0.0
        %2737 = vmatprep.subr.mxu0 0.0
        %2738 = vmatpush1.msra.mxu0 0.0
        %2739 = vmatprep.subr.mxu0 0.0
        %2740 = vmatpush1.msra.mxu0 0.0
        %2741 = vmatprep.subr.mxu0 0.0
        %2742 = vmatpush1.msra.mxu0 0.0
        %2743 = vmatprep.subr.mxu0 0.0
        %2744 = vmatpush1.msra.mxu0 0.0
        %2745 = vmatprep.subr.mxu0 0.0
        %2746 = vmatpush1.msra.mxu0 0.0
        %2747 = vmatprep.subr.mxu0 0.0
        %2748 = vmatpush1.msra.mxu0 0.0
        %2749 = vmatprep.subr.mxu0 0.0
        %2750 = vmatpush1.msra.mxu0 0.0
        %2751 = vmatprep.subr.mxu0 0.0
        %2752 = vmatpush1.msra.mxu0 0.0
        %2753 = vmatprep.subr.mxu0 0.0
        %2754 = vmatpush1.msra.mxu0 0.0
        %2755 = vmatprep.subr.mxu0 0.0
        %2756 = vmatpush1.msra.mxu0 0.0
        %2757 = vmatprep.subr.mxu0 0.0
        %2758 = vmatpush1.msra.mxu0 0.0
        %2759 = vmatprep.subr.mxu0 0.0
        %2760 = vmatpush1.msra.mxu0 0.0
        %2761 = vmatprep.subr.mxu0 0.0
        %2762 = vmatpush1.msra.mxu0 0.0
        %2763 = vmatprep.subr.mxu0 0.0
        %2764 = vmatpush1.msra.mxu0 0.0
        %2765 = vmatprep.mubr.f32.mxu0 0.0
        %2766 = vmatmul.mubr.f32.gmra.mrb[0].mxu0 %v2696
        %v2767 = vpop.f32.mrb[0].mxu0
        %v2768 = vadd.f32 0.0, %v2767
        %v2769 = vpop.f32.mrb[0].mxu0
        %2770 = vdwg.mxu0
        %v2771 = vadd.f32 %v2282, %v2768
        %s2772 = scalar_lea.vmem %s1, 160
        %v2773 = vld [vmem:[%s2772] sm:$0xff]
        %v2774 = vld [vmem:[%s2772 + $0x8] sm:$0xff]
        %v2775 = vld [vmem:[%s2772 + $0x10] sm:$0xff]
        %v2776 = vld [vmem:[%s2772 + $0x18] sm:$0xff]
        %s2777 = scalar_lea.vmem %s4, 5
        %v2778 = vld [vmem:[%s2777] sm:$0x1]
        %v2780 = vlaneseq
        %v2781 = vshrl.u32 %v2780, 7
        %v2782 = vsub.s32 0, %v2781
        %v2783 = vrot.slane %v2778, %v2782
        %2785 = vmatprep.subr.mxu0 0.0
        %2786 = vmatpush1.msra.mxu0 %v2773
        %2787 = vmatprep.subr.mxu0 0.0
        %2788 = vmatpush1.msra.mxu0 %v2774
        %2789 = vmatprep.subr.mxu0 0.0
        %2790 = vmatpush1.msra.mxu0 %v2775
        %2791 = vmatprep.subr.mxu0 0.0
        %2792 = vmatpush1.msra.mxu0 %v2776
        %2793 = vmatprep.subr.mxu0 0.0
        %2794 = vmatpush1.msra.mxu0 0.0
        %2795 = vmatprep.subr.mxu0 0.0
        %2796 = vmatpush1.msra.mxu0 0.0
        %2797 = vmatprep.subr.mxu0 0.0
        %2798 = vmatpush1.msra.mxu0 0.0
        %2799 = vmatprep.subr.mxu0 0.0
        %2800 = vmatpush1.msra.mxu0 0.0
        %2801 = vmatprep.subr.mxu0 0.0
        %2802 = vmatpush1.msra.mxu0 0.0
        %2803 = vmatprep.subr.mxu0 0.0
        %2804 = vmatpush1.msra.mxu0 0.0
        %2805 = vmatprep.subr.mxu0 0.0
        %2806 = vmatpush1.msra.mxu0 0.0
        %2807 = vmatprep.subr.mxu0 0.0
        %2808 = vmatpush1.msra.mxu0 0.0
        %2809 = vmatprep.subr.mxu0 0.0
        %2810 = vmatpush1.msra.mxu0 0.0
        %2811 = vmatprep.subr.mxu0 0.0
        %2812 = vmatpush1.msra.mxu0 0.0
        %2813 = vmatprep.subr.mxu0 0.0
        %2814 = vmatpush1.msra.mxu0 0.0
        %2815 = vmatprep.subr.mxu0 0.0
        %2816 = vmatpush1.msra.mxu0 0.0
        %2817 = vmatprep.subr.mxu0 0.0
        %2818 = vmatpush1.msra.mxu0 0.0
        %2819 = vmatprep.subr.mxu0 0.0
        %2820 = vmatpush1.msra.mxu0 0.0
        %2821 = vmatprep.subr.mxu0 0.0
        %2822 = vmatpush1.msra.mxu0 0.0
        %2823 = vmatprep.subr.mxu0 0.0
        %2824 = vmatpush1.msra.mxu0 0.0
        %2825 = vmatprep.subr.mxu0 0.0
        %2826 = vmatpush1.msra.mxu0 0.0
        %2827 = vmatprep.subr.mxu0 0.0
        %2828 = vmatpush1.msra.mxu0 0.0
        %2829 = vmatprep.subr.mxu0 0.0
        %2830 = vmatpush1.msra.mxu0 0.0
        %2831 = vmatprep.subr.mxu0 0.0
        %2832 = vmatpush1.msra.mxu0 0.0
        %2833 = vmatprep.subr.mxu0 0.0
        %2834 = vmatpush1.msra.mxu0 0.0
        %2835 = vmatprep.subr.mxu0 0.0
        %2836 = vmatpush1.msra.mxu0 0.0
        %2837 = vmatprep.subr.mxu0 0.0
        %2838 = vmatpush1.msra.mxu0 0.0
        %2839 = vmatprep.subr.mxu0 0.0
        %2840 = vmatpush1.msra.mxu0 0.0
        %2841 = vmatprep.subr.mxu0 0.0
        %2842 = vmatpush1.msra.mxu0 0.0
        %2843 = vmatprep.subr.mxu0 0.0
        %2844 = vmatpush1.msra.mxu0 0.0
        %2845 = vmatprep.subr.mxu0 0.0
        %2846 = vmatpush1.msra.mxu0 0.0
        %2847 = vmatprep.subr.mxu0 0.0
        %2848 = vmatpush1.msra.mxu0 0.0
        %2849 = vmatprep.mubr.f32.mxu0 0.0
        %2850 = vmatmul.mubr.f32.gmra.mrb[0].mxu0 %v342
        %v2851 = vpop.f32.mrb[0].mxu0
        %v2852 = vadd.f32 %v2783, %v2851
        %v2853 = vpop.f32.mrb[0].mxu0
        %2854 = vdwg.mxu0
        %s2855 = scalar_lea.vmem %s2, 160
        %v2856 = vld [vmem:[%s2855] sm:$0xff]
        %v2857 = vld [vmem:[%s2855 + $0x8] sm:$0xff]
        %v2858 = vld [vmem:[%s2855 + $0x10] sm:$0xff]
        %v2859 = vld [vmem:[%s2855 + $0x18] sm:$0xff]
        %s2860 = scalar_lea.vmem %s5, 5
        %v2861 = vld [vmem:[%s2860] sm:$0x1]
        %v2863 = vlaneseq
        %v2864 = vshrl.u32 %v2863, 7
        %v2865 = vsub.s32 0, %v2864
        %v2866 = vrot.slane %v2861, %v2865
        %2868 = vmatprep.subr.mxu0 0.0
        %2869 = vmatpush1.msra.mxu0 %v2856
        %2870 = vmatprep.subr.mxu0 0.0
        %2871 = vmatpush1.msra.mxu0 %v2857
        %2872 = vmatprep.subr.mxu0 0.0
        %2873 = vmatpush1.msra.mxu0 %v2858
        %2874 = vmatprep.subr.mxu0 0.0
        %2875 = vmatpush1.msra.mxu0 %v2859
        %2876 = vmatprep.subr.mxu0 0.0
        %2877 = vmatpush1.msra.mxu0 0.0
        %2878 = vmatprep.subr.mxu0 0.0
        %2879 = vmatpush1.msra.mxu0 0.0
        %2880 = vmatprep.subr.mxu0 0.0
        %2881 = vmatpush1.msra.mxu0 0.0
        %2882 = vmatprep.subr.mxu0 0.0
        %2883 = vmatpush1.msra.mxu0 0.0
        %2884 = vmatprep.subr.mxu0 0.0
        %2885 = vmatpush1.msra.mxu0 0.0
        %2886 = vmatprep.subr.mxu0 0.0
        %2887 = vmatpush1.msra.mxu0 0.0
        %2888 = vmatprep.subr.mxu0 0.0
        %2889 = vmatpush1.msra.mxu0 0.0
        %2890 = vmatprep.subr.mxu0 0.0
        %2891 = vmatpush1.msra.mxu0 0.0
        %2892 = vmatprep.subr.mxu0 0.0
        %2893 = vmatpush1.msra.mxu0 0.0
        %2894 = vmatprep.subr.mxu0 0.0
        %2895 = vmatpush1.msra.mxu0 0.0
        %2896 = vmatprep.subr.mxu0 0.0
        %2897 = vmatpush1.msra.mxu0 0.0
        %2898 = vmatprep.subr.mxu0 0.0
        %2899 = vmatpush1.msra.mxu0 0.0
        %2900 = vmatprep.subr.mxu0 0.0
        %2901 = vmatpush1.msra.mxu0 0.0
        %2902 = vmatprep.subr.mxu0 0.0
        %2903 = vmatpush1.msra.mxu0 0.0
        %2904 = vmatprep.subr.mxu0 0.0
        %2905 = vmatpush1.msra.mxu0 0.0
        %2906 = vmatprep.subr.mxu0 0.0
        %2907 = vmatpush1.msra.mxu0 0.0
        %2908 = vmatprep.subr.mxu0 0.0
        %2909 = vmatpush1.msra.mxu0 0.0
        %2910 = vmatprep.subr.mxu0 0.0
        %2911 = vmatpush1.msra.mxu0 0.0
        %2912 = vmatprep.subr.mxu0 0.0
        %2913 = vmatpush1.msra.mxu0 0.0
        %2914 = vmatprep.subr.mxu0 0.0
        %2915 = vmatpush1.msra.mxu0 0.0
        %2916 = vmatprep.subr.mxu0 0.0
        %2917 = vmatpush1.msra.mxu0 0.0
        %2918 = vmatprep.subr.mxu0 0.0
        %2919 = vmatpush1.msra.mxu0 0.0
        %2920 = vmatprep.subr.mxu0 0.0
        %2921 = vmatpush1.msra.mxu0 0.0
        %2922 = vmatprep.subr.mxu0 0.0
        %2923 = vmatpush1.msra.mxu0 0.0
        %2924 = vmatprep.subr.mxu0 0.0
        %2925 = vmatpush1.msra.mxu0 0.0
        %2926 = vmatprep.subr.mxu0 0.0
        %2927 = vmatpush1.msra.mxu0 0.0
        %2928 = vmatprep.subr.mxu0 0.0
        %2929 = vmatpush1.msra.mxu0 0.0
        %2930 = vmatprep.subr.mxu0 0.0
        %2931 = vmatpush1.msra.mxu0 0.0
        %2932 = vmatprep.mubr.f32.mxu0 0.0
        %2933 = vmatmul.mubr.f32.gmra.mrb[0].mxu0 %v342
        %v2934 = vpop.f32.mrb[0].mxu0
        %v2935 = vadd.f32 %v2866, %v2934
        %v2936 = vpop.f32.mrb[0].mxu0
        %2937 = vdwg.mxu0
        %s2938 = scalar_lea.vmem %s3, 160
        %v2939 = vld [vmem:[%s2938] sm:$0xff]
        %v2940 = vld [vmem:[%s2938 + $0x8] sm:$0xff]
        %v2941 = vld [vmem:[%s2938 + $0x10] sm:$0xff]
        %v2942 = vld [vmem:[%s2938 + $0x18] sm:$0xff]
        %s2943 = scalar_lea.vmem %s6, 5
        %v2944 = vld [vmem:[%s2943] sm:$0x1]
        %v2946 = vlaneseq
        %v2947 = vshrl.u32 %v2946, 7
        %v2948 = vsub.s32 0, %v2947
        %v2949 = vrot.slane %v2944, %v2948
        %2951 = vmatprep.subr.mxu0 0.0
        %2952 = vmatpush1.msra.mxu0 %v2939
        %2953 = vmatprep.subr.mxu0 0.0
        %2954 = vmatpush1.msra.mxu0 %v2940
        %2955 = vmatprep.subr.mxu0 0.0
        %2956 = vmatpush1.msra.mxu0 %v2941
        %2957 = vmatprep.subr.mxu0 0.0
        %2958 = vmatpush1.msra.mxu0 %v2942
        %2959 = vmatprep.subr.mxu0 0.0
        %2960 = vmatpush1.msra.mxu0 0.0
        %2961 = vmatprep.subr.mxu0 0.0
        %2962 = vmatpush1.msra.mxu0 0.0
        %2963 = vmatprep.subr.mxu0 0.0
        %2964 = vmatpush1.msra.mxu0 0.0
        %2965 = vmatprep.subr.mxu0 0.0
        %2966 = vmatpush1.msra.mxu0 0.0
        %2967 = vmatprep.subr.mxu0 0.0
        %2968 = vmatpush1.msra.mxu0 0.0
        %2969 = vmatprep.subr.mxu0 0.0
        %2970 = vmatpush1.msra.mxu0 0.0
        %2971 = vmatprep.subr.mxu0 0.0
        %2972 = vmatpush1.msra.mxu0 0.0
        %2973 = vmatprep.subr.mxu0 0.0
        %2974 = vmatpush1.msra.mxu0 0.0
        %2975 = vmatprep.subr.mxu0 0.0
        %2976 = vmatpush1.msra.mxu0 0.0
        %2977 = vmatprep.subr.mxu0 0.0
        %2978 = vmatpush1.msra.mxu0 0.0
        %2979 = vmatprep.subr.mxu0 0.0
        %2980 = vmatpush1.msra.mxu0 0.0
        %2981 = vmatprep.subr.mxu0 0.0
        %2982 = vmatpush1.msra.mxu0 0.0
        %2983 = vmatprep.subr.mxu0 0.0
        %2984 = vmatpush1.msra.mxu0 0.0
        %2985 = vmatprep.subr.mxu0 0.0
        %2986 = vmatpush1.msra.mxu0 0.0
        %2987 = vmatprep.subr.mxu0 0.0
        %2988 = vmatpush1.msra.mxu0 0.0
        %2989 = vmatprep.subr.mxu0 0.0
        %2990 = vmatpush1.msra.mxu0 0.0
        %2991 = vmatprep.subr.mxu0 0.0
        %2992 = vmatpush1.msra.mxu0 0.0
        %2993 = vmatprep.subr.mxu0 0.0
        %2994 = vmatpush1.msra.mxu0 0.0
        %2995 = vmatprep.subr.mxu0 0.0
        %2996 = vmatpush1.msra.mxu0 0.0
        %2997 = vmatprep.subr.mxu0 0.0
        %2998 = vmatpush1.msra.mxu0 0.0
        %2999 = vmatprep.subr.mxu0 0.0
        %3000 = vmatpush1.msra.mxu0 0.0
        %3001 = vmatprep.subr.mxu0 0.0
        %3002 = vmatpush1.msra.mxu0 0.0
        %3003 = vmatprep.subr.mxu0 0.0
        %3004 = vmatpush1.msra.mxu0 0.0
        %3005 = vmatprep.subr.mxu0 0.0
        %3006 = vmatpush1.msra.mxu0 0.0
        %3007 = vmatprep.subr.mxu0 0.0
        %3008 = vmatpush1.msra.mxu0 0.0
        %3009 = vmatprep.subr.mxu0 0.0
        %3010 = vmatpush1.msra.mxu0 0.0
        %3011 = vmatprep.subr.mxu0 0.0
        %3012 = vmatpush1.msra.mxu0 0.0
        %3013 = vmatprep.subr.mxu0 0.0
        %3014 = vmatpush1.msra.mxu0 0.0
        %3015 = vmatprep.mubr.f32.mxu0 0.0
        %3016 = vmatmul.mubr.f32.gmra.mrb[0].mxu0 %v342
        %v3017 = vpop.f32.mrb[0].mxu0
        %v3018 = vadd.f32 %v2949, %v3017
        %v3019 = vpop.f32.mrb[0].mxu0
        %3020 = vdwg.mxu0
        %v3022 = vsel %vm576, %v2852, 0
        %v3025 = vsel %vm576, %v2935, 0
        %3027 = vmatprep.subr.mxu0 0.0
        %3028 = vmatpush1.xpose.msra.mxu0 %v3025
        %3029 = vmatprep.subr.mxu0 0.0
        %3030 = vmatpush1.xpose.msra.mxu0 0.0
        %3031 = vmatprep.subr.mxu0 0.0
        %3032 = vmatpush1.xpose.msra.mxu0 0.0
        %3033 = vmatprep.subr.mxu0 0.0
        %3034 = vmatpush1.xpose.msra.mxu0 0.0
        %3035 = vmatprep.subr.mxu0 0.0
        %3036 = vmatpush1.xpose.msra.mxu0 0.0
        %3037 = vmatprep.subr.mxu0 0.0
        %3038 = vmatpush1.xpose.msra.mxu0 0.0
        %3039 = vmatprep.subr.mxu0 0.0
        %3040 = vmatpush1.xpose.msra.mxu0 0.0
        %3041 = vmatprep.subr.mxu0 0.0
        %3042 = vmatpush1.xpose.msra.mxu0 0.0
        %3043 = vmatprep.subr.mxu0 0.0
        %3044 = vmatpush1.xpose.msra.mxu0 0.0
        %3045 = vmatprep.subr.mxu0 0.0
        %3046 = vmatpush1.xpose.msra.mxu0 0.0
        %3047 = vmatprep.subr.mxu0 0.0
        %3048 = vmatpush1.xpose.msra.mxu0 0.0
        %3049 = vmatprep.subr.mxu0 0.0
        %3050 = vmatpush1.xpose.msra.mxu0 0.0
        %3051 = vmatprep.subr.mxu0 0.0
        %3052 = vmatpush1.xpose.msra.mxu0 0.0
        %3053 = vmatprep.subr.mxu0 0.0
        %3054 = vmatpush1.xpose.msra.mxu0 0.0
        %3055 = vmatprep.subr.mxu0 0.0
        %3056 = vmatpush1.xpose.msra.mxu0 0.0
        %3057 = vmatprep.subr.mxu0 0.0
        %3058 = vmatpush1.xpose.msra.mxu0 0.0
        %3059 = vmatprep.subr.mxu0 0.0
        %3060 = vmatpush1.xpose.msra.mxu0 0.0
        %3061 = vmatprep.subr.mxu0 0.0
        %3062 = vmatpush1.xpose.msra.mxu0 0.0
        %3063 = vmatprep.subr.mxu0 0.0
        %3064 = vmatpush1.xpose.msra.mxu0 0.0
        %3065 = vmatprep.subr.mxu0 0.0
        %3066 = vmatpush1.xpose.msra.mxu0 0.0
        %3067 = vmatprep.subr.mxu0 0.0
        %3068 = vmatpush1.xpose.msra.mxu0 0.0
        %3069 = vmatprep.subr.mxu0 0.0
        %3070 = vmatpush1.xpose.msra.mxu0 0.0
        %3071 = vmatprep.subr.mxu0 0.0
        %3072 = vmatpush1.xpose.msra.mxu0 0.0
        %3073 = vmatprep.subr.mxu0 0.0
        %3074 = vmatpush1.xpose.msra.mxu0 0.0
        %3075 = vmatprep.subr.mxu0 0.0
        %3076 = vmatpush1.xpose.msra.mxu0 0.0
        %3077 = vmatprep.subr.mxu0 0.0
        %3078 = vmatpush1.xpose.msra.mxu0 0.0
        %3079 = vmatprep.subr.mxu0 0.0
        %3080 = vmatpush1.xpose.msra.mxu0 0.0
        %3081 = vmatprep.subr.mxu0 0.0
        %3082 = vmatpush1.xpose.msra.mxu0 0.0
        %3083 = vmatprep.subr.mxu0 0.0
        %3084 = vmatpush1.xpose.msra.mxu0 0.0
        %3085 = vmatprep.subr.mxu0 0.0
        %3086 = vmatpush1.xpose.msra.mxu0 0.0
        %3087 = vmatprep.subr.mxu0 0.0
        %3088 = vmatpush1.xpose.msra.mxu0 0.0
        %3089 = vmatprep.subr.mxu0 0.0
        %3090 = vmatpush1.xpose.msra.mxu0 0.0
        %3091 = vmatprep.mubr.f32.mxu0 0.0
        %3092 = vmatmul.mubr.f32.gmra.mrb[0].mxu0 %v3022
        %v3093 = vpop.f32.mrb[0].mxu0
        %v3094 = vadd.f32 0.0, %v3093
        %v3095 = vpop.f32.mrb[0].mxu0
        %3096 = vdwg.mxu0
        %v3097 = vmul.f32 %v3094, 0.5
        %v3098 = vsel %vm654, %v3097, -inf
        %3099 = vmax.xlane.f32.xlu0 %v3098
        %v3100 = vpop.xlane.xlu0 %3099
        %v3101 = vsub.f32 %v3097, %v3100
        %v3102 = vmul.f32 %v3101, 1.442695
        %v3103 = vpow.pop %v3102
        %v3104 = vsel %vm654, %v3103, 0.0
        %3105 = vadd.xlane.f32.xlu0 %v3104
        %v3106 = vpop.xlane.xlu0 %3105
        %v3107 = vrcp.pop %v3106
        %v3108 = vmul.f32 %v3103, %v3107
        %v3110 = vsel %vm654, %v3108, 0
        %3112 = vmatprep.subr.mxu0 0.0
        %3113 = vmatpush1.msra.mxu0 %v3018
        %3114 = vmatprep.subr.mxu0 0.0
        %3115 = vmatpush1.msra.mxu0 0.0
        %3116 = vmatprep.subr.mxu0 0.0
        %3117 = vmatpush1.msra.mxu0 0.0
        %3118 = vmatprep.subr.mxu0 0.0
        %3119 = vmatpush1.msra.mxu0 0.0
        %3120 = vmatprep.subr.mxu0 0.0
        %3121 = vmatpush1.msra.mxu0 0.0
        %3122 = vmatprep.subr.mxu0 0.0
        %3123 = vmatpush1.msra.mxu0 0.0
        %3124 = vmatprep.subr.mxu0 0.0
        %3125 = vmatpush1.msra.mxu0 0.0
        %3126 = vmatprep.subr.mxu0 0.0
        %3127 = vmatpush1.msra.mxu0 0.0
        %3128 = vmatprep.subr.mxu0 0.0
        %3129 = vmatpush1.msra.mxu0 0.0
        %3130 = vmatprep.subr.mxu0 0.0
        %3131 = vmatpush1.msra.mxu0 0.0
        %3132 = vmatprep.subr.mxu0 0.0
        %3133 = vmatpush1.msra.mxu0 0.0
        %3134 = vmatprep.subr.mxu0 0.0
        %3135 = vmatpush1.msra.mxu0 0.0
        %3136 = vmatprep.subr.mxu0 0.0
        %3137 = vmatpush1.msra.mxu0 0.0
        %3138 = vmatprep.subr.mxu0 0.0
        %3139 = vmatpush1.msra.mxu0 0.0
        %3140 = vmatprep.subr.mxu0 0.0
        %3141 = vmatpush1.msra.mxu0 0.0
        %3142 = vmatprep.subr.mxu0 0.0
        %3143 = vmatpush1.msra.mxu0 0.0
        %3144 = vmatprep.subr.mxu0 0.0
        %3145 = vmatpush1.msra.mxu0 0.0
        %3146 = vmatprep.subr.mxu0 0.0
        %3147 = vmatpush1.msra.mxu0 0.0
        %3148 = vmatprep.subr.mxu0 0.0
        %3149 = vmatpush1.msra.mxu0 0.0
        %3150 = vmatprep.subr.mxu0 0.0
        %3151 = vmatpush1.msra.mxu0 0.0
        %3152 = vmatprep.subr.mxu0 0.0
        %3153 = vmatpush1.msra.mxu0 0.0
        %3154 = vmatprep.subr.mxu0 0.0
        %3155 = vmatpush1.msra.mxu0 0.0
        %3156 = vmatprep.subr.mxu0 0.0
        %3157 = vmatpush1.msra.mxu0 0.0
        %3158 = vmatprep.subr.mxu0 0.0
        %3159 = vmatpush1.msra.mxu0 0.0
        %3160 = vmatprep.subr.mxu0 0.0
        %3161 = vmatpush1.msra.mxu0 0.0
        %3162 = vmatprep.subr.mxu0 0.0
        %3163 = vmatpush1.msra.mxu0 0.0
        %3164 = vmatprep.subr.mxu0 0.0
        %3165 = vmatpush1.msra.mxu0 0.0
        %3166 = vmatprep.subr.mxu0 0.0
        %3167 = vmatpush1.msra.mxu0 0.0
        %3168 = vmatprep.subr.mxu0 0.0
        %3169 = vmatpush1.msra.mxu0 0.0
        %3170 = vmatprep.subr.mxu0 0.0
        %3171 = vmatpush1.msra.mxu0 0.0
        %3172 = vmatprep.subr.mxu0 0.0
        %3173 = vmatpush1.msra.mxu0 0.0
        %3174 = vmatprep.subr.mxu0 0.0
        %3175 = vmatpush1.msra.mxu0 0.0
        %3176 = vmatprep.mubr.f32.mxu0 0.0
        %3177 = vmatmul.mubr.f32.gmra.mrb[0].mxu0 %v3110
        %v3178 = vpop.f32.mrb[0].mxu0
        %v3179 = vadd.f32 0.0, %v3178
        %v3180 = vpop.f32.mrb[0].mxu0
        %3181 = vdwg.mxu0
        %s3182 = scalar_lea.vmem %s7, 20
        %v3183 = vld [vmem:[%s3182] sm:$0xf]
        %v3185 = vsel %vm576, %v3179, 0
        %v3188 = vsel %vm1155, %v3183, 0
        %3190 = vmatprep.subr.mxu0 0.0
        %3191 = vmatpush1.msra.mxu0 %v3188
        %3192 = vmatprep.subr.mxu0 0.0
        %3193 = vmatpush1.msra.mxu0 0.0
        %3194 = vmatprep.subr.mxu0 0.0
        %3195 = vmatpush1.msra.mxu0 0.0
        %3196 = vmatprep.subr.mxu0 0.0
        %3197 = vmatpush1.msra.mxu0 0.0
        %3198 = vmatprep.subr.mxu0 0.0
        %3199 = vmatpush1.msra.mxu0 0.0
        %3200 = vmatprep.subr.mxu0 0.0
        %3201 = vmatpush1.msra.mxu0 0.0
        %3202 = vmatprep.subr.mxu0 0.0
        %3203 = vmatpush1.msra.mxu0 0.0
        %3204 = vmatprep.subr.mxu0 0.0
        %3205 = vmatpush1.msra.mxu0 0.0
        %3206 = vmatprep.subr.mxu0 0.0
        %3207 = vmatpush1.msra.mxu0 0.0
        %3208 = vmatprep.subr.mxu0 0.0
        %3209 = vmatpush1.msra.mxu0 0.0
        %3210 = vmatprep.subr.mxu0 0.0
        %3211 = vmatpush1.msra.mxu0 0.0
        %3212 = vmatprep.subr.mxu0 0.0
        %3213 = vmatpush1.msra.mxu0 0.0
        %3214 = vmatprep.subr.mxu0 0.0
        %3215 = vmatpush1.msra.mxu0 0.0
        %3216 = vmatprep.subr.mxu0 0.0
        %3217 = vmatpush1.msra.mxu0 0.0
        %3218 = vmatprep.subr.mxu0 0.0
        %3219 = vmatpush1.msra.mxu0 0.0
        %3220 = vmatprep.subr.mxu0 0.0
        %3221 = vmatpush1.msra.mxu0 0.0
        %3222 = vmatprep.subr.mxu0 0.0
        %3223 = vmatpush1.msra.mxu0 0.0
        %3224 = vmatprep.subr.mxu0 0.0
        %3225 = vmatpush1.msra.mxu0 0.0
        %3226 = vmatprep.subr.mxu0 0.0
        %3227 = vmatpush1.msra.mxu0 0.0
        %3228 = vmatprep.subr.mxu0 0.0
        %3229 = vmatpush1.msra.mxu0 0.0
        %3230 = vmatprep.subr.mxu0 0.0
        %3231 = vmatpush1.msra.mxu0 0.0
        %3232 = vmatprep.subr.mxu0 0.0
        %3233 = vmatpush1.msra.mxu0 0.0
        %3234 = vmatprep.subr.mxu0 0.0
        %3235 = vmatpush1.msra.mxu0 0.0
        %3236 = vmatprep.subr.mxu0 0.0
        %3237 = vmatpush1.msra.mxu0 0.0
        %3238 = vmatprep.subr.mxu0 0.0
        %3239 = vmatpush1.msra.mxu0 0.0
        %3240 = vmatprep.subr.mxu0 0.0
        %3241 = vmatpush1.msra.mxu0 0.0
        %3242 = vmatprep.subr.mxu0 0.0
        %3243 = vmatpush1.msra.mxu0 0.0
        %3244 = vmatprep.subr.mxu0 0.0
        %3245 = vmatpush1.msra.mxu0 0.0
        %3246 = vmatprep.subr.mxu0 0.0
        %3247 = vmatpush1.msra.mxu0 0.0
        %3248 = vmatprep.subr.mxu0 0.0
        %3249 = vmatpush1.msra.mxu0 0.0
        %3250 = vmatprep.subr.mxu0 0.0
        %3251 = vmatpush1.msra.mxu0 0.0
        %3252 = vmatprep.subr.mxu0 0.0
        %3253 = vmatpush1.msra.mxu0 0.0
        %3254 = vmatprep.mubr.f32.mxu0 0.0
        %3255 = vmatmul.mubr.f32.gmra.mrb[0].mxu0 %v3185
        %v3256 = vpop.f32.mrb[0].mxu0
        %v3257 = vadd.f32 0.0, %v3256
        %v3258 = vpop.f32.mrb[0].mxu0
        %3259 = vdwg.mxu0
        %v3260 = vadd.f32 %v2771, %v3257
        %s3261 = scalar_lea.vmem %s1, 192
        %v3262 = vld [vmem:[%s3261] sm:$0xff]
        %v3263 = vld [vmem:[%s3261 + $0x8] sm:$0xff]
        %v3264 = vld [vmem:[%s3261 + $0x10] sm:$0xff]
        %v3265 = vld [vmem:[%s3261 + $0x18] sm:$0xff]
        %s3266 = scalar_lea.vmem %s4, 6
        %v3267 = vld [vmem:[%s3266] sm:$0x1]
        %v3269 = vlaneseq
        %v3270 = vshrl.u32 %v3269, 7
        %v3271 = vsub.s32 0, %v3270
        %v3272 = vrot.slane %v3267, %v3271
        %3274 = vmatprep.subr.mxu0 0.0
        %3275 = vmatpush1.msra.mxu0 %v3262
        %3276 = vmatprep.subr.mxu0 0.0
        %3277 = vmatpush1.msra.mxu0 %v3263
        %3278 = vmatprep.subr.mxu0 0.0
        %3279 = vmatpush1.msra.mxu0 %v3264
        %3280 = vmatprep.subr.mxu0 0.0
        %3281 = vmatpush1.msra.mxu0 %v3265
        %3282 = vmatprep.subr.mxu0 0.0
        %3283 = vmatpush1.msra.mxu0 0.0
        %3284 = vmatprep.subr.mxu0 0.0
        %3285 = vmatpush1.msra.mxu0 0.0
        %3286 = vmatprep.subr.mxu0 0.0
        %3287 = vmatpush1.msra.mxu0 0.0
        %3288 = vmatprep.subr.mxu0 0.0
        %3289 = vmatpush1.msra.mxu0 0.0
        %3290 = vmatprep.subr.mxu0 0.0
        %3291 = vmatpush1.msra.mxu0 0.0
        %3292 = vmatprep.subr.mxu0 0.0
        %3293 = vmatpush1.msra.mxu0 0.0
        %3294 = vmatprep.subr.mxu0 0.0
        %3295 = vmatpush1.msra.mxu0 0.0
        %3296 = vmatprep.subr.mxu0 0.0
        %3297 = vmatpush1.msra.mxu0 0.0
        %3298 = vmatprep.subr.mxu0 0.0
        %3299 = vmatpush1.msra.mxu0 0.0
        %3300 = vmatprep.subr.mxu0 0.0
        %3301 = vmatpush1.msra.mxu0 0.0
        %3302 = vmatprep.subr.mxu0 0.0
        %3303 = vmatpush1.msra.mxu0 0.0
        %3304 = vmatprep.subr.mxu0 0.0
        %3305 = vmatpush1.msra.mxu0 0.0
        %3306 = vmatprep.subr.mxu0 0.0
        %3307 = vmatpush1.msra.mxu0 0.0
        %3308 = vmatprep.subr.mxu0 0.0
        %3309 = vmatpush1.msra.mxu0 0.0
        %3310 = vmatprep.subr.mxu0 0.0
        %3311 = vmatpush1.msra.mxu0 0.0
        %3312 = vmatprep.subr.mxu0 0.0
        %3313 = vmatpush1.msra.mxu0 0.0
        %3314 = vmatprep.subr.mxu0 0.0
        %3315 = vmatpush1.msra.mxu0 0.0
        %3316 = vmatprep.subr.mxu0 0.0
        %3317 = vmatpush1.msra.mxu0 0.0
        %3318 = vmatprep.subr.mxu0 0.0
        %3319 = vmatpush1.msra.mxu0 0.0
        %3320 = vmatprep.subr.mxu0 0.0
        %3321 = vmatpush1.msra.mxu0 0.0
        %3322 = vmatprep.subr.mxu0 0.0
        %3323 = vmatpush1.msra.mxu0 0.0
        %3324 = vmatprep.subr.mxu0 0.0
        %3325 = vmatpush1.msra.mxu0 0.0
        %3326 = vmatprep.subr.mxu0 0.0
        %3327 = vmatpush1.msra.mxu0 0.0
        %3328 = vmatprep.subr.mxu0 0.0
        %3329 = vmatpush1.msra.mxu0 0.0
        %3330 = vmatprep.subr.mxu0 0.0
        %3331 = vmatpush1.msra.mxu0 0.0
        %3332 = vmatprep.subr.mxu0 0.0
        %3333 = vmatpush1.msra.mxu0 0.0
        %3334 = vmatprep.subr.mxu0 0.0
        %3335 = vmatpush1.msra.mxu0 0.0
        %3336 = vmatprep.subr.mxu0 0.0
        %3337 = vmatpush1.msra.mxu0 0.0
        %3338 = vmatprep.mubr.f32.mxu0 0.0
        %3339 = vmatmul.mubr.f32.gmra.mrb[0].mxu0 %v342
        %v3340 = vpop.f32.mrb[0].mxu0
        %v3341 = vadd.f32 %v3272, %v3340
        %v3342 = vpop.f32.mrb[0].mxu0
        %3343 = vdwg.mxu0
        %s3344 = scalar_lea.vmem %s2, 192
        %v3345 = vld [vmem:[%s3344] sm:$0xff]
        %v3346 = vld [vmem:[%s3344 + $0x8] sm:$0xff]
        %v3347 = vld [vmem:[%s3344 + $0x10] sm:$0xff]
        %v3348 = vld [vmem:[%s3344 + $0x18] sm:$0xff]
        %s3349 = scalar_lea.vmem %s5, 6
        %v3350 = vld [vmem:[%s3349] sm:$0x1]
        %v3352 = vlaneseq
        %v3353 = vshrl.u32 %v3352, 7
        %v3354 = vsub.s32 0, %v3353
        %v3355 = vrot.slane %v3350, %v3354
        %3357 = vmatprep.subr.mxu0 0.0
        %3358 = vmatpush1.msra.mxu0 %v3345
        %3359 = vmatprep.subr.mxu0 0.0
        %3360 = vmatpush1.msra.mxu0 %v3346
        %3361 = vmatprep.subr.mxu0 0.0
        %3362 = vmatpush1.msra.mxu0 %v3347
        %3363 = vmatprep.subr.mxu0 0.0
        %3364 = vmatpush1.msra.mxu0 %v3348
        %3365 = vmatprep.subr.mxu0 0.0
        %3366 = vmatpush1.msra.mxu0 0.0
        %3367 = vmatprep.subr.mxu0 0.0
        %3368 = vmatpush1.msra.mxu0 0.0
        %3369 = vmatprep.subr.mxu0 0.0
        %3370 = vmatpush1.msra.mxu0 0.0
        %3371 = vmatprep.subr.mxu0 0.0
        %3372 = vmatpush1.msra.mxu0 0.0
        %3373 = vmatprep.subr.mxu0 0.0
        %3374 = vmatpush1.msra.mxu0 0.0
        %3375 = vmatprep.subr.mxu0 0.0
        %3376 = vmatpush1.msra.mxu0 0.0
        %3377 = vmatprep.subr.mxu0 0.0
        %3378 = vmatpush1.msra.mxu0 0.0
        %3379 = vmatprep.subr.mxu0 0.0
        %3380 = vmatpush1.msra.mxu0 0.0
        %3381 = vmatprep.subr.mxu0 0.0
        %3382 = vmatpush1.msra.mxu0 0.0
        %3383 = vmatprep.subr.mxu0 0.0
        %3384 = vmatpush1.msra.mxu0 0.0
        %3385 = vmatprep.subr.mxu0 0.0
        %3386 = vmatpush1.msra.mxu0 0.0
        %3387 = vmatprep.subr.mxu0 0.0
        %3388 = vmatpush1.msra.mxu0 0.0
        %3389 = vmatprep.subr.mxu0 0.0
        %3390 = vmatpush1.msra.mxu0 0.0
        %3391 = vmatprep.subr.mxu0 0.0
        %3392 = vmatpush1.msra.mxu0 0.0
        %3393 = vmatprep.subr.mxu0 0.0
        %3394 = vmatpush1.msra.mxu0 0.0
        %3395 = vmatprep.subr.mxu0 0.0
        %3396 = vmatpush1.msra.mxu0 0.0
        %3397 = vmatprep.subr.mxu0 0.0
        %3398 = vmatpush1.msra.mxu0 0.0
        %3399 = vmatprep.subr.mxu0 0.0
        %3400 = vmatpush1.msra.mxu0 0.0
        %3401 = vmatprep.subr.mxu0 0.0
        %3402 = vmatpush1.msra.mxu0 0.0
        %3403 = vmatprep.subr.mxu0 0.0
        %3404 = vmatpush1.msra.mxu0 0.0
        %3405 = vmatprep.subr.mxu0 0.0
        %3406 = vmatpush1.msra.mxu0 0.0
        %3407 = vmatprep.subr.mxu0 0.0
        %3408 = vmatpush1.msra.mxu0 0.0
        %3409 = vmatprep.subr.mxu0 0.0
        %3410 = vmatpush1.msra.mxu0 0.0
        %3411 = vmatprep.subr.mxu0 0.0
        %3412 = vmatpush1.msra.mxu0 0.0
        %3413 = vmatprep.subr.mxu0 0.0
        %3414 = vmatpush1.msra.mxu0 0.0
        %3415 = vmatprep.subr.mxu0 0.0
        %3416 = vmatpush1.msra.mxu0 0.0
        %3417 = vmatprep.subr.mxu0 0.0
        %3418 = vmatpush1.msra.mxu0 0.0
        %3419 = vmatprep.subr.mxu0 0.0
        %3420 = vmatpush1.msra.mxu0 0.0
        %3421 = vmatprep.mubr.f32.mxu0 0.0
        %3422 = vmatmul.mubr.f32.gmra.mrb[0].mxu0 %v342
        %v3423 = vpop.f32.mrb[0].mxu0
        %v3424 = vadd.f32 %v3355, %v3423
        %v3425 = vpop.f32.mrb[0].mxu0
        %3426 = vdwg.mxu0
        %s3427 = scalar_lea.vmem %s3, 192
        %v3428 = vld [vmem:[%s3427] sm:$0xff]
        %v3429 = vld [vmem:[%s3427 + $0x8] sm:$0xff]
        %v3430 = vld [vmem:[%s3427 + $0x10] sm:$0xff]
        %v3431 = vld [vmem:[%s3427 + $0x18] sm:$0xff]
        %s3432 = scalar_lea.vmem %s6, 6
        %v3433 = vld [vmem:[%s3432] sm:$0x1]
        %v3435 = vlaneseq
        %v3436 = vshrl.u32 %v3435, 7
        %v3437 = vsub.s32 0, %v3436
        %v3438 = vrot.slane %v3433, %v3437
        %3440 = vmatprep.subr.mxu0 0.0
        %3441 = vmatpush1.msra.mxu0 %v3428
        %3442 = vmatprep.subr.mxu0 0.0
        %3443 = vmatpush1.msra.mxu0 %v3429
        %3444 = vmatprep.subr.mxu0 0.0
        %3445 = vmatpush1.msra.mxu0 %v3430
        %3446 = vmatprep.subr.mxu0 0.0
        %3447 = vmatpush1.msra.mxu0 %v3431
        %3448 = vmatprep.subr.mxu0 0.0
        %3449 = vmatpush1.msra.mxu0 0.0
        %3450 = vmatprep.subr.mxu0 0.0
        %3451 = vmatpush1.msra.mxu0 0.0
        %3452 = vmatprep.subr.mxu0 0.0
        %3453 = vmatpush1.msra.mxu0 0.0
        %3454 = vmatprep.subr.mxu0 0.0
        %3455 = vmatpush1.msra.mxu0 0.0
        %3456 = vmatprep.subr.mxu0 0.0
        %3457 = vmatpush1.msra.mxu0 0.0
        %3458 = vmatprep.subr.mxu0 0.0
        %3459 = vmatpush1.msra.mxu0 0.0
        %3460 = vmatprep.subr.mxu0 0.0
        %3461 = vmatpush1.msra.mxu0 0.0
        %3462 = vmatprep.subr.mxu0 0.0
        %3463 = vmatpush1.msra.mxu0 0.0
        %3464 = vmatprep.subr.mxu0 0.0
        %3465 = vmatpush1.msra.mxu0 0.0
        %3466 = vmatprep.subr.mxu0 0.0
        %3467 = vmatpush1.msra.mxu0 0.0
        %3468 = vmatprep.subr.mxu0 0.0
        %3469 = vmatpush1.msra.mxu0 0.0
        %3470 = vmatprep.subr.mxu0 0.0
        %3471 = vmatpush1.msra.mxu0 0.0
        %3472 = vmatprep.subr.mxu0 0.0
        %3473 = vmatpush1.msra.mxu0 0.0
        %3474 = vmatprep.subr.mxu0 0.0
        %3475 = vmatpush1.msra.mxu0 0.0
        %3476 = vmatprep.subr.mxu0 0.0
        %3477 = vmatpush1.msra.mxu0 0.0
        %3478 = vmatprep.subr.mxu0 0.0
        %3479 = vmatpush1.msra.mxu0 0.0
        %3480 = vmatprep.subr.mxu0 0.0
        %3481 = vmatpush1.msra.mxu0 0.0
        %3482 = vmatprep.subr.mxu0 0.0
        %3483 = vmatpush1.msra.mxu0 0.0
        %3484 = vmatprep.subr.mxu0 0.0
        %3485 = vmatpush1.msra.mxu0 0.0
        %3486 = vmatprep.subr.mxu0 0.0
        %3487 = vmatpush1.msra.mxu0 0.0
        %3488 = vmatprep.subr.mxu0 0.0
        %3489 = vmatpush1.msra.mxu0 0.0
        %3490 = vmatprep.subr.mxu0 0.0
        %3491 = vmatpush1.msra.mxu0 0.0
        %3492 = vmatprep.subr.mxu0 0.0
        %3493 = vmatpush1.msra.mxu0 0.0
        %3494 = vmatprep.subr.mxu0 0.0
        %3495 = vmatpush1.msra.mxu0 0.0
        %3496 = vmatprep.subr.mxu0 0.0
        %3497 = vmatpush1.msra.mxu0 0.0
        %3498 = vmatprep.subr.mxu0 0.0
        %3499 = vmatpush1.msra.mxu0 0.0
        %3500 = vmatprep.subr.mxu0 0.0
        %3501 = vmatpush1.msra.mxu0 0.0
        %3502 = vmatprep.subr.mxu0 0.0
        %3503 = vmatpush1.msra.mxu0 0.0
        %3504 = vmatprep.mubr.f32.mxu0 0.0
        %3505 = vmatmul.mubr.f32.gmra.mrb[0].mxu0 %v342
        %v3506 = vpop.f32.mrb[0].mxu0
        %v3507 = vadd.f32 %v3438, %v3506
        %v3508 = vpop.f32.mrb[0].mxu0
        %3509 = vdwg.mxu0
        %v3511 = vsel %vm576, %v3341, 0
        %v3514 = vsel %vm576, %v3424, 0
        %3516 = vmatprep.subr.mxu0 0.0
        %3517 = vmatpush1.xpose.msra.mxu0 %v3514
        %3518 = vmatprep.subr.mxu0 0.0
        %3519 = vmatpush1.xpose.msra.mxu0 0.0
        %3520 = vmatprep.subr.mxu0 0.0
        %3521 = vmatpush1.xpose.msra.mxu0 0.0
        %3522 = vmatprep.subr.mxu0 0.0
        %3523 = vmatpush1.xpose.msra.mxu0 0.0
        %3524 = vmatprep.subr.mxu0 0.0
        %3525 = vmatpush1.xpose.msra.mxu0 0.0
        %3526 = vmatprep.subr.mxu0 0.0
        %3527 = vmatpush1.xpose.msra.mxu0 0.0
        %3528 = vmatprep.subr.mxu0 0.0
        %3529 = vmatpush1.xpose.msra.mxu0 0.0
        %3530 = vmatprep.subr.mxu0 0.0
        %3531 = vmatpush1.xpose.msra.mxu0 0.0
        %3532 = vmatprep.subr.mxu0 0.0
        %3533 = vmatpush1.xpose.msra.mxu0 0.0
        %3534 = vmatprep.subr.mxu0 0.0
        %3535 = vmatpush1.xpose.msra.mxu0 0.0
        %3536 = vmatprep.subr.mxu0 0.0
        %3537 = vmatpush1.xpose.msra.mxu0 0.0
        %3538 = vmatprep.subr.mxu0 0.0
        %3539 = vmatpush1.xpose.msra.mxu0 0.0
        %3540 = vmatprep.subr.mxu0 0.0
        %3541 = vmatpush1.xpose.msra.mxu0 0.0
        %3542 = vmatprep.subr.mxu0 0.0
        %3543 = vmatpush1.xpose.msra.mxu0 0.0
        %3544 = vmatprep.subr.mxu0 0.0
        %3545 = vmatpush1.xpose.msra.mxu0 0.0
        %3546 = vmatprep.subr.mxu0 0.0
        %3547 = vmatpush1.xpose.msra.mxu0 0.0
        %3548 = vmatprep.subr.mxu0 0.0
        %3549 = vmatpush1.xpose.msra.mxu0 0.0
        %3550 = vmatprep.subr.mxu0 0.0
        %3551 = vmatpush1.xpose.msra.mxu0 0.0
        %3552 = vmatprep.subr.mxu0 0.0
        %3553 = vmatpush1.xpose.msra.mxu0 0.0
        %3554 = vmatprep.subr.mxu0 0.0
        %3555 = vmatpush1.xpose.msra.mxu0 0.0
        %3556 = vmatprep.subr.mxu0 0.0
        %3557 = vmatpush1.xpose.msra.mxu0 0.0
        %3558 = vmatprep.subr.mxu0 0.0
        %3559 = vmatpush1.xpose.msra.mxu0 0.0
        %3560 = vmatprep.subr.mxu0 0.0
        %3561 = vmatpush1.xpose.msra.mxu0 0.0
        %3562 = vmatprep.subr.mxu0 0.0
        %3563 = vmatpush1.xpose.msra.mxu0 0.0
        %3564 = vmatprep.subr.mxu0 0.0
        %3565 = vmatpush1.xpose.msra.mxu0 0.0
        %3566 = vmatprep.subr.mxu0 0.0
        %3567 = vmatpush1.xpose.msra.mxu0 0.0
        %3568 = vmatprep.subr.mxu0 0.0
        %3569 = vmatpush1.xpose.msra.mxu0 0.0
        %3570 = vmatprep.subr.mxu0 0.0
        %3571 = vmatpush1.xpose.msra.mxu0 0.0
        %3572 = vmatprep.subr.mxu0 0.0
        %3573 = vmatpush1.xpose.msra.mxu0 0.0
        %3574 = vmatprep.subr.mxu0 0.0
        %3575 = vmatpush1.xpose.msra.mxu0 0.0
        %3576 = vmatprep.subr.mxu0 0.0
        %3577 = vmatpush1.xpose.msra.mxu0 0.0
        %3578 = vmatprep.subr.mxu0 0.0
        %3579 = vmatpush1.xpose.msra.mxu0 0.0
        %3580 = vmatprep.mubr.f32.mxu0 0.0
        %3581 = vmatmul.mubr.f32.gmra.mrb[0].mxu0 %v3511
        %v3582 = vpop.f32.mrb[0].mxu0
        %v3583 = vadd.f32 0.0, %v3582
        %v3584 = vpop.f32.mrb[0].mxu0
        %3585 = vdwg.mxu0
        %v3586 = vmul.f32 %v3583, 0.5
        %v3587 = vsel %vm654, %v3586, -inf
        %3588 = vmax.xlane.f32.xlu0 %v3587
        %v3589 = vpop.xlane.xlu0 %3588
        %v3590 = vsub.f32 %v3586, %v3589
        %v3591 = vmul.f32 %v3590, 1.442695
        %v3592 = vpow.pop %v3591
        %v3593 = vsel %vm654, %v3592, 0.0
        %3594 = vadd.xlane.f32.xlu0 %v3593
        %v3595 = vpop.xlane.xlu0 %3594
        %v3596 = vrcp.pop %v3595
        %v3597 = vmul.f32 %v3592, %v3596
        %v3599 = vsel %vm654, %v3597, 0
        %3601 = vmatprep.subr.mxu0 0.0
        %3602 = vmatpush1.msra.mxu0 %v3507
        %3603 = vmatprep.subr.mxu0 0.0
        %3604 = vmatpush1.msra.mxu0 0.0
        %3605 = vmatprep.subr.mxu0 0.0
        %3606 = vmatpush1.msra.mxu0 0.0
        %3607 = vmatprep.subr.mxu0 0.0
        %3608 = vmatpush1.msra.mxu0 0.0
        %3609 = vmatprep.subr.mxu0 0.0
        %3610 = vmatpush1.msra.mxu0 0.0
        %3611 = vmatprep.subr.mxu0 0.0
        %3612 = vmatpush1.msra.mxu0 0.0
        %3613 = vmatprep.subr.mxu0 0.0
        %3614 = vmatpush1.msra.mxu0 0.0
        %3615 = vmatprep.subr.mxu0 0.0
        %3616 = vmatpush1.msra.mxu0 0.0
        %3617 = vmatprep.subr.mxu0 0.0
        %3618 = vmatpush1.msra.mxu0 0.0
        %3619 = vmatprep.subr.mxu0 0.0
        %3620 = vmatpush1.msra.mxu0 0.0
        %3621 = vmatprep.subr.mxu0 0.0
        %3622 = vmatpush1.msra.mxu0 0.0
        %3623 = vmatprep.subr.mxu0 0.0
        %3624 = vmatpush1.msra.mxu0 0.0
        %3625 = vmatprep.subr.mxu0 0.0
        %3626 = vmatpush1.msra.mxu0 0.0
        %3627 = vmatprep.subr.mxu0 0.0
        %3628 = vmatpush1.msra.mxu0 0.0
        %3629 = vmatprep.subr.mxu0 0.0
        %3630 = vmatpush1.msra.mxu0 0.0
        %3631 = vmatprep.subr.mxu0 0.0
        %3632 = vmatpush1.msra.mxu0 0.0
        %3633 = vmatprep.subr.mxu0 0.0
        %3634 = vmatpush1.msra.mxu0 0.0
        %3635 = vmatprep.subr.mxu0 0.0
        %3636 = vmatpush1.msra.mxu0 0.0
        %3637 = vmatprep.subr.mxu0 0.0
        %3638 = vmatpush1.msra.mxu0 0.0
        %3639 = vmatprep.subr.mxu0 0.0
        %3640 = vmatpush1.msra.mxu0 0.0
        %3641 = vmatprep.subr.mxu0 0.0
        %3642 = vmatpush1.msra.mxu0 0.0
        %3643 = vmatprep.subr.mxu0 0.0
        %3644 = vmatpush1.msra.mxu0 0.0
        %3645 = vmatprep.subr.mxu0 0.0
        %3646 = vmatpush1.msra.mxu0 0.0
        %3647 = vmatprep.subr.mxu0 0.0
        %3648 = vmatpush1.msra.mxu0 0.0
        %3649 = vmatprep.subr.mxu0 0.0
        %3650 = vmatpush1.msra.mxu0 0.0
        %3651 = vmatprep.subr.mxu0 0.0
        %3652 = vmatpush1.msra.mxu0 0.0
        %3653 = vmatprep.subr.mxu0 0.0
        %3654 = vmatpush1.msra.mxu0 0.0
        %3655 = vmatprep.subr.mxu0 0.0
        %3656 = vmatpush1.msra.mxu0 0.0
        %3657 = vmatprep.subr.mxu0 0.0
        %3658 = vmatpush1.msra.mxu0 0.0
        %3659 = vmatprep.subr.mxu0 0.0
        %3660 = vmatpush1.msra.mxu0 0.0
        %3661 = vmatprep.subr.mxu0 0.0
        %3662 = vmatpush1.msra.mxu0 0.0
        %3663 = vmatprep.subr.mxu0 0.0
        %3664 = vmatpush1.msra.mxu0 0.0
        %3665 = vmatprep.mubr.f32.mxu0 0.0
        %3666 = vmatmul.mubr.f32.gmra.mrb[0].mxu0 %v3599
        %v3667 = vpop.f32.mrb[0].mxu0
        %v3668 = vadd.f32 0.0, %v3667
        %v3669 = vpop.f32.mrb[0].mxu0
        %3670 = vdwg.mxu0
        %s3671 = scalar_lea.vmem %s7, 24
        %v3672 = vld [vmem:[%s3671] sm:$0xf]
        %v3674 = vsel %vm576, %v3668, 0
        %v3677 = vsel %vm1155, %v3672, 0
        %3679 = vmatprep.subr.mxu0 0.0
        %3680 = vmatpush1.msra.mxu0 %v3677
        %3681 = vmatprep.subr.mxu0 0.0
        %3682 = vmatpush1.msra.mxu0 0.0
        %3683 = vmatprep.subr.mxu0 0.0
        %3684 = vmatpush1.msra.mxu0 0.0
        %3685 = vmatprep.subr.mxu0 0.0
        %3686 = vmatpush1.msra.mxu0 0.0
        %3687 = vmatprep.subr.mxu0 0.0
        %3688 = vmatpush1.msra.mxu0 0.0
        %3689 = vmatprep.subr.mxu0 0.0
        %3690 = vmatpush1.msra.mxu0 0.0
        %3691 = vmatprep.subr.mxu0 0.0
        %3692 = vmatpush1.msra.mxu0 0.0
        %3693 = vmatprep.subr.mxu0 0.0
        %3694 = vmatpush1.msra.mxu0 0.0
        %3695 = vmatprep.subr.mxu0 0.0
        %3696 = vmatpush1.msra.mxu0 0.0
        %3697 = vmatprep.subr.mxu0 0.0
        %3698 = vmatpush1.msra.mxu0 0.0
        %3699 = vmatprep.subr.mxu0 0.0
        %3700 = vmatpush1.msra.mxu0 0.0
        %3701 = vmatprep.subr.mxu0 0.0
        %3702 = vmatpush1.msra.mxu0 0.0
        %3703 = vmatprep.subr.mxu0 0.0
        %3704 = vmatpush1.msra.mxu0 0.0
        %3705 = vmatprep.subr.mxu0 0.0
        %3706 = vmatpush1.msra.mxu0 0.0
        %3707 = vmatprep.subr.mxu0 0.0
        %3708 = vmatpush1.msra.mxu0 0.0
        %3709 = vmatprep.subr.mxu0 0.0
        %3710 = vmatpush1.msra.mxu0 0.0
        %3711 = vmatprep.subr.mxu0 0.0
        %3712 = vmatpush1.msra.mxu0 0.0
        %3713 = vmatprep.subr.mxu0 0.0
        %3714 = vmatpush1.msra.mxu0 0.0
        %3715 = vmatprep.subr.mxu0 0.0
        %3716 = vmatpush1.msra.mxu0 0.0
        %3717 = vmatprep.subr.mxu0 0.0
        %3718 = vmatpush1.msra.mxu0 0.0
        %3719 = vmatprep.subr.mxu0 0.0
        %3720 = vmatpush1.msra.mxu0 0.0
        %3721 = vmatprep.subr.mxu0 0.0
        %3722 = vmatpush1.msra.mxu0 0.0
        %3723 = vmatprep.subr.mxu0 0.0
        %3724 = vmatpush1.msra.mxu0 0.0
        %3725 = vmatprep.subr.mxu0 0.0
        %3726 = vmatpush1.msra.mxu0 0.0
        %3727 = vmatprep.subr.mxu0 0.0
        %3728 = vmatpush1.msra.mxu0 0.0
        %3729 = vmatprep.subr.mxu0 0.0
        %3730 = vmatpush1.msra.mxu0 0.0
        %3731 = vmatprep.subr.mxu0 0.0
        %3732 = vmatpush1.msra.mxu0 0.0
        %3733 = vmatprep.subr.mxu0 0.0
        %3734 = vmatpush1.msra.mxu0 0.0
        %3735 = vmatprep.subr.mxu0 0.0
        %3736 = vmatpush1.msra.mxu0 0.0
        %3737 = vmatprep.subr.mxu0 0.0
        %3738 = vmatpush1.msra.mxu0 0.0
        %3739 = vmatprep.subr.mxu0 0.0
        %3740 = vmatpush1.msra.mxu0 0.0
        %3741 = vmatprep.subr.mxu0 0.0
        %3742 = vmatpush1.msra.mxu0 0.0
        %3743 = vmatprep.mubr.f32.mxu0 0.0
        %3744 = vmatmul.mubr.f32.gmra.mrb[0].mxu0 %v3674
        %v3745 = vpop.f32.mrb[0].mxu0
        %v3746 = vadd.f32 0.0, %v3745
        %v3747 = vpop.f32.mrb[0].mxu0
        %3748 = vdwg.mxu0
        %v3749 = vadd.f32 %v3260, %v3746
        %s3750 = scalar_lea.vmem %s1, 224
        %v3751 = vld [vmem:[%s3750] sm:$0xff]
        %v3752 = vld [vmem:[%s3750 + $0x8] sm:$0xff]
        %v3753 = vld [vmem:[%s3750 + $0x10] sm:$0xff]
        %v3754 = vld [vmem:[%s3750 + $0x18] sm:$0xff]
        %s3755 = scalar_lea.vmem %s4, 7
        %v3756 = vld [vmem:[%s3755] sm:$0x1]
        %v3758 = vlaneseq
        %v3759 = vshrl.u32 %v3758, 7
        %v3760 = vsub.s32 0, %v3759
        %v3761 = vrot.slane %v3756, %v3760
        %3763 = vmatprep.subr.mxu0 0.0
        %3764 = vmatpush1.msra.mxu0 %v3751
        %3765 = vmatprep.subr.mxu0 0.0
        %3766 = vmatpush1.msra.mxu0 %v3752
        %3767 = vmatprep.subr.mxu0 0.0
        %3768 = vmatpush1.msra.mxu0 %v3753
        %3769 = vmatprep.subr.mxu0 0.0
        %3770 = vmatpush1.msra.mxu0 %v3754
        %3771 = vmatprep.subr.mxu0 0.0
        %3772 = vmatpush1.msra.mxu0 0.0
        %3773 = vmatprep.subr.mxu0 0.0
        %3774 = vmatpush1.msra.mxu0 0.0
        %3775 = vmatprep.subr.mxu0 0.0
        %3776 = vmatpush1.msra.mxu0 0.0
        %3777 = vmatprep.subr.mxu0 0.0
        %3778 = vmatpush1.msra.mxu0 0.0
        %3779 = vmatprep.subr.mxu0 0.0
        %3780 = vmatpush1.msra.mxu0 0.0
        %3781 = vmatprep.subr.mxu0 0.0
        %3782 = vmatpush1.msra.mxu0 0.0
        %3783 = vmatprep.subr.mxu0 0.0
        %3784 = vmatpush1.msra.mxu0 0.0
        %3785 = vmatprep.subr.mxu0 0.0
        %3786 = vmatpush1.msra.mxu0 0.0
        %3787 = vmatprep.subr.mxu0 0.0
        %3788 = vmatpush1.msra.mxu0 0.0
        %3789 = vmatprep.subr.mxu0 0.0
        %3790 = vmatpush1.msra.mxu0 0.0
        %3791 = vmatprep.subr.mxu0 0.0
        %3792 = vmatpush1.msra.mxu0 0.0
        %3793 = vmatprep.subr.mxu0 0.0
        %3794 = vmatpush1.msra.mxu0 0.0
        %3795 = vmatprep.subr.mxu0 0.0
        %3796 = vmatpush1.msra.mxu0 0.0
        %3797 = vmatprep.subr.mxu0 0.0
        %3798 = vmatpush1.msra.mxu0 0.0
        %3799 = vmatprep.subr.mxu0 0.0
        %3800 = vmatpush1.msra.mxu0 0.0
        %3801 = vmatprep.subr.mxu0 0.0
        %3802 = vmatpush1.msra.mxu0 0.0
        %3803 = vmatprep.subr.mxu0 0.0
        %3804 = vmatpush1.msra.mxu0 0.0
        %3805 = vmatprep.subr.mxu0 0.0
        %3806 = vmatpush1.msra.mxu0 0.0
        %3807 = vmatprep.subr.mxu0 0.0
        %3808 = vmatpush1.msra.mxu0 0.0
        %3809 = vmatprep.subr.mxu0 0.0
        %3810 = vmatpush1.msra.mxu0 0.0
        %3811 = vmatprep.subr.mxu0 0.0
        %3812 = vmatpush1.msra.mxu0 0.0
        %3813 = vmatprep.subr.mxu0 0.0
        %3814 = vmatpush1.msra.mxu0 0.0
        %3815 = vmatprep.subr.mxu0 0.0
        %3816 = vmatpush1.msra.mxu0 0.0
        %3817 = vmatprep.subr.mxu0 0.0
        %3818 = vmatpush1.msra.mxu0 0.0
        %3819 = vmatprep.subr.mxu0 0.0
        %3820 = vmatpush1.msra.mxu0 0.0
        %3821 = vmatprep.subr.mxu0 0.0
        %3822 = vmatpush1.msra.mxu0 0.0
        %3823 = vmatprep.subr.mxu0 0.0
        %3824 = vmatpush1.msra.mxu0 0.0
        %3825 = vmatprep.subr.mxu0 0.0
        %3826 = vmatpush1.msra.mxu0 0.0
        %3827 = vmatprep.mubr.f32.mxu0 0.0
        %3828 = vmatmul.mubr.f32.gmra.mrb[0].mxu0 %v342
        %v3829 = vpop.f32.mrb[0].mxu0
        %v3830 = vadd.f32 %v3761, %v3829
        %v3831 = vpop.f32.mrb[0].mxu0
        %3832 = vdwg.mxu0
        %s3833 = scalar_lea.vmem %s2, 224
        %v3834 = vld [vmem:[%s3833] sm:$0xff]
        %v3835 = vld [vmem:[%s3833 + $0x8] sm:$0xff]
        %v3836 = vld [vmem:[%s3833 + $0x10] sm:$0xff]
        %v3837 = vld [vmem:[%s3833 + $0x18] sm:$0xff]
        %s3838 = scalar_lea.vmem %s5, 7
        %v3839 = vld [vmem:[%s3838] sm:$0x1]
        %v3841 = vlaneseq
        %v3842 = vshrl.u32 %v3841, 7
        %v3843 = vsub.s32 0, %v3842
        %v3844 = vrot.slane %v3839, %v3843
        %3846 = vmatprep.subr.mxu0 0.0
        %3847 = vmatpush1.msra.mxu0 %v3834
        %3848 = vmatprep.subr.mxu0 0.0
        %3849 = vmatpush1.msra.mxu0 %v3835
        %3850 = vmatprep.subr.mxu0 0.0
        %3851 = vmatpush1.msra.mxu0 %v3836
        %3852 = vmatprep.subr.mxu0 0.0
        %3853 = vmatpush1.msra.mxu0 %v3837
        %3854 = vmatprep.subr.mxu0 0.0
        %3855 = vmatpush1.msra.mxu0 0.0
        %3856 = vmatprep.subr.mxu0 0.0
        %3857 = vmatpush1.msra.mxu0 0.0
        %3858 = vmatprep.subr.mxu0 0.0
        %3859 = vmatpush1.msra.mxu0 0.0
        %3860 = vmatprep.subr.mxu0 0.0
        %3861 = vmatpush1.msra.mxu0 0.0
        %3862 = vmatprep.subr.mxu0 0.0
        %3863 = vmatpush1.msra.mxu0 0.0
        %3864 = vmatprep.subr.mxu0 0.0
        %3865 = vmatpush1.msra.mxu0 0.0
        %3866 = vmatprep.subr.mxu0 0.0
        %3867 = vmatpush1.msra.mxu0 0.0
        %3868 = vmatprep.subr.mxu0 0.0
        %3869 = vmatpush1.msra.mxu0 0.0
        %3870 = vmatprep.subr.mxu0 0.0
        %3871 = vmatpush1.msra.mxu0 0.0
        %3872 = vmatprep.subr.mxu0 0.0
        %3873 = vmatpush1.msra.mxu0 0.0
        %3874 = vmatprep.subr.mxu0 0.0
        %3875 = vmatpush1.msra.mxu0 0.0
        %3876 = vmatprep.subr.mxu0 0.0
        %3877 = vmatpush1.msra.mxu0 0.0
        %3878 = vmatprep.subr.mxu0 0.0
        %3879 = vmatpush1.msra.mxu0 0.0
        %3880 = vmatprep.subr.mxu0 0.0
        %3881 = vmatpush1.msra.mxu0 0.0
        %3882 = vmatprep.subr.mxu0 0.0
        %3883 = vmatpush1.msra.mxu0 0.0
        %3884 = vmatprep.subr.mxu0 0.0
        %3885 = vmatpush1.msra.mxu0 0.0
        %3886 = vmatprep.subr.mxu0 0.0
        %3887 = vmatpush1.msra.mxu0 0.0
        %3888 = vmatprep.subr.mxu0 0.0
        %3889 = vmatpush1.msra.mxu0 0.0
        %3890 = vmatprep.subr.mxu0 0.0
        %3891 = vmatpush1.msra.mxu0 0.0
        %3892 = vmatprep.subr.mxu0 0.0
        %3893 = vmatpush1.msra.mxu0 0.0
        %3894 = vmatprep.subr.mxu0 0.0
        %3895 = vmatpush1.msra.mxu0 0.0
        %3896 = vmatprep.subr.mxu0 0.0
        %3897 = vmatpush1.msra.mxu0 0.0
        %3898 = vmatprep.subr.mxu0 0.0
        %3899 = vmatpush1.msra.mxu0 0.0
        %3900 = vmatprep.subr.mxu0 0.0
        %3901 = vmatpush1.msra.mxu0 0.0
        %3902 = vmatprep.subr.mxu0 0.0
        %3903 = vmatpush1.msra.mxu0 0.0
        %3904 = vmatprep.subr.mxu0 0.0
        %3905 = vmatpush1.msra.mxu0 0.0
        %3906 = vmatprep.subr.mxu0 0.0
        %3907 = vmatpush1.msra.mxu0 0.0
        %3908 = vmatprep.subr.mxu0 0.0
        %3909 = vmatpush1.msra.mxu0 0.0
        %3910 = vmatprep.mubr.f32.mxu0 0.0
        %3911 = vmatmul.mubr.f32.gmra.mrb[0].mxu0 %v342
        %v3912 = vpop.f32.mrb[0].mxu0
        %v3913 = vadd.f32 %v3844, %v3912
        %v3914 = vpop.f32.mrb[0].mxu0
        %3915 = vdwg.mxu0
        %s3916 = scalar_lea.vmem %s3, 224
        %v3917 = vld [vmem:[%s3916] sm:$0xff]
        %v3918 = vld [vmem:[%s3916 + $0x8] sm:$0xff]
        %v3919 = vld [vmem:[%s3916 + $0x10] sm:$0xff]
        %v3920 = vld [vmem:[%s3916 + $0x18] sm:$0xff]
        %s3921 = scalar_lea.vmem %s6, 7
        %v3922 = vld [vmem:[%s3921] sm:$0x1]
        %v3924 = vlaneseq
        %v3925 = vshrl.u32 %v3924, 7
        %v3926 = vsub.s32 0, %v3925
        %v3927 = vrot.slane %v3922, %v3926
        %3929 = vmatprep.subr.mxu0 0.0
        %3930 = vmatpush1.msra.mxu0 %v3917
        %3931 = vmatprep.subr.mxu0 0.0
        %3932 = vmatpush1.msra.mxu0 %v3918
        %3933 = vmatprep.subr.mxu0 0.0
        %3934 = vmatpush1.msra.mxu0 %v3919
        %3935 = vmatprep.subr.mxu0 0.0
        %3936 = vmatpush1.msra.mxu0 %v3920
        %3937 = vmatprep.subr.mxu0 0.0
        %3938 = vmatpush1.msra.mxu0 0.0
        %3939 = vmatprep.subr.mxu0 0.0
        %3940 = vmatpush1.msra.mxu0 0.0
        %3941 = vmatprep.subr.mxu0 0.0
        %3942 = vmatpush1.msra.mxu0 0.0
        %3943 = vmatprep.subr.mxu0 0.0
        %3944 = vmatpush1.msra.mxu0 0.0
        %3945 = vmatprep.subr.mxu0 0.0
        %3946 = vmatpush1.msra.mxu0 0.0
        %3947 = vmatprep.subr.mxu0 0.0
        %3948 = vmatpush1.msra.mxu0 0.0
        %3949 = vmatprep.subr.mxu0 0.0
        %3950 = vmatpush1.msra.mxu0 0.0
        %3951 = vmatprep.subr.mxu0 0.0
        %3952 = vmatpush1.msra.mxu0 0.0
        %3953 = vmatprep.subr.mxu0 0.0
        %3954 = vmatpush1.msra.mxu0 0.0
        %3955 = vmatprep.subr.mxu0 0.0
        %3956 = vmatpush1.msra.mxu0 0.0
        %3957 = vmatprep.subr.mxu0 0.0
        %3958 = vmatpush1.msra.mxu0 0.0
        %3959 = vmatprep.subr.mxu0 0.0
        %3960 = vmatpush1.msra.mxu0 0.0
        %3961 = vmatprep.subr.mxu0 0.0
        %3962 = vmatpush1.msra.mxu0 0.0
        %3963 = vmatprep.subr.mxu0 0.0
        %3964 = vmatpush1.msra.mxu0 0.0
        %3965 = vmatprep.subr.mxu0 0.0
        %3966 = vmatpush1.msra.mxu0 0.0
        %3967 = vmatprep.subr.mxu0 0.0
        %3968 = vmatpush1.msra.mxu0 0.0
        %3969 = vmatprep.subr.mxu0 0.0
        %3970 = vmatpush1.msra.mxu0 0.0
        %3971 = vmatprep.subr.mxu0 0.0
        %3972 = vmatpush1.msra.mxu0 0.0
        %3973 = vmatprep.subr.mxu0 0.0
        %3974 = vmatpush1.msra.mxu0 0.0
        %3975 = vmatprep.subr.mxu0 0.0
        %3976 = vmatpush1.msra.mxu0 0.0
        %3977 = vmatprep.subr.mxu0 0.0
        %3978 = vmatpush1.msra.mxu0 0.0
        %3979 = vmatprep.subr.mxu0 0.0
        %3980 = vmatpush1.msra.mxu0 0.0
        %3981 = vmatprep.subr.mxu0 0.0
        %3982 = vmatpush1.msra.mxu0 0.0
        %3983 = vmatprep.subr.mxu0 0.0
        %3984 = vmatpush1.msra.mxu0 0.0
        %3985 = vmatprep.subr.mxu0 0.0
        %3986 = vmatpush1.msra.mxu0 0.0
        %3987 = vmatprep.subr.mxu0 0.0
        %3988 = vmatpush1.msra.mxu0 0.0
        %3989 = vmatprep.subr.mxu0 0.0
        %3990 = vmatpush1.msra.mxu0 0.0
        %3991 = vmatprep.subr.mxu0 0.0
        %3992 = vmatpush1.msra.mxu0 0.0
        %3993 = vmatprep.mubr.f32.mxu0 0.0
        %3994 = vmatmul.mubr.f32.gmra.mrb[0].mxu0 %v342
        %v3995 = vpop.f32.mrb[0].mxu0
        %v3996 = vadd.f32 %v3927, %v3995
        %v3997 = vpop.f32.mrb[0].mxu0
        %3998 = vdwg.mxu0
        %v4000 = vsel %vm576, %v3830, 0
        %v4003 = vsel %vm576, %v3913, 0
        %4005 = vmatprep.subr.mxu0 0.0
        %4006 = vmatpush1.xpose.msra.mxu0 %v4003
        %4007 = vmatprep.subr.mxu0 0.0
        %4008 = vmatpush1.xpose.msra.mxu0 0.0
        %4009 = vmatprep.subr.mxu0 0.0
        %4010 = vmatpush1.xpose.msra.mxu0 0.0
        %4011 = vmatprep.subr.mxu0 0.0
        %4012 = vmatpush1.xpose.msra.mxu0 0.0
        %4013 = vmatprep.subr.mxu0 0.0
        %4014 = vmatpush1.xpose.msra.mxu0 0.0
        %4015 = vmatprep.subr.mxu0 0.0
        %4016 = vmatpush1.xpose.msra.mxu0 0.0
        %4017 = vmatprep.subr.mxu0 0.0
        %4018 = vmatpush1.xpose.msra.mxu0 0.0
        %4019 = vmatprep.subr.mxu0 0.0
        %4020 = vmatpush1.xpose.msra.mxu0 0.0
        %4021 = vmatprep.subr.mxu0 0.0
        %4022 = vmatpush1.xpose.msra.mxu0 0.0
        %4023 = vmatprep.subr.mxu0 0.0
        %4024 = vmatpush1.xpose.msra.mxu0 0.0
        %4025 = vmatprep.subr.mxu0 0.0
        %4026 = vmatpush1.xpose.msra.mxu0 0.0
        %4027 = vmatprep.subr.mxu0 0.0
        %4028 = vmatpush1.xpose.msra.mxu0 0.0
        %4029 = vmatprep.subr.mxu0 0.0
        %4030 = vmatpush1.xpose.msra.mxu0 0.0
        %4031 = vmatprep.subr.mxu0 0.0
        %4032 = vmatpush1.xpose.msra.mxu0 0.0
        %4033 = vmatprep.subr.mxu0 0.0
        %4034 = vmatpush1.xpose.msra.mxu0 0.0
        %4035 = vmatprep.subr.mxu0 0.0
        %4036 = vmatpush1.xpose.msra.mxu0 0.0
        %4037 = vmatprep.subr.mxu0 0.0
        %4038 = vmatpush1.xpose.msra.mxu0 0.0
        %4039 = vmatprep.subr.mxu0 0.0
        %4040 = vmatpush1.xpose.msra.mxu0 0.0
        %4041 = vmatprep.subr.mxu0 0.0
        %4042 = vmatpush1.xpose.msra.mxu0 0.0
        %4043 = vmatprep.subr.mxu0 0.0
        %4044 = vmatpush1.xpose.msra.mxu0 0.0
        %4045 = vmatprep.subr.mxu0 0.0
        %4046 = vmatpush1.xpose.msra.mxu0 0.0
        %4047 = vmatprep.subr.mxu0 0.0
        %4048 = vmatpush1.xpose.msra.mxu0 0.0
        %4049 = vmatprep.subr.mxu0 0.0
        %4050 = vmatpush1.xpose.msra.mxu0 0.0
        %4051 = vmatprep.subr.mxu0 0.0
        %4052 = vmatpush1.xpose.msra.mxu0 0.0
        %4053 = vmatprep.subr.mxu0 0.0
        %4054 = vmatpush1.xpose.msra.mxu0 0.0
        %4055 = vmatprep.subr.mxu0 0.0
        %4056 = vmatpush1.xpose.msra.mxu0 0.0
        %4057 = vmatprep.subr.mxu0 0.0
        %4058 = vmatpush1.xpose.msra.mxu0 0.0
        %4059 = vmatprep.subr.mxu0 0.0
        %4060 = vmatpush1.xpose.msra.mxu0 0.0
        %4061 = vmatprep.subr.mxu0 0.0
        %4062 = vmatpush1.xpose.msra.mxu0 0.0
        %4063 = vmatprep.subr.mxu0 0.0
        %4064 = vmatpush1.xpose.msra.mxu0 0.0
        %4065 = vmatprep.subr.mxu0 0.0
        %4066 = vmatpush1.xpose.msra.mxu0 0.0
        %4067 = vmatprep.subr.mxu0 0.0
        %4068 = vmatpush1.xpose.msra.mxu0 0.0
        %4069 = vmatprep.mubr.f32.mxu0 0.0
        %4070 = vmatmul.mubr.f32.gmra.mrb[0].mxu0 %v4000
        %v4071 = vpop.f32.mrb[0].mxu0
        %v4072 = vadd.f32 0.0, %v4071
        %v4073 = vpop.f32.mrb[0].mxu0
        %4074 = vdwg.mxu0
        %v4075 = vmul.f32 %v4072, 0.5
        %v4076 = vsel %vm654, %v4075, -inf
        %4077 = vmax.xlane.f32.xlu0 %v4076
        %v4078 = vpop.xlane.xlu0 %4077
        %v4079 = vsub.f32 %v4075, %v4078
        %v4080 = vmul.f32 %v4079, 1.442695
        %v4081 = vpow.pop %v4080
        %v4082 = vsel %vm654, %v4081, 0.0
        %4083 = vadd.xlane.f32.xlu0 %v4082
        %v4084 = vpop.xlane.xlu0 %4083
        %v4085 = vrcp.pop %v4084
        %v4086 = vmul.f32 %v4081, %v4085
        %v4088 = vsel %vm654, %v4086, 0
        %4090 = vmatprep.subr.mxu0 0.0
        %4091 = vmatpush1.msra.mxu0 %v3996
        %4092 = vmatprep.subr.mxu0 0.0
        %4093 = vmatpush1.msra.mxu0 0.0
        %4094 = vmatprep.subr.mxu0 0.0
        %4095 = vmatpush1.msra.mxu0 0.0
        %4096 = vmatprep.subr.mxu0 0.0
        %4097 = vmatpush1.msra.mxu0 0.0
        %4098 = vmatprep.subr.mxu0 0.0
        %4099 = vmatpush1.msra.mxu0 0.0
        %4100 = vmatprep.subr.mxu0 0.0
        %4101 = vmatpush1.msra.mxu0 0.0
        %4102 = vmatprep.subr.mxu0 0.0
        %4103 = vmatpush1.msra.mxu0 0.0
        %4104 = vmatprep.subr.mxu0 0.0
        %4105 = vmatpush1.msra.mxu0 0.0
        %4106 = vmatprep.subr.mxu0 0.0
        %4107 = vmatpush1.msra.mxu0 0.0
        %4108 = vmatprep.subr.mxu0 0.0
        %4109 = vmatpush1.msra.mxu0 0.0
        %4110 = vmatprep.subr.mxu0 0.0
        %4111 = vmatpush1.msra.mxu0 0.0
        %4112 = vmatprep.subr.mxu0 0.0
        %4113 = vmatpush1.msra.mxu0 0.0
        %4114 = vmatprep.subr.mxu0 0.0
        %4115 = vmatpush1.msra.mxu0 0.0
        %4116 = vmatprep.subr.mxu0 0.0
        %4117 = vmatpush1.msra.mxu0 0.0
        %4118 = vmatprep.subr.mxu0 0.0
        %4119 = vmatpush1.msra.mxu0 0.0
        %4120 = vmatprep.subr.mxu0 0.0
        %4121 = vmatpush1.msra.mxu0 0.0
        %4122 = vmatprep.subr.mxu0 0.0
        %4123 = vmatpush1.msra.mxu0 0.0
        %4124 = vmatprep.subr.mxu0 0.0
        %4125 = vmatpush1.msra.mxu0 0.0
        %4126 = vmatprep.subr.mxu0 0.0
        %4127 = vmatpush1.msra.mxu0 0.0
        %4128 = vmatprep.subr.mxu0 0.0
        %4129 = vmatpush1.msra.mxu0 0.0
        %4130 = vmatprep.subr.mxu0 0.0
        %4131 = vmatpush1.msra.mxu0 0.0
        %4132 = vmatprep.subr.mxu0 0.0
        %4133 = vmatpush1.msra.mxu0 0.0
        %4134 = vmatprep.subr.mxu0 0.0
        %4135 = vmatpush1.msra.mxu0 0.0
        %4136 = vmatprep.subr.mxu0 0.0
        %4137 = vmatpush1.msra.mxu0 0.0
        %4138 = vmatprep.subr.mxu0 0.0
        %4139 = vmatpush1.msra.mxu0 0.0
        %4140 = vmatprep.subr.mxu0 0.0
        %4141 = vmatpush1.msra.mxu0 0.0
        %4142 = vmatprep.subr.mxu0 0.0
        %4143 = vmatpush1.msra.mxu0 0.0
        %4144 = vmatprep.subr.mxu0 0.0
        %4145 = vmatpush1.msra.mxu0 0.0
        %4146 = vmatprep.subr.mxu0 0.0
        %4147 = vmatpush1.msra.mxu0 0.0
        %4148 = vmatprep.subr.mxu0 0.0
        %4149 = vmatpush1.msra.mxu0 0.0
        %4150 = vmatprep.subr.mxu0 0.0
        %4151 = vmatpush1.msra.mxu0 0.0
        %4152 = vmatprep.subr.mxu0 0.0
        %4153 = vmatpush1.msra.mxu0 0.0
        %4154 = vmatprep.mubr.f32.mxu0 0.0
        %4155 = vmatmul.mubr.f32.gmra.mrb[0].mxu0 %v4088
        %v4156 = vpop.f32.mrb[0].mxu0
        %v4157 = vadd.f32 0.0, %v4156
        %v4158 = vpop.f32.mrb[0].mxu0
        %4159 = vdwg.mxu0
        %s4160 = scalar_lea.vmem %s7, 28
        %v4161 = vld [vmem:[%s4160] sm:$0xf]
        %v4163 = vsel %vm576, %v4157, 0
        %v4166 = vsel %vm1155, %v4161, 0
        %4168 = vmatprep.subr.mxu0 0.0
        %4169 = vmatpush1.msra.mxu0 %v4166
        %4170 = vmatprep.subr.mxu0 0.0
        %4171 = vmatpush1.msra.mxu0 0.0
        %4172 = vmatprep.subr.mxu0 0.0
        %4173 = vmatpush1.msra.mxu0 0.0
        %4174 = vmatprep.subr.mxu0 0.0
        %4175 = vmatpush1.msra.mxu0 0.0
        %4176 = vmatprep.subr.mxu0 0.0
        %4177 = vmatpush1.msra.mxu0 0.0
        %4178 = vmatprep.subr.mxu0 0.0
        %4179 = vmatpush1.msra.mxu0 0.0
        %4180 = vmatprep.subr.mxu0 0.0
        %4181 = vmatpush1.msra.mxu0 0.0
        %4182 = vmatprep.subr.mxu0 0.0
        %4183 = vmatpush1.msra.mxu0 0.0
        %4184 = vmatprep.subr.mxu0 0.0
        %4185 = vmatpush1.msra.mxu0 0.0
        %4186 = vmatprep.subr.mxu0 0.0
        %4187 = vmatpush1.msra.mxu0 0.0
        %4188 = vmatprep.subr.mxu0 0.0
        %4189 = vmatpush1.msra.mxu0 0.0
        %4190 = vmatprep.subr.mxu0 0.0
        %4191 = vmatpush1.msra.mxu0 0.0
        %4192 = vmatprep.subr.mxu0 0.0
        %4193 = vmatpush1.msra.mxu0 0.0
        %4194 = vmatprep.subr.mxu0 0.0
        %4195 = vmatpush1.msra.mxu0 0.0
        %4196 = vmatprep.subr.mxu0 0.0
        %4197 = vmatpush1.msra.mxu0 0.0
        %4198 = vmatprep.subr.mxu0 0.0
        %4199 = vmatpush1.msra.mxu0 0.0
        %4200 = vmatprep.subr.mxu0 0.0
        %4201 = vmatpush1.msra.mxu0 0.0
        %4202 = vmatprep.subr.mxu0 0.0
        %4203 = vmatpush1.msra.mxu0 0.0
        %4204 = vmatprep.subr.mxu0 0.0
        %4205 = vmatpush1.msra.mxu0 0.0
        %4206 = vmatprep.subr.mxu0 0.0
        %4207 = vmatpush1.msra.mxu0 0.0
        %4208 = vmatprep.subr.mxu0 0.0
        %4209 = vmatpush1.msra.mxu0 0.0
        %4210 = vmatprep.subr.mxu0 0.0
        %4211 = vmatpush1.msra.mxu0 0.0
        %4212 = vmatprep.subr.mxu0 0.0
        %4213 = vmatpush1.msra.mxu0 0.0
        %4214 = vmatprep.subr.mxu0 0.0
        %4215 = vmatpush1.msra.mxu0 0.0
        %4216 = vmatprep.subr.mxu0 0.0
        %4217 = vmatpush1.msra.mxu0 0.0
        %4218 = vmatprep.subr.mxu0 0.0
        %4219 = vmatpush1.msra.mxu0 0.0
        %4220 = vmatprep.subr.mxu0 0.0
        %4221 = vmatpush1.msra.mxu0 0.0
        %4222 = vmatprep.subr.mxu0 0.0
        %4223 = vmatpush1.msra.mxu0 0.0
        %4224 = vmatprep.subr.mxu0 0.0
        %4225 = vmatpush1.msra.mxu0 0.0
        %4226 = vmatprep.subr.mxu0 0.0
        %4227 = vmatpush1.msra.mxu0 0.0
        %4228 = vmatprep.subr.mxu0 0.0
        %4229 = vmatpush1.msra.mxu0 0.0
        %4230 = vmatprep.subr.mxu0 0.0
        %4231 = vmatpush1.msra.mxu0 0.0
        %4232 = vmatprep.mubr.f32.mxu0 0.0
        %4233 = vmatmul.mubr.f32.gmra.mrb[0].mxu0 %v4163
        %v4234 = vpop.f32.mrb[0].mxu0
        %v4235 = vadd.f32 0.0, %v4234
        %v4236 = vpop.f32.mrb[0].mxu0
        %4237 = vdwg.mxu0
        %v4238 = vadd.f32 %v3749, %v4235
        %v4239 = vld [vmem:[%s8] sm:$0x1]
        %v4241 = vlaneseq
        %v4242 = vshrl.u32 %v4241, 7
        %v4243 = vsub.s32 0, %v4242
        %v4244 = vrot.slane %v4239, %v4243
        %v4246 = vadd.f32 %v4238, %v4244
        %4247 = vst.msk [vmem:[%s323] sm:$0xff] %vm340, %v4246
        %s4248 = sand.u32 %s225, 1
        %s4249 = scalar_lea.sflag [#allocation3], %s4248
        %s4250 = sand.u32 %s225, 1
        %s4251 = smul.addr %s4250, 8
        %s4252 = scalar_lea.vmem [#allocation2], %s4251
        // Predicated region
        $region57: #{temporal_attention.1} parent=55 // pred_check
          %p4253 = pneg %p235
        $region58: #{temporal_attention.1} parent=55 // pred_check_branch
          %4255 = sbr.rel (%p4253) target = $region60
        $region59: #{temporal_attention.1} parent=55 // pred_region
          %s4257 = ssub.s32 128, 128
          %4258 = vsyncadd %s4249, %s4257
          %s4259 = smul.addr %s23, 128
          %s4260 = scalar_lea.hbm %s9, %s4259
          %s4262 = sshll.u32 %s4252, 4
          %s4263 = int_to_ptr.vmem [resolvable:$true] %s4262
          %4265 = dma.vmem_to_hbm [thread:$0]  %s4263, 128, %s4260, %s4249
        $region60: #{temporal_attention.1} parent=55 // pred_fallthru
          _
      $region56: #{temporal_attention.1} parent=5 // pred_fallthru
        _
      %p4266 = scmp.le.s32.totalorder 2, %s18
      // Predicated region
      $region61: #{temporal_attention.1} parent=5 // pred_check
        %p4267 = pneg %p4266
      $region62: #{temporal_attention.1} parent=5 // pred_check_branch
        %4269 = sbr.rel (%p4267) target = $region64
      $region63: #{temporal_attention.1} parent=5 // pred_region
        %s4270 = ssub.s32 %s18, 2
        // Predicated region
        $region65: #{temporal_attention.1} parent=63 // pred_check
          %p4271 = pneg %p241
        $region66: #{temporal_attention.1} parent=63 // pred_check_branch
          %4273 = sbr.rel (%p4271) target = $region68
        $region67: #{temporal_attention.1} parent=63 // pred_region
          %s4274 = sand.u32 %s226, 1
          %s4275 = scalar_lea.sflag [#allocation3], %s4274
          %s4276 = sand.u32 %s226, 1
          %s4277 = smul.addr %s4276, 8
          %s4278 = scalar_lea.vmem [#allocation2], %s4277
          %4279 = dma.done %s4275, 128
        $region68: #{temporal_attention.1} parent=63 // pred_fallthru
          _
      $region64: #{temporal_attention.1} parent=5 // pred_fallthru
        _
    $region6: #{temporal_attention.1} parent=1 // loop_footer
      %s22 = sadd.s32 1, %s18
    $region7: #{temporal_attention.1} parent=1 // loop_footer_branch
      %17 = sbr.rel target = $region3
    $region8: #{temporal_attention.1} parent=1 // loop_exit
      _
    %4280 = vsyncpa [#allocation3], 1
    %s4281 = scalar_lea.sflag [#allocation3], 1
    %4282 = vsyncpa %s4281, 1

</llo_original>
